<compile_context>
chip_gen: v7x
topology: tpu7x:2x2x1
jax: 0.10.0
libtpu: 0.0.40
codegen_flags: <defaults>
</compile_context>

<pallas_src>
import numpy as np
import jax
import jax.numpy as jnp
from jax import lax
from jax.experimental import pallas as pl
from jax.experimental.pallas import tpu as pltpu


# ----------------------------- kernel builder --------------------------------

def _build_block_kernel(C, H, W, Nb, Cp, use_mxu):
    """Build the fused basic-block kernel.

    Activation layout inside the kernel: (rows, lanes) = (image*channel, H*W).
    xp_ref holds a zero-halo "padded flat" copy per channel row: 1 leading pad
    element, rows -1..H each of width W, 1 trailing pad element (length L).
    Tap (ky, kx) of the 3x3 conv is then the lane-offset slice
        xp[:, ky*W + kx : ky*W + kx + H*W]
    with column-edge contamination removed by the m0/m1 lane masks.
    """
    HW = H * W
    L = (H + 2) * W + 2
    interior = W + 1                           # flat index of pixel (0, 0)
    taps = [(ky, kx) for ky in range(3) for kx in range(3)]

    def _stage_input(xp_ref, x_ref):
        # Zero ONLY the halo lanes (leading / trailing W+1) — every grid step;
        # the interior is fully overwritten below.  (A program_id==0-only init
        # would be wrong on megacore parts under "parallel" semantics.)
        halo = jnp.zeros((Nb * Cp, interior), jnp.float32)
        xp_ref[:, 0:interior] = halo
        xp_ref[:, interior + HW:L] = halo
        if Cp == C:
            xp_ref[:, interior:interior + HW] = x_ref[...]
        else:
            # Channel-padding rows feed the MXU against zero weight columns,
            # so they must be kept finite (zero) every step.
            zrow = jnp.zeros((Cp - C, L), jnp.float32)
            for n in range(Nb):
                xp_ref[n * Cp + C:(n + 1) * Cp, 0:L] = zrow
                xp_ref[n * Cp:n * Cp + C, interior:interior + HW] = \
                    x_ref[n * C:(n + 1) * C, :]

    def _masked(patch, kx, m0, m1):
        if kx == 0:
            return patch * m0
        if kx == 2:
            return patch * m1
        return patch

    # ------------------- MXU / bf16 im2col path (large C) -------------------
    def _conv_mxu(xp_ref, pat_ref, w_ref, m0, m1):
        for t, (ky, kx) in enumerate(taps):
            off = ky * W + kx
            for n in range(Nb):
                patch = xp_ref[n * Cp:(n + 1) * Cp, off:off + HW]
                patch = _masked(patch, kx, m0, m1)
                # mask multiply + bf16 cast fused into the tile-aligned store
                pat_ref[t * Cp:(t + 1) * Cp, n * HW:(n + 1) * HW] = \
                    patch.astype(jnp.bfloat16)
        # One MXU matmul covers all Nb images: (C, 9*Cp) @ (9*Cp, Nb*HW)
        return jnp.dot(w_ref[...], pat_ref[...],
                       preferred_element_type=jnp.float32)

    def kernel_mxu(x_ref, w1_ref, s1_ref, b1_ref, w2_ref, s2_ref, b2_ref,
                   mask_ref, o_ref, xp_ref, pat_ref):
        m0 = mask_ref[0:1, :]
        m1 = mask_ref[1:2, :]
        _stage_input(xp_ref, x_ref)

        # conv1 -> BN1 (f32 scale + bias) -> ReLU
        y1 = _conv_mxu(xp_ref, pat_ref, w1_ref, m0, m1)
        y1 = jnp.maximum(y1 * s1_ref[...] + b1_ref[...], 0.0)
        for n in range(Nb):                    # intermediate stays in VMEM
            xp_ref[n * Cp:n * Cp + C, interior:interior + HW] = \
                y1[:, n * HW:(n + 1) * HW]

        # conv2 -> BN2 -> residual add (f32 input) -> ReLU
        y2 = _conv_mxu(xp_ref, pat_ref, w2_ref, m0, m1)
        y2 = y2 * s2_ref[...] + b2_ref[...]
        for n in range(Nb):
            r = y2[:, n * HW:(n + 1) * HW] + x_ref[n * C:(n + 1) * C, :]
            o_ref[n * C:(n + 1) * C, :] = jnp.maximum(r, 0.0).astype(o_ref.dtype)

    # -------------------- VPU direct-FMA path (tiny C) ----------------------
    def _conv_vpu(xp_ref, w_ref, m0, m1, base):
        acc = [None, None, None]               # one accumulation chain per ky
        for t, (ky, kx) in enumerate(taps):
            off = ky * W + kx
            for i in range(C):
                p = xp_ref[base + i:base + i + 1, off:off + HW]    # (1, HW)
                p = _masked(p, kx, m0, m1)
                wcol = w_ref[:, t * C + i:t * C + i + 1]           # (C, 1)
                term = wcol * p                                    # (C, HW)
                acc[ky] = term if acc[ky] is None else acc[ky] + term
        return acc[0] + acc[1] + acc[2]

    def kernel_vpu(x_ref, w1_ref, b1_ref, w2_ref, b2_ref, mask_ref,
                   o_ref, xp_ref):
        m0 = mask_ref[0:1, :]
        m1 = mask_ref[1:2, :]
        _stage_input(xp_ref, x_ref)
        for n in range(Nb):
            base = n * Cp                      # Cp == C on this path
            y1 = jnp.maximum(_conv_vpu(xp_ref, w1_ref, m0, m1, base)
                             + b1_ref[...], 0.0)
            xp_ref[base:base + C, interior:interior + HW] = y1
            y2 = (_conv_vpu(xp_ref, w2_ref, m0, m1, base)
                  + b2_ref[...] + x_ref[n * C:(n + 1) * C, :])
            o_ref[n * C:(n + 1) * C, :] = \
                jnp.maximum(y2, 0.0).astype(o_ref.dtype)

    return kernel_mxu if use_mxu else kernel_vpu


# ------------------------------ JAX wrapper ----------------------------------

def _fold_bn(gamma, beta, mean, var, eps=1e-5):
    s = gamma / jnp.sqrt(var + eps)
    return s, beta - mean * s


def _pack_weight(w_oihw, cp):
    """OIHW -> (O, 9*cp); column index (ky*3+kx)*cp + i, zero-padded i >= I."""
    O, I = w_oihw.shape[0], w_oihw.shape[1]
    w = jnp.transpose(w_oihw, (0, 2, 3, 1)).reshape(O, 9, I)
    if cp != I:
        w = jnp.pad(w, ((0, 0), (0, 0), (0, cp - I)))
    return w.reshape(O, 9 * cp)


def _pick_nb(N, C, Cp, HW, L, use_mxu, max_nb=8, vmem_budget=24 << 20):
    """Images per grid step: largest batch block that divides N, keeps the
    (Nb*C, HW) block (8,128)-legal, and fits a conservative VMEM budget;
    prefers >= 4 grid steps (megacore pipelining) when N allows it."""
    def est(nb):
        return (2 * 2 * nb * C * HW * 4 + nb * Cp * L * 4
                + (9 * Cp * nb * HW * 2 if use_mxu else 0))

    cands = [nb for nb in range(1, min(N, max_nb) + 1)
             if N % nb == 0 and ((nb * C) % 8 == 0 or nb == N)
             and est(nb) <= vmem_budget]
    if not cands:
        return N                               # whole batch in one grid step
    deep = [nb for nb in cands if N // nb >= 4]
    return max(deep) if deep else max(cands)


def basic_residual_block(x_nchw, params, *, force_mxu=False, eps=1e-5):
    """Forward pass of the ResNet basic block (stride=1, identity shortcut)."""
    N, C, H, W = x_nchw.shape
    HW = H * W
    L = (H + 2) * W + 2

    use_mxu = bool(force_mxu) or C > 8
    Cp = (-(-C // 8) * 8) if use_mxu else C    # tap-group rows, 8-aligned (MXU)
    Nb = _pick_nb(N, C, Cp, HW, L, use_mxu)
    grid = N // Nb

    s1, b1 = _fold_bn(*params["bn1"], eps=eps)
    s2, b2 = _fold_bn(*params["bn2"], eps=eps)
    b1c = b1.reshape(C, 1).astype(jnp.float32)
    b2c = b2.reshape(C, 1).astype(jnp.float32)

    # Column-edge masks for the flattened-row taps (kx==0 reads col -1,
    # kx==2 reads col W): zero the contaminated output lanes.
    q = np.arange(HW)
    mask = jnp.asarray(np.stack([(q % W) != 0,
                                 (q % W) != (W - 1)]).astype(np.float32))

    # Lane-dense (image*channel, H*W) layout: pure metadata reshape of NCHW.
    x_flat = x_nchw.reshape(N * C, HW)

    kernel = _build_block_kernel(C, H, W, Nb, Cp, use_mxu)

    bcast = lambda g: (0, 0)
    xmap = lambda g: (g, 0)
    x_spec = pl.BlockSpec((Nb * C, HW), xmap)
    mask_spec = pl.BlockSpec((2, HW), bcast)
    col_spec = pl.BlockSpec((C, 1), bcast)
    w_spec = pl.BlockSpec((C, 9 * Cp), bcast)

    if use_mxu:
        # Raw conv weights in bf16 for the MXU; BN scale stays f32 and is
        # applied to the f32 accumulator (better accuracy than folding).
        w1p = _pack_weight(params["w1"], Cp).astype(jnp.bfloat16)
        w2p = _pack_weight(params["w2"], Cp).astype(jnp.bfloat16)
        s1c = s1.reshape(C, 1).astype(jnp.float32)
        s2c = s2.reshape(C, 1).astype(jnp.float32)
        args = (x_flat, w1p, s1c, b1c, w2p, s2c, b2c, mask)
        in_specs = [x_spec, w_spec, col_spec, col_spec,
                    w_spec, col_spec, col_spec, mask_spec]
        scratch = [pltpu.VMEM((Nb * Cp, L), jnp.float32),       # padded-flat
                   pltpu.VMEM((9 * Cp, Nb * HW), jnp.bfloat16)]  # im2col (bf16)
    else:
        # Tiny-C path: no im2col / MXU, everything f32, BN scale folded.
        w1p = _pack_weight(params["w1"] * s1[:, None, None, None],
                           Cp).astype(jnp.float32)
        w2p = _pack_weight(params["w2"] * s2[:, None, None, None],
                           Cp).astype(jnp.float32)
        args = (x_flat, w1p, b1c, w2p, b2c, mask)
        in_specs = [x_spec, w_spec, col_spec, w_spec, col_spec, mask_spec]
        scratch = [pltpu.VMEM((Nb * Cp, L), jnp.float32)]

    flops = 2 * 2 * N * HW * 9 * C * C                       # 2 convs, 2/MAC
    bytes_accessed = (2 * N * C * HW * 4                     # x in + out
                      + 2 * C * 9 * Cp * (2 if use_mxu else 4)
                      + 4 * C * 4 + 2 * HW * 4)

    # Explicit VMEM budget: double-buffered I/O blocks + scratch + headroom.
    vmem_need = (2 * 2 * Nb * C * HW * 4 + Nb * Cp * L * 4
                 + (9 * Cp * Nb * HW * 2 if use_mxu else 0) + (2 << 20))
    vmem_limit = int(min(max(2 * vmem_need, 8 << 20), 64 << 20))

    out_flat = pl.pallas_call(
        kernel,
        out_shape=jax.ShapeDtypeStruct((N * C, HW), x_nchw.dtype),
        grid=(grid,),
        in_specs=in_specs,
        out_specs=pl.BlockSpec((Nb * C, HW), xmap),
        scratch_shapes=scratch,
        compiler_params=pltpu.CompilerParams(
            dimension_semantics=("parallel",),
            vmem_limit_bytes=vmem_limit),
        cost_estimate=pl.CostEstimate(flops=flops, transcendentals=0,
                                      bytes_accessed=bytes_accessed),
    )(*args)

    return out_flat.reshape(N, C, H, W)


# -------------------------------- reference ----------------------------------

def reference(x, params, eps=1e-5):
    def bn(y, g, b, m, v):
        shp = (1, -1, 1, 1)
        return ((y - m.reshape(shp)) / jnp.sqrt(v.reshape(shp) + eps)
                * g.reshape(shp) + b.reshape(shp))

    dn = lax.conv_dimension_numbers(x.shape, params["w1"].shape,
                                    ("NCHW", "OIHW", "NCHW"))
    y = lax.conv_general_dilated(x, params["w1"], (1, 1), ((1, 1), (1, 1)),
                                 dimension_numbers=dn,
                                 precision=lax.Precision.HIGHEST)
    y = jax.nn.relu(bn(y, *params["bn1"]))
    y2 = lax.conv_general_dilated(y, params["w2"], (1, 1), ((1, 1), (1, 1)),
                                  dimension_numbers=dn,
                                  precision=lax.Precision.HIGHEST)
    y2 = bn(y2, *params["bn2"])
    return jax.nn.relu(y2 + x)


# ----------------------------------- main -------------------------------------

if __name__ == "__main__":
    N, C, H, W = 2, 4, 16, 16                 # in_channels == out_channels
    key = jax.random.PRNGKey(0)
    ks = jax.random.split(key, 11)

    x = jax.random.normal(ks[0], (N, C, H, W), jnp.float32)

    params = {
        "w1": 0.1 * jax.random.normal(ks[1], (C, C, 3, 3), jnp.float32),
        "w2": 0.1 * jax.random.normal(ks[2], (C, C, 3, 3), jnp.float32),
        # BN params: (gamma, beta, running_mean, running_var)
        "bn1": (1.0 + 0.1 * jax.random.normal(ks[3], (C,), jnp.float32),
                0.1 * jax.random.normal(ks[4], (C,), jnp.float32),
                0.1 * jax.random.normal(ks[5], (C,), jnp.float32),
                0.5 + jnp.abs(jax.random.normal(ks[6], (C,), jnp.float32))),
        "bn2": (1.0 + 0.1 * jax.random.normal(ks[7], (C,), jnp.float32),
                0.1 * jax.random.normal(ks[8], (C,), jnp.float32),
                0.1 * jax.random.normal(ks[9], (C,), jnp.float32),
                0.5 + jnp.abs(jax.random.normal(ks[10], (C,), jnp.float32))),
    }

    ref = jax.block_until_ready(reference(x, params))

    # Default path at C=4: direct VPU-FMA conv, all f32 (tight tolerance).
    out_vpu = jax.block_until_ready(basic_residual_block(x, params))
    assert out_vpu.shape == (N, C, H, W), out_vpu.shape
    err_vpu = float(jnp.max(jnp.abs(out_vpu - ref)))
    assert jnp.allclose(out_vpu, ref, atol=2e-3, rtol=2e-3), err_vpu

    # MXU / bf16-im2col path (the one used at realistic channel counts),
    # exercised here with the 8-row tap padding (Cp=8, K=72); bf16 tolerance.
    out_mxu = jax.block_until_ready(
        basic_residual_block(x, params, force_mxu=True))
    err_mxu = float(jnp.max(jnp.abs(out_mxu - ref)))
    assert jnp.allclose(out_mxu, ref, atol=5e-2, rtol=5e-2), err_mxu

    print("KERNEL_OK")
</pallas_src>

<mosaic_0001>
module attributes {stable_mosaic.version = 11 : i64} {
  func.func @kernel_vpu(%arg0: i32, %arg1: memref<8x256xf32, #tpu.memory_space<vmem>>, %arg2: memref<4x36xf32, #tpu.memory_space<vmem>>, %arg3: memref<4x1xf32, #tpu.memory_space<vmem>>, %arg4: memref<4x36xf32, #tpu.memory_space<vmem>>, %arg5: memref<4x1xf32, #tpu.memory_space<vmem>>, %arg6: memref<2x256xf32, #tpu.memory_space<vmem>>, %arg7: memref<8x256xf32, #tpu.memory_space<vmem>>, %arg8: memref<8x290xf32, #tpu.memory_space<vmem>>) attributes {dimension_semantics = [#tpu.dimension_semantics<parallel>], iteration_bounds = array<i64: 1>, scalar_prefetch = 0 : i64, scratch_operands = 1 : i64, tpu.core_type = #tpu.core_type<tc>, window_params = [{transform_indices = @transform_0, window_bounds = array<i64: 8, 256>}, {pipeline_mode = #tpu.pipeline_mode<synchronous>, transform_indices = @transform_1, window_bounds = array<i64: 4, 36>}, {pipeline_mode = #tpu.pipeline_mode<synchronous>, transform_indices = @transform_2, window_bounds = array<i64: 4, 1>}, {pipeline_mode = #tpu.pipeline_mode<synchronous>, transform_indices = @transform_3, window_bounds = array<i64: 4, 36>}, {pipeline_mode = #tpu.pipeline_mode<synchronous>, transform_indices = @transform_4, window_bounds = array<i64: 4, 1>}, {pipeline_mode = #tpu.pipeline_mode<synchronous>, transform_indices = @transform_5, window_bounds = array<i64: 2, 256>}, {transform_indices = @transform_6, window_bounds = array<i64: 8, 256>}]} {
    %c0 = arith.constant 0 : index
    %c0_0 = arith.constant 0 : index
    %0 = vector.load %arg6[%c0, %c0_0] : memref<2x256xf32, #tpu.memory_space<vmem>>, vector<1x256xf32>
    %c1 = arith.constant 1 : index
    %c0_1 = arith.constant 0 : index
    %1 = vector.load %arg6[%c1, %c0_1] : memref<2x256xf32, #tpu.memory_space<vmem>>, vector<1x256xf32>
    %cst = arith.constant 0.000000e+00 : f32
    %2 = vector.broadcast %cst : f32 to vector<8x17xf32>
    %c0_2 = arith.constant 0 : index
    %c0_3 = arith.constant 0 : index
    %3 = vector.load %arg8[%c0_2, %c0_3] : memref<8x290xf32, #tpu.memory_space<vmem>>, vector<8x17xf32>
    tpu.vector_store %arg8[%c0_2, %c0_3], %2 {strides = array<i32>} : memref<8x290xf32, #tpu.memory_space<vmem>>, vector<8x17xf32>,
    %c0_4 = arith.constant 0 : index
    %c273 = arith.constant 273 : index
    %4 = vector.load %arg8[%c0_4, %c273] : memref<8x290xf32, #tpu.memory_space<vmem>>, vector<8x17xf32>
    tpu.vector_store %arg8[%c0_4, %c273], %2 {strides = array<i32>} : memref<8x290xf32, #tpu.memory_space<vmem>>, vector<8x17xf32>,
    %c0_5 = arith.constant 0 : index
    %c0_6 = arith.constant 0 : index
    %5 = vector.load %arg1[%c0_5, %c0_6] : memref<8x256xf32, #tpu.memory_space<vmem>>, vector<8x256xf32>
    %c0_7 = arith.constant 0 : index
    %c17 = arith.constant 17 : index
    %6 = vector.load %arg8[%c0_7, %c17] : memref<8x290xf32, #tpu.memory_space<vmem>>, vector<8x256xf32>
    tpu.vector_store %arg8[%c0_7, %c17], %5 {strides = array<i32>} : memref<8x290xf32, #tpu.memory_space<vmem>>, vector<8x256xf32>,
    %c0_8 = arith.constant 0 : index
    %c0_9 = arith.constant 0 : index
    %7 = vector.load %arg8[%c0_8, %c0_9] : memref<8x290xf32, #tpu.memory_space<vmem>>, vector<1x256xf32>
    %8 = arith.mulf %7, %0 : vector<1x256xf32>
    %c0_10 = arith.constant 0 : index
    %c0_11 = arith.constant 0 : index
    %9 = vector.load %arg2[%c0_10, %c0_11] : memref<4x36xf32, #tpu.memory_space<vmem>>, vector<4x1xf32>
    %10 = vector.broadcast %9 : vector<4x1xf32> to vector<4x256xf32>
    %11 = vector.broadcast %8 : vector<1x256xf32> to vector<4x256xf32>
    %12 = arith.mulf %10, %11 : vector<4x256xf32>
    %c1_12 = arith.constant 1 : index
    %c0_13 = arith.constant 0 : index
    %13 = vector.load %arg8[%c1_12, %c0_13] : memref<8x290xf32, #tpu.memory_space<vmem>>, vector<1x256xf32>
    %14 = arith.mulf %13, %0 : vector<1x256xf32>
    %c0_14 = arith.constant 0 : index
    %c1_15 = arith.constant 1 : index
    %15 = vector.load %arg2[%c0_14, %c1_15] : memref<4x36xf32, #tpu.memory_space<vmem>>, vector<4x1xf32>
    %16 = vector.broadcast %15 : vector<4x1xf32> to vector<4x256xf32>
    %17 = vector.broadcast %14 : vector<1x256xf32> to vector<4x256xf32>
    %18 = arith.mulf %16, %17 : vector<4x256xf32>
    %19 = arith.addf %12, %18 : vector<4x256xf32>
    %c2 = arith.constant 2 : index
    %c0_16 = arith.constant 0 : index
    %20 = vector.load %arg8[%c2, %c0_16] : memref<8x290xf32, #tpu.memory_space<vmem>>, vector<1x256xf32>
    %21 = arith.mulf %20, %0 : vector<1x256xf32>
    %c0_17 = arith.constant 0 : index
    %c2_18 = arith.constant 2 : index
    %22 = vector.load %arg2[%c0_17, %c2_18] : memref<4x36xf32, #tpu.memory_space<vmem>>, vector<4x1xf32>
    %23 = vector.broadcast %22 : vector<4x1xf32> to vector<4x256xf32>
    %24 = vector.broadcast %21 : vector<1x256xf32> to vector<4x256xf32>
    %25 = arith.mulf %23, %24 : vector<4x256xf32>
    %26 = arith.addf %19, %25 : vector<4x256xf32>
    %c3 = arith.constant 3 : index
    %c0_19 = arith.constant 0 : index
    %27 = vector.load %arg8[%c3, %c0_19] : memref<8x290xf32, #tpu.memory_space<vmem>>, vector<1x256xf32>
    %28 = arith.mulf %27, %0 : vector<1x256xf32>
    %c0_20 = arith.constant 0 : index
    %c3_21 = arith.constant 3 : index
    %29 = vector.load %arg2[%c0_20, %c3_21] : memref<4x36xf32, #tpu.memory_space<vmem>>, vector<4x1xf32>
    %30 = vector.broadcast %29 : vector<4x1xf32> to vector<4x256xf32>
    %31 = vector.broadcast %28 : vector<1x256xf32> to vector<4x256xf32>
    %32 = arith.mulf %30, %31 : vector<4x256xf32>
    %33 = arith.addf %26, %32 : vector<4x256xf32>
    %c0_22 = arith.constant 0 : index
    %c1_23 = arith.constant 1 : index
    %34 = vector.load %arg8[%c0_22, %c1_23] : memref<8x290xf32, #tpu.memory_space<vmem>>, vector<1x256xf32>
    %c0_24 = arith.constant 0 : index
    %c4 = arith.constant 4 : index
    %35 = vector.load %arg2[%c0_24, %c4] : memref<4x36xf32, #tpu.memory_space<vmem>>, vector<4x1xf32>
    %36 = vector.broadcast %35 : vector<4x1xf32> to vector<4x256xf32>
    %37 = vector.broadcast %34 : vector<1x256xf32> to vector<4x256xf32>
    %38 = arith.mulf %36, %37 : vector<4x256xf32>
    %39 = arith.addf %33, %38 : vector<4x256xf32>
    %c1_25 = arith.constant 1 : index
    %c1_26 = arith.constant 1 : index
    %40 = vector.load %arg8[%c1_25, %c1_26] : memref<8x290xf32, #tpu.memory_space<vmem>>, vector<1x256xf32>
    %c0_27 = arith.constant 0 : index
    %c5 = arith.constant 5 : index
    %41 = vector.load %arg2[%c0_27, %c5] : memref<4x36xf32, #tpu.memory_space<vmem>>, vector<4x1xf32>
    %42 = vector.broadcast %41 : vector<4x1xf32> to vector<4x256xf32>
    %43 = vector.broadcast %40 : vector<1x256xf32> to vector<4x256xf32>
    %44 = arith.mulf %42, %43 : vector<4x256xf32>
    %45 = arith.addf %39, %44 : vector<4x256xf32>
    %c2_28 = arith.constant 2 : index
    %c1_29 = arith.constant 1 : index
    %46 = vector.load %arg8[%c2_28, %c1_29] : memref<8x290xf32, #tpu.memory_space<vmem>>, vector<1x256xf32>
    %c0_30 = arith.constant 0 : index
    %c6 = arith.constant 6 : index
    %47 = vector.load %arg2[%c0_30, %c6] : memref<4x36xf32, #tpu.memory_space<vmem>>, vector<4x1xf32>
    %48 = vector.broadcast %47 : vector<4x1xf32> to vector<4x256xf32>
    %49 = vector.broadcast %46 : vector<1x256xf32> to vector<4x256xf32>
    %50 = arith.mulf %48, %49 : vector<4x256xf32>
    %51 = arith.addf %45, %50 : vector<4x256xf32>
    %c3_31 = arith.constant 3 : index
    %c1_32 = arith.constant 1 : index
    %52 = vector.load %arg8[%c3_31, %c1_32] : memref<8x290xf32, #tpu.memory_space<vmem>>, vector<1x256xf32>
    %c0_33 = arith.constant 0 : index
    %c7 = arith.constant 7 : index
    %53 = vector.load %arg2[%c0_33, %c7] : memref<4x36xf32, #tpu.memory_space<vmem>>, vector<4x1xf32>
    %54 = vector.broadcast %53 : vector<4x1xf32> to vector<4x256xf32>
    %55 = vector.broadcast %52 : vector<1x256xf32> to vector<4x256xf32>
    %56 = arith.mulf %54, %55 : vector<4x256xf32>
    %57 = arith.addf %51, %56 : vector<4x256xf32>
    %c0_34 = arith.constant 0 : index
    %c2_35 = arith.constant 2 : index
    %58 = vector.load %arg8[%c0_34, %c2_35] : memref<8x290xf32, #tpu.memory_space<vmem>>, vector<1x256xf32>
    %59 = arith.mulf %58, %1 : vector<1x256xf32>
    %c0_36 = arith.constant 0 : index
    %c8 = arith.constant 8 : index
    %60 = vector.load %arg2[%c0_36, %c8] : memref<4x36xf32, #tpu.memory_space<vmem>>, vector<4x1xf32>
    %61 = vector.broadcast %60 : vector<4x1xf32> to vector<4x256xf32>
    %62 = vector.broadcast %59 : vector<1x256xf32> to vector<4x256xf32>
    %63 = arith.mulf %61, %62 : vector<4x256xf32>
    %64 = arith.addf %57, %63 : vector<4x256xf32>
    %c1_37 = arith.constant 1 : index
    %c2_38 = arith.constant 2 : index
    %65 = vector.load %arg8[%c1_37, %c2_38] : memref<8x290xf32, #tpu.memory_space<vmem>>, vector<1x256xf32>
    %66 = arith.mulf %65, %1 : vector<1x256xf32>
    %c0_39 = arith.constant 0 : index
    %c9 = arith.constant 9 : index
    %67 = vector.load %arg2[%c0_39, %c9] : memref<4x36xf32, #tpu.memory_space<vmem>>, vector<4x1xf32>
    %68 = vector.broadcast %67 : vector<4x1xf32> to vector<4x256xf32>
    %69 = vector.broadcast %66 : vector<1x256xf32> to vector<4x256xf32>
    %70 = arith.mulf %68, %69 : vector<4x256xf32>
    %71 = arith.addf %64, %70 : vector<4x256xf32>
    %c2_40 = arith.constant 2 : index
    %c2_41 = arith.constant 2 : index
    %72 = vector.load %arg8[%c2_40, %c2_41] : memref<8x290xf32, #tpu.memory_space<vmem>>, vector<1x256xf32>
    %73 = arith.mulf %72, %1 : vector<1x256xf32>
    %c0_42 = arith.constant 0 : index
    %c10 = arith.constant 10 : index
    %74 = vector.load %arg2[%c0_42, %c10] : memref<4x36xf32, #tpu.memory_space<vmem>>, vector<4x1xf32>
    %75 = vector.broadcast %74 : vector<4x1xf32> to vector<4x256xf32>
    %76 = vector.broadcast %73 : vector<1x256xf32> to vector<4x256xf32>
    %77 = arith.mulf %75, %76 : vector<4x256xf32>
    %78 = arith.addf %71, %77 : vector<4x256xf32>
    %c3_43 = arith.constant 3 : index
    %c2_44 = arith.constant 2 : index
    %79 = vector.load %arg8[%c3_43, %c2_44] : memref<8x290xf32, #tpu.memory_space<vmem>>, vector<1x256xf32>
    %80 = arith.mulf %79, %1 : vector<1x256xf32>
    %c0_45 = arith.constant 0 : index
    %c11 = arith.constant 11 : index
    %81 = vector.load %arg2[%c0_45, %c11] : memref<4x36xf32, #tpu.memory_space<vmem>>, vector<4x1xf32>
    %82 = vector.broadcast %81 : vector<4x1xf32> to vector<4x256xf32>
    %83 = vector.broadcast %80 : vector<1x256xf32> to vector<4x256xf32>
    %84 = arith.mulf %82, %83 : vector<4x256xf32>
    %85 = arith.addf %78, %84 : vector<4x256xf32>
    %c0_46 = arith.constant 0 : index
    %c16 = arith.constant 16 : index
    %86 = vector.load %arg8[%c0_46, %c16] : memref<8x290xf32, #tpu.memory_space<vmem>>, vector<1x256xf32>
    %87 = arith.mulf %86, %0 : vector<1x256xf32>
    %c0_47 = arith.constant 0 : index
    %c12 = arith.constant 12 : index
    %88 = vector.load %arg2[%c0_47, %c12] : memref<4x36xf32, #tpu.memory_space<vmem>>, vector<4x1xf32>
    %89 = vector.broadcast %88 : vector<4x1xf32> to vector<4x256xf32>
    %90 = vector.broadcast %87 : vector<1x256xf32> to vector<4x256xf32>
    %91 = arith.mulf %89, %90 : vector<4x256xf32>
    %c1_48 = arith.constant 1 : index
    %c16_49 = arith.constant 16 : index
    %92 = vector.load %arg8[%c1_48, %c16_49] : memref<8x290xf32, #tpu.memory_space<vmem>>, vector<1x256xf32>
    %93 = arith.mulf %92, %0 : vector<1x256xf32>
    %c0_50 = arith.constant 0 : index
    %c13 = arith.constant 13 : index
    %94 = vector.load %arg2[%c0_50, %c13] : memref<4x36xf32, #tpu.memory_space<vmem>>, vector<4x1xf32>
    %95 = vector.broadcast %94 : vector<4x1xf32> to vector<4x256xf32>
    %96 = vector.broadcast %93 : vector<1x256xf32> to vector<4x256xf32>
    %97 = arith.mulf %95, %96 : vector<4x256xf32>
    %98 = arith.addf %91, %97 : vector<4x256xf32>
    %c2_51 = arith.constant 2 : index
    %c16_52 = arith.constant 16 : index
    %99 = vector.load %arg8[%c2_51, %c16_52] : memref<8x290xf32, #tpu.memory_space<vmem>>, vector<1x256xf32>
    %100 = arith.mulf %99, %0 : vector<1x256xf32>
    %c0_53 = arith.constant 0 : index
    %c14 = arith.constant 14 : index
    %101 = vector.load %arg2[%c0_53, %c14] : memref<4x36xf32, #tpu.memory_space<vmem>>, vector<4x1xf32>
    %102 = vector.broadcast %101 : vector<4x1xf32> to vector<4x256xf32>
    %103 = vector.broadcast %100 : vector<1x256xf32> to vector<4x256xf32>
    %104 = arith.mulf %102, %103 : vector<4x256xf32>
    %105 = arith.addf %98, %104 : vector<4x256xf32>
    %c3_54 = arith.constant 3 : index
    %c16_55 = arith.constant 16 : index
    %106 = vector.load %arg8[%c3_54, %c16_55] : memref<8x290xf32, #tpu.memory_space<vmem>>, vector<1x256xf32>
    %107 = arith.mulf %106, %0 : vector<1x256xf32>
    %c0_56 = arith.constant 0 : index
    %c15 = arith.constant 15 : index
    %108 = vector.load %arg2[%c0_56, %c15] : memref<4x36xf32, #tpu.memory_space<vmem>>, vector<4x1xf32>
    %109 = vector.broadcast %108 : vector<4x1xf32> to vector<4x256xf32>
    %110 = vector.broadcast %107 : vector<1x256xf32> to vector<4x256xf32>
    %111 = arith.mulf %109, %110 : vector<4x256xf32>
    %112 = arith.addf %105, %111 : vector<4x256xf32>
    %c0_57 = arith.constant 0 : index
    %c17_58 = arith.constant 17 : index
    %113 = vector.load %arg8[%c0_57, %c17_58] : memref<8x290xf32, #tpu.memory_space<vmem>>, vector<1x256xf32>
    %c0_59 = arith.constant 0 : index
    %c16_60 = arith.constant 16 : index
    %114 = vector.load %arg2[%c0_59, %c16_60] : memref<4x36xf32, #tpu.memory_space<vmem>>, vector<4x1xf32>
    %115 = vector.broadcast %114 : vector<4x1xf32> to vector<4x256xf32>
    %116 = vector.broadcast %113 : vector<1x256xf32> to vector<4x256xf32>
    %117 = arith.mulf %115, %116 : vector<4x256xf32>
    %118 = arith.addf %112, %117 : vector<4x256xf32>
    %c1_61 = arith.constant 1 : index
    %c17_62 = arith.constant 17 : index
    %119 = vector.load %arg8[%c1_61, %c17_62] : memref<8x290xf32, #tpu.memory_space<vmem>>, vector<1x256xf32>
    %c0_63 = arith.constant 0 : index
    %c17_64 = arith.constant 17 : index
    %120 = vector.load %arg2[%c0_63, %c17_64] : memref<4x36xf32, #tpu.memory_space<vmem>>, vector<4x1xf32>
    %121 = vector.broadcast %120 : vector<4x1xf32> to vector<4x256xf32>
    %122 = vector.broadcast %119 : vector<1x256xf32> to vector<4x256xf32>
    %123 = arith.mulf %121, %122 : vector<4x256xf32>
    %124 = arith.addf %118, %123 : vector<4x256xf32>
    %c2_65 = arith.constant 2 : index
    %c17_66 = arith.constant 17 : index
    %125 = vector.load %arg8[%c2_65, %c17_66] : memref<8x290xf32, #tpu.memory_space<vmem>>, vector<1x256xf32>
    %c0_67 = arith.constant 0 : index
    %c18 = arith.constant 18 : index
    %126 = vector.load %arg2[%c0_67, %c18] : memref<4x36xf32, #tpu.memory_space<vmem>>, vector<4x1xf32>
    %127 = vector.broadcast %126 : vector<4x1xf32> to vector<4x256xf32>
    %128 = vector.broadcast %125 : vector<1x256xf32> to vector<4x256xf32>
    %129 = arith.mulf %127, %128 : vector<4x256xf32>
    %130 = arith.addf %124, %129 : vector<4x256xf32>
    %c3_68 = arith.constant 3 : index
    %c17_69 = arith.constant 17 : index
    %131 = vector.load %arg8[%c3_68, %c17_69] : memref<8x290xf32, #tpu.memory_space<vmem>>, vector<1x256xf32>
    %c0_70 = arith.constant 0 : index
    %c19 = arith.constant 19 : index
    %132 = vector.load %arg2[%c0_70, %c19] : memref<4x36xf32, #tpu.memory_space<vmem>>, vector<4x1xf32>
    %133 = vector.broadcast %132 : vector<4x1xf32> to vector<4x256xf32>
    %134 = vector.broadcast %131 : vector<1x256xf32> to vector<4x256xf32>
    %135 = arith.mulf %133, %134 : vector<4x256xf32>
    %136 = arith.addf %130, %135 : vector<4x256xf32>
    %c0_71 = arith.constant 0 : index
    %c18_72 = arith.constant 18 : index
    %137 = vector.load %arg8[%c0_71, %c18_72] : memref<8x290xf32, #tpu.memory_space<vmem>>, vector<1x256xf32>
    %138 = arith.mulf %137, %1 : vector<1x256xf32>
    %c0_73 = arith.constant 0 : index
    %c20 = arith.constant 20 : index
    %139 = vector.load %arg2[%c0_73, %c20] : memref<4x36xf32, #tpu.memory_space<vmem>>, vector<4x1xf32>
    %140 = vector.broadcast %139 : vector<4x1xf32> to vector<4x256xf32>
    %141 = vector.broadcast %138 : vector<1x256xf32> to vector<4x256xf32>
    %142 = arith.mulf %140, %141 : vector<4x256xf32>
    %143 = arith.addf %136, %142 : vector<4x256xf32>
    %c1_74 = arith.constant 1 : index
    %c18_75 = arith.constant 18 : index
    %144 = vector.load %arg8[%c1_74, %c18_75] : memref<8x290xf32, #tpu.memory_space<vmem>>, vector<1x256xf32>
    %145 = arith.mulf %144, %1 : vector<1x256xf32>
    %c0_76 = arith.constant 0 : index
    %c21 = arith.constant 21 : index
    %146 = vector.load %arg2[%c0_76, %c21] : memref<4x36xf32, #tpu.memory_space<vmem>>, vector<4x1xf32>
    %147 = vector.broadcast %146 : vector<4x1xf32> to vector<4x256xf32>
    %148 = vector.broadcast %145 : vector<1x256xf32> to vector<4x256xf32>
    %149 = arith.mulf %147, %148 : vector<4x256xf32>
    %150 = arith.addf %143, %149 : vector<4x256xf32>
    %c2_77 = arith.constant 2 : index
    %c18_78 = arith.constant 18 : index
    %151 = vector.load %arg8[%c2_77, %c18_78] : memref<8x290xf32, #tpu.memory_space<vmem>>, vector<1x256xf32>
    %152 = arith.mulf %151, %1 : vector<1x256xf32>
    %c0_79 = arith.constant 0 : index
    %c22 = arith.constant 22 : index
    %153 = vector.load %arg2[%c0_79, %c22] : memref<4x36xf32, #tpu.memory_space<vmem>>, vector<4x1xf32>
    %154 = vector.broadcast %153 : vector<4x1xf32> to vector<4x256xf32>
    %155 = vector.broadcast %152 : vector<1x256xf32> to vector<4x256xf32>
    %156 = arith.mulf %154, %155 : vector<4x256xf32>
    %157 = arith.addf %150, %156 : vector<4x256xf32>
    %c3_80 = arith.constant 3 : index
    %c18_81 = arith.constant 18 : index
    %158 = vector.load %arg8[%c3_80, %c18_81] : memref<8x290xf32, #tpu.memory_space<vmem>>, vector<1x256xf32>
    %159 = arith.mulf %158, %1 : vector<1x256xf32>
    %c0_82 = arith.constant 0 : index
    %c23 = arith.constant 23 : index
    %160 = vector.load %arg2[%c0_82, %c23] : memref<4x36xf32, #tpu.memory_space<vmem>>, vector<4x1xf32>
    %161 = vector.broadcast %160 : vector<4x1xf32> to vector<4x256xf32>
    %162 = vector.broadcast %159 : vector<1x256xf32> to vector<4x256xf32>
    %163 = arith.mulf %161, %162 : vector<4x256xf32>
    %164 = arith.addf %157, %163 : vector<4x256xf32>
    %c0_83 = arith.constant 0 : index
    %c32 = arith.constant 32 : index
    %165 = vector.load %arg8[%c0_83, %c32] : memref<8x290xf32, #tpu.memory_space<vmem>>, vector<1x256xf32>
    %166 = arith.mulf %165, %0 : vector<1x256xf32>
    %c0_84 = arith.constant 0 : index
    %c24 = arith.constant 24 : index
    %167 = vector.load %arg2[%c0_84, %c24] : memref<4x36xf32, #tpu.memory_space<vmem>>, vector<4x1xf32>
    %168 = vector.broadcast %167 : vector<4x1xf32> to vector<4x256xf32>
    %169 = vector.broadcast %166 : vector<1x256xf32> to vector<4x256xf32>
    %170 = arith.mulf %168, %169 : vector<4x256xf32>
    %c1_85 = arith.constant 1 : index
    %c32_86 = arith.constant 32 : index
    %171 = vector.load %arg8[%c1_85, %c32_86] : memref<8x290xf32, #tpu.memory_space<vmem>>, vector<1x256xf32>
    %172 = arith.mulf %171, %0 : vector<1x256xf32>
    %c0_87 = arith.constant 0 : index
    %c25 = arith.constant 25 : index
    %173 = vector.load %arg2[%c0_87, %c25] : memref<4x36xf32, #tpu.memory_space<vmem>>, vector<4x1xf32>
    %174 = vector.broadcast %173 : vector<4x1xf32> to vector<4x256xf32>
    %175 = vector.broadcast %172 : vector<1x256xf32> to vector<4x256xf32>
    %176 = arith.mulf %174, %175 : vector<4x256xf32>
    %177 = arith.addf %170, %176 : vector<4x256xf32>
    %c2_88 = arith.constant 2 : index
    %c32_89 = arith.constant 32 : index
    %178 = vector.load %arg8[%c2_88, %c32_89] : memref<8x290xf32, #tpu.memory_space<vmem>>, vector<1x256xf32>
    %179 = arith.mulf %178, %0 : vector<1x256xf32>
    %c0_90 = arith.constant 0 : index
    %c26 = arith.constant 26 : index
    %180 = vector.load %arg2[%c0_90, %c26] : memref<4x36xf32, #tpu.memory_space<vmem>>, vector<4x1xf32>
    %181 = vector.broadcast %180 : vector<4x1xf32> to vector<4x256xf32>
    %182 = vector.broadcast %179 : vector<1x256xf32> to vector<4x256xf32>
    %183 = arith.mulf %181, %182 : vector<4x256xf32>
    %184 = arith.addf %177, %183 : vector<4x256xf32>
    %c3_91 = arith.constant 3 : index
    %c32_92 = arith.constant 32 : index
    %185 = vector.load %arg8[%c3_91, %c32_92] : memref<8x290xf32, #tpu.memory_space<vmem>>, vector<1x256xf32>
    %186 = arith.mulf %185, %0 : vector<1x256xf32>
    %c0_93 = arith.constant 0 : index
    %c27 = arith.constant 27 : index
    %187 = vector.load %arg2[%c0_93, %c27] : memref<4x36xf32, #tpu.memory_space<vmem>>, vector<4x1xf32>
    %188 = vector.broadcast %187 : vector<4x1xf32> to vector<4x256xf32>
    %189 = vector.broadcast %186 : vector<1x256xf32> to vector<4x256xf32>
    %190 = arith.mulf %188, %189 : vector<4x256xf32>
    %191 = arith.addf %184, %190 : vector<4x256xf32>
    %c0_94 = arith.constant 0 : index
    %c33 = arith.constant 33 : index
    %192 = vector.load %arg8[%c0_94, %c33] : memref<8x290xf32, #tpu.memory_space<vmem>>, vector<1x256xf32>
    %c0_95 = arith.constant 0 : index
    %c28 = arith.constant 28 : index
    %193 = vector.load %arg2[%c0_95, %c28] : memref<4x36xf32, #tpu.memory_space<vmem>>, vector<4x1xf32>
    %194 = vector.broadcast %193 : vector<4x1xf32> to vector<4x256xf32>
    %195 = vector.broadcast %192 : vector<1x256xf32> to vector<4x256xf32>
    %196 = arith.mulf %194, %195 : vector<4x256xf32>
    %197 = arith.addf %191, %196 : vector<4x256xf32>
    %c1_96 = arith.constant 1 : index
    %c33_97 = arith.constant 33 : index
    %198 = vector.load %arg8[%c1_96, %c33_97] : memref<8x290xf32, #tpu.memory_space<vmem>>, vector<1x256xf32>
    %c0_98 = arith.constant 0 : index
    %c29 = arith.constant 29 : index
    %199 = vector.load %arg2[%c0_98, %c29] : memref<4x36xf32, #tpu.memory_space<vmem>>, vector<4x1xf32>
    %200 = vector.broadcast %199 : vector<4x1xf32> to vector<4x256xf32>
    %201 = vector.broadcast %198 : vector<1x256xf32> to vector<4x256xf32>
    %202 = arith.mulf %200, %201 : vector<4x256xf32>
    %203 = arith.addf %197, %202 : vector<4x256xf32>
    %c2_99 = arith.constant 2 : index
    %c33_100 = arith.constant 33 : index
    %204 = vector.load %arg8[%c2_99, %c33_100] : memref<8x290xf32, #tpu.memory_space<vmem>>, vector<1x256xf32>
    %c0_101 = arith.constant 0 : index
    %c30 = arith.constant 30 : index
    %205 = vector.load %arg2[%c0_101, %c30] : memref<4x36xf32, #tpu.memory_space<vmem>>, vector<4x1xf32>
    %206 = vector.broadcast %205 : vector<4x1xf32> to vector<4x256xf32>
    %207 = vector.broadcast %204 : vector<1x256xf32> to vector<4x256xf32>
    %208 = arith.mulf %206, %207 : vector<4x256xf32>
    %209 = arith.addf %203, %208 : vector<4x256xf32>
    %c3_102 = arith.constant 3 : index
    %c33_103 = arith.constant 33 : index
    %210 = vector.load %arg8[%c3_102, %c33_103] : memref<8x290xf32, #tpu.memory_space<vmem>>, vector<1x256xf32>
    %c0_104 = arith.constant 0 : index
    %c31 = arith.constant 31 : index
    %211 = vector.load %arg2[%c0_104, %c31] : memref<4x36xf32, #tpu.memory_space<vmem>>, vector<4x1xf32>
    %212 = vector.broadcast %211 : vector<4x1xf32> to vector<4x256xf32>
    %213 = vector.broadcast %210 : vector<1x256xf32> to vector<4x256xf32>
    %214 = arith.mulf %212, %213 : vector<4x256xf32>
    %215 = arith.addf %209, %214 : vector<4x256xf32>
    %c0_105 = arith.constant 0 : index
    %c34 = arith.constant 34 : index
    %216 = vector.load %arg8[%c0_105, %c34] : memref<8x290xf32, #tpu.memory_space<vmem>>, vector<1x256xf32>
    %217 = arith.mulf %216, %1 : vector<1x256xf32>
    %c0_106 = arith.constant 0 : index
    %c32_107 = arith.constant 32 : index
    %218 = vector.load %arg2[%c0_106, %c32_107] : memref<4x36xf32, #tpu.memory_space<vmem>>, vector<4x1xf32>
    %219 = vector.broadcast %218 : vector<4x1xf32> to vector<4x256xf32>
    %220 = vector.broadcast %217 : vector<1x256xf32> to vector<4x256xf32>
    %221 = arith.mulf %219, %220 : vector<4x256xf32>
    %222 = arith.addf %215, %221 : vector<4x256xf32>
    %c1_108 = arith.constant 1 : index
    %c34_109 = arith.constant 34 : index
    %223 = vector.load %arg8[%c1_108, %c34_109] : memref<8x290xf32, #tpu.memory_space<vmem>>, vector<1x256xf32>
    %224 = arith.mulf %223, %1 : vector<1x256xf32>
    %c0_110 = arith.constant 0 : index
    %c33_111 = arith.constant 33 : index
    %225 = vector.load %arg2[%c0_110, %c33_111] : memref<4x36xf32, #tpu.memory_space<vmem>>, vector<4x1xf32>
    %226 = vector.broadcast %225 : vector<4x1xf32> to vector<4x256xf32>
    %227 = vector.broadcast %224 : vector<1x256xf32> to vector<4x256xf32>
    %228 = arith.mulf %226, %227 : vector<4x256xf32>
    %229 = arith.addf %222, %228 : vector<4x256xf32>
    %c2_112 = arith.constant 2 : index
    %c34_113 = arith.constant 34 : index
    %230 = vector.load %arg8[%c2_112, %c34_113] : memref<8x290xf32, #tpu.memory_space<vmem>>, vector<1x256xf32>
    %231 = arith.mulf %230, %1 : vector<1x256xf32>
    %c0_114 = arith.constant 0 : index
    %c34_115 = arith.constant 34 : index
    %232 = vector.load %arg2[%c0_114, %c34_115] : memref<4x36xf32, #tpu.memory_space<vmem>>, vector<4x1xf32>
    %233 = vector.broadcast %232 : vector<4x1xf32> to vector<4x256xf32>
    %234 = vector.broadcast %231 : vector<1x256xf32> to vector<4x256xf32>
    %235 = arith.mulf %233, %234 : vector<4x256xf32>
    %236 = arith.addf %229, %235 : vector<4x256xf32>
    %c3_116 = arith.constant 3 : index
    %c34_117 = arith.constant 34 : index
    %237 = vector.load %arg8[%c3_116, %c34_117] : memref<8x290xf32, #tpu.memory_space<vmem>>, vector<1x256xf32>
    %238 = arith.mulf %237, %1 : vector<1x256xf32>
    %c0_118 = arith.constant 0 : index
    %c35 = arith.constant 35 : index
    %239 = vector.load %arg2[%c0_118, %c35] : memref<4x36xf32, #tpu.memory_space<vmem>>, vector<4x1xf32>
    %240 = vector.broadcast %239 : vector<4x1xf32> to vector<4x256xf32>
    %241 = vector.broadcast %238 : vector<1x256xf32> to vector<4x256xf32>
    %242 = arith.mulf %240, %241 : vector<4x256xf32>
    %243 = arith.addf %236, %242 : vector<4x256xf32>
    %244 = arith.addf %85, %164 : vector<4x256xf32>
    %245 = arith.addf %244, %243 : vector<4x256xf32>
    %c0_119 = arith.constant 0 : index
    %c0_120 = arith.constant 0 : index
    %246 = vector.load %arg3[%c0_119, %c0_120] : memref<4x1xf32, #tpu.memory_space<vmem>>, vector<4x1xf32>
    %247 = vector.broadcast %246 : vector<4x1xf32> to vector<4x256xf32>
    %248 = arith.addf %245, %247 : vector<4x256xf32>
    %cst_121 = arith.constant 0.000000e+00 : f32
    %249 = vector.broadcast %cst_121 : f32 to vector<4x256xf32>
    %250 = arith.maximumf %248, %249 : vector<4x256xf32>
    %c0_122 = arith.constant 0 : index
    %c17_123 = arith.constant 17 : index
    %251 = vector.load %arg8[%c0_122, %c17_123] : memref<8x290xf32, #tpu.memory_space<vmem>>, vector<4x256xf32>
    tpu.vector_store %arg8[%c0_122, %c17_123], %250 {strides = array<i32>} : memref<8x290xf32, #tpu.memory_space<vmem>>, vector<4x256xf32>,
    %c0_124 = arith.constant 0 : index
    %c0_125 = arith.constant 0 : index
    %252 = vector.load %arg8[%c0_124, %c0_125] : memref<8x290xf32, #tpu.memory_space<vmem>>, vector<1x256xf32>
    %253 = arith.mulf %252, %0 : vector<1x256xf32>
    %c0_126 = arith.constant 0 : index
    %c0_127 = arith.constant 0 : index
    %254 = vector.load %arg4[%c0_126, %c0_127] : memref<4x36xf32, #tpu.memory_space<vmem>>, vector<4x1xf32>
    %255 = vector.broadcast %254 : vector<4x1xf32> to vector<4x256xf32>
    %256 = vector.broadcast %253 : vector<1x256xf32> to vector<4x256xf32>
    %257 = arith.mulf %255, %256 : vector<4x256xf32>
    %c1_128 = arith.constant 1 : index
    %c0_129 = arith.constant 0 : index
    %258 = vector.load %arg8[%c1_128, %c0_129] : memref<8x290xf32, #tpu.memory_space<vmem>>, vector<1x256xf32>
    %259 = arith.mulf %258, %0 : vector<1x256xf32>
    %c0_130 = arith.constant 0 : index
    %c1_131 = arith.constant 1 : index
    %260 = vector.load %arg4[%c0_130, %c1_131] : memref<4x36xf32, #tpu.memory_space<vmem>>, vector<4x1xf32>
    %261 = vector.broadcast %260 : vector<4x1xf32> to vector<4x256xf32>
    %262 = vector.broadcast %259 : vector<1x256xf32> to vector<4x256xf32>
    %263 = arith.mulf %261, %262 : vector<4x256xf32>
    %264 = arith.addf %257, %263 : vector<4x256xf32>
    %c2_132 = arith.constant 2 : index
    %c0_133 = arith.constant 0 : index
    %265 = vector.load %arg8[%c2_132, %c0_133] : memref<8x290xf32, #tpu.memory_space<vmem>>, vector<1x256xf32>
    %266 = arith.mulf %265, %0 : vector<1x256xf32>
    %c0_134 = arith.constant 0 : index
    %c2_135 = arith.constant 2 : index
    %267 = vector.load %arg4[%c0_134, %c2_135] : memref<4x36xf32, #tpu.memory_space<vmem>>, vector<4x1xf32>
    %268 = vector.broadcast %267 : vector<4x1xf32> to vector<4x256xf32>
    %269 = vector.broadcast %266 : vector<1x256xf32> to vector<4x256xf32>
    %270 = arith.mulf %268, %269 : vector<4x256xf32>
    %271 = arith.addf %264, %270 : vector<4x256xf32>
    %c3_136 = arith.constant 3 : index
    %c0_137 = arith.constant 0 : index
    %272 = vector.load %arg8[%c3_136, %c0_137] : memref<8x290xf32, #tpu.memory_space<vmem>>, vector<1x256xf32>
    %273 = arith.mulf %272, %0 : vector<1x256xf32>
    %c0_138 = arith.constant 0 : index
    %c3_139 = arith.constant 3 : index
    %274 = vector.load %arg4[%c0_138, %c3_139] : memref<4x36xf32, #tpu.memory_space<vmem>>, vector<4x1xf32>
    %275 = vector.broadcast %274 : vector<4x1xf32> to vector<4x256xf32>
    %276 = vector.broadcast %273 : vector<1x256xf32> to vector<4x256xf32>
    %277 = arith.mulf %275, %276 : vector<4x256xf32>
    %278 = arith.addf %271, %277 : vector<4x256xf32>
    %c0_140 = arith.constant 0 : index
    %c1_141 = arith.constant 1 : index
    %279 = vector.load %arg8[%c0_140, %c1_141] : memref<8x290xf32, #tpu.memory_space<vmem>>, vector<1x256xf32>
    %c0_142 = arith.constant 0 : index
    %c4_143 = arith.constant 4 : index
    %280 = vector.load %arg4[%c0_142, %c4_143] : memref<4x36xf32, #tpu.memory_space<vmem>>, vector<4x1xf32>
    %281 = vector.broadcast %280 : vector<4x1xf32> to vector<4x256xf32>
    %282 = vector.broadcast %279 : vector<1x256xf32> to vector<4x256xf32>
    %283 = arith.mulf %281, %282 : vector<4x256xf32>
    %284 = arith.addf %278, %283 : vector<4x256xf32>
    %c1_144 = arith.constant 1 : index
    %c1_145 = arith.constant 1 : index
    %285 = vector.load %arg8[%c1_144, %c1_145] : memref<8x290xf32, #tpu.memory_space<vmem>>, vector<1x256xf32>
    %c0_146 = arith.constant 0 : index
    %c5_147 = arith.constant 5 : index
    %286 = vector.load %arg4[%c0_146, %c5_147] : memref<4x36xf32, #tpu.memory_space<vmem>>, vector<4x1xf32>
    %287 = vector.broadcast %286 : vector<4x1xf32> to vector<4x256xf32>
    %288 = vector.broadcast %285 : vector<1x256xf32> to vector<4x256xf32>
    %289 = arith.mulf %287, %288 : vector<4x256xf32>
    %290 = arith.addf %284, %289 : vector<4x256xf32>
    %c2_148 = arith.constant 2 : index
    %c1_149 = arith.constant 1 : index
    %291 = vector.load %arg8[%c2_148, %c1_149] : memref<8x290xf32, #tpu.memory_space<vmem>>, vector<1x256xf32>
    %c0_150 = arith.constant 0 : index
    %c6_151 = arith.constant 6 : index
    %292 = vector.load %arg4[%c0_150, %c6_151] : memref<4x36xf32, #tpu.memory_space<vmem>>, vector<4x1xf32>
    %293 = vector.broadcast %292 : vector<4x1xf32> to vector<4x256xf32>
    %294 = vector.broadcast %291 : vector<1x256xf32> to vector<4x256xf32>
    %295 = arith.mulf %293, %294 : vector<4x256xf32>
    %296 = arith.addf %290, %295 : vector<4x256xf32>
    %c3_152 = arith.constant 3 : index
    %c1_153 = arith.constant 1 : index
    %297 = vector.load %arg8[%c3_152, %c1_153] : memref<8x290xf32, #tpu.memory_space<vmem>>, vector<1x256xf32>
    %c0_154 = arith.constant 0 : index
    %c7_155 = arith.constant 7 : index
    %298 = vector.load %arg4[%c0_154, %c7_155] : memref<4x36xf32, #tpu.memory_space<vmem>>, vector<4x1xf32>
    %299 = vector.broadcast %298 : vector<4x1xf32> to vector<4x256xf32>
    %300 = vector.broadcast %297 : vector<1x256xf32> to vector<4x256xf32>
    %301 = arith.mulf %299, %300 : vector<4x256xf32>
    %302 = arith.addf %296, %301 : vector<4x256xf32>
    %c0_156 = arith.constant 0 : index
    %c2_157 = arith.constant 2 : index
    %303 = vector.load %arg8[%c0_156, %c2_157] : memref<8x290xf32, #tpu.memory_space<vmem>>, vector<1x256xf32>
    %304 = arith.mulf %303, %1 : vector<1x256xf32>
    %c0_158 = arith.constant 0 : index
    %c8_159 = arith.constant 8 : index
    %305 = vector.load %arg4[%c0_158, %c8_159] : memref<4x36xf32, #tpu.memory_space<vmem>>, vector<4x1xf32>
    %306 = vector.broadcast %305 : vector<4x1xf32> to vector<4x256xf32>
    %307 = vector.broadcast %304 : vector<1x256xf32> to vector<4x256xf32>
    %308 = arith.mulf %306, %307 : vector<4x256xf32>
    %309 = arith.addf %302, %308 : vector<4x256xf32>
    %c1_160 = arith.constant 1 : index
    %c2_161 = arith.constant 2 : index
    %310 = vector.load %arg8[%c1_160, %c2_161] : memref<8x290xf32, #tpu.memory_space<vmem>>, vector<1x256xf32>
    %311 = arith.mulf %310, %1 : vector<1x256xf32>
    %c0_162 = arith.constant 0 : index
    %c9_163 = arith.constant 9 : index
    %312 = vector.load %arg4[%c0_162, %c9_163] : memref<4x36xf32, #tpu.memory_space<vmem>>, vector<4x1xf32>
    %313 = vector.broadcast %312 : vector<4x1xf32> to vector<4x256xf32>
    %314 = vector.broadcast %311 : vector<1x256xf32> to vector<4x256xf32>
    %315 = arith.mulf %313, %314 : vector<4x256xf32>
    %316 = arith.addf %309, %315 : vector<4x256xf32>
    %c2_164 = arith.constant 2 : index
    %c2_165 = arith.constant 2 : index
    %317 = vector.load %arg8[%c2_164, %c2_165] : memref<8x290xf32, #tpu.memory_space<vmem>>, vector<1x256xf32>
    %318 = arith.mulf %317, %1 : vector<1x256xf32>
    %c0_166 = arith.constant 0 : index
    %c10_167 = arith.constant 10 : index
    %319 = vector.load %arg4[%c0_166, %c10_167] : memref<4x36xf32, #tpu.memory_space<vmem>>, vector<4x1xf32>
    %320 = vector.broadcast %319 : vector<4x1xf32> to vector<4x256xf32>
    %321 = vector.broadcast %318 : vector<1x256xf32> to vector<4x256xf32>
    %322 = arith.mulf %320, %321 : vector<4x256xf32>
    %323 = arith.addf %316, %322 : vector<4x256xf32>
    %c3_168 = arith.constant 3 : index
    %c2_169 = arith.constant 2 : index
    %324 = vector.load %arg8[%c3_168, %c2_169] : memref<8x290xf32, #tpu.memory_space<vmem>>, vector<1x256xf32>
    %325 = arith.mulf %324, %1 : vector<1x256xf32>
    %c0_170 = arith.constant 0 : index
    %c11_171 = arith.constant 11 : index
    %326 = vector.load %arg4[%c0_170, %c11_171] : memref<4x36xf32, #tpu.memory_space<vmem>>, vector<4x1xf32>
    %327 = vector.broadcast %326 : vector<4x1xf32> to vector<4x256xf32>
    %328 = vector.broadcast %325 : vector<1x256xf32> to vector<4x256xf32>
    %329 = arith.mulf %327, %328 : vector<4x256xf32>
    %330 = arith.addf %323, %329 : vector<4x256xf32>
    %c0_172 = arith.constant 0 : index
    %c16_173 = arith.constant 16 : index
    %331 = vector.load %arg8[%c0_172, %c16_173] : memref<8x290xf32, #tpu.memory_space<vmem>>, vector<1x256xf32>
    %332 = arith.mulf %331, %0 : vector<1x256xf32>
    %c0_174 = arith.constant 0 : index
    %c12_175 = arith.constant 12 : index
    %333 = vector.load %arg4[%c0_174, %c12_175] : memref<4x36xf32, #tpu.memory_space<vmem>>, vector<4x1xf32>
    %334 = vector.broadcast %333 : vector<4x1xf32> to vector<4x256xf32>
    %335 = vector.broadcast %332 : vector<1x256xf32> to vector<4x256xf32>
    %336 = arith.mulf %334, %335 : vector<4x256xf32>
    %c1_176 = arith.constant 1 : index
    %c16_177 = arith.constant 16 : index
    %337 = vector.load %arg8[%c1_176, %c16_177] : memref<8x290xf32, #tpu.memory_space<vmem>>, vector<1x256xf32>
    %338 = arith.mulf %337, %0 : vector<1x256xf32>
    %c0_178 = arith.constant 0 : index
    %c13_179 = arith.constant 13 : index
    %339 = vector.load %arg4[%c0_178, %c13_179] : memref<4x36xf32, #tpu.memory_space<vmem>>, vector<4x1xf32>
    %340 = vector.broadcast %339 : vector<4x1xf32> to vector<4x256xf32>
    %341 = vector.broadcast %338 : vector<1x256xf32> to vector<4x256xf32>
    %342 = arith.mulf %340, %341 : vector<4x256xf32>
    %343 = arith.addf %336, %342 : vector<4x256xf32>
    %c2_180 = arith.constant 2 : index
    %c16_181 = arith.constant 16 : index
    %344 = vector.load %arg8[%c2_180, %c16_181] : memref<8x290xf32, #tpu.memory_space<vmem>>, vector<1x256xf32>
    %345 = arith.mulf %344, %0 : vector<1x256xf32>
    %c0_182 = arith.constant 0 : index
    %c14_183 = arith.constant 14 : index
    %346 = vector.load %arg4[%c0_182, %c14_183] : memref<4x36xf32, #tpu.memory_space<vmem>>, vector<4x1xf32>
    %347 = vector.broadcast %346 : vector<4x1xf32> to vector<4x256xf32>
    %348 = vector.broadcast %345 : vector<1x256xf32> to vector<4x256xf32>
    %349 = arith.mulf %347, %348 : vector<4x256xf32>
    %350 = arith.addf %343, %349 : vector<4x256xf32>
    %c3_184 = arith.constant 3 : index
    %c16_185 = arith.constant 16 : index
    %351 = vector.load %arg8[%c3_184, %c16_185] : memref<8x290xf32, #tpu.memory_space<vmem>>, vector<1x256xf32>
    %352 = arith.mulf %351, %0 : vector<1x256xf32>
    %c0_186 = arith.constant 0 : index
    %c15_187 = arith.constant 15 : index
    %353 = vector.load %arg4[%c0_186, %c15_187] : memref<4x36xf32, #tpu.memory_space<vmem>>, vector<4x1xf32>
    %354 = vector.broadcast %353 : vector<4x1xf32> to vector<4x256xf32>
    %355 = vector.broadcast %352 : vector<1x256xf32> to vector<4x256xf32>
    %356 = arith.mulf %354, %355 : vector<4x256xf32>
    %357 = arith.addf %350, %356 : vector<4x256xf32>
    %c0_188 = arith.constant 0 : index
    %c17_189 = arith.constant 17 : index
    %358 = vector.load %arg8[%c0_188, %c17_189] : memref<8x290xf32, #tpu.memory_space<vmem>>, vector<1x256xf32>
    %c0_190 = arith.constant 0 : index
    %c16_191 = arith.constant 16 : index
    %359 = vector.load %arg4[%c0_190, %c16_191] : memref<4x36xf32, #tpu.memory_space<vmem>>, vector<4x1xf32>
    %360 = vector.broadcast %359 : vector<4x1xf32> to vector<4x256xf32>
    %361 = vector.broadcast %358 : vector<1x256xf32> to vector<4x256xf32>
    %362 = arith.mulf %360, %361 : vector<4x256xf32>
    %363 = arith.addf %357, %362 : vector<4x256xf32>
    %c1_192 = arith.constant 1 : index
    %c17_193 = arith.constant 17 : index
    %364 = vector.load %arg8[%c1_192, %c17_193] : memref<8x290xf32, #tpu.memory_space<vmem>>, vector<1x256xf32>
    %c0_194 = arith.constant 0 : index
    %c17_195 = arith.constant 17 : index
    %365 = vector.load %arg4[%c0_194, %c17_195] : memref<4x36xf32, #tpu.memory_space<vmem>>, vector<4x1xf32>
    %366 = vector.broadcast %365 : vector<4x1xf32> to vector<4x256xf32>
    %367 = vector.broadcast %364 : vector<1x256xf32> to vector<4x256xf32>
    %368 = arith.mulf %366, %367 : vector<4x256xf32>
    %369 = arith.addf %363, %368 : vector<4x256xf32>
    %c2_196 = arith.constant 2 : index
    %c17_197 = arith.constant 17 : index
    %370 = vector.load %arg8[%c2_196, %c17_197] : memref<8x290xf32, #tpu.memory_space<vmem>>, vector<1x256xf32>
    %c0_198 = arith.constant 0 : index
    %c18_199 = arith.constant 18 : index
    %371 = vector.load %arg4[%c0_198, %c18_199] : memref<4x36xf32, #tpu.memory_space<vmem>>, vector<4x1xf32>
    %372 = vector.broadcast %371 : vector<4x1xf32> to vector<4x256xf32>
    %373 = vector.broadcast %370 : vector<1x256xf32> to vector<4x256xf32>
    %374 = arith.mulf %372, %373 : vector<4x256xf32>
    %375 = arith.addf %369, %374 : vector<4x256xf32>
    %c3_200 = arith.constant 3 : index
    %c17_201 = arith.constant 17 : index
    %376 = vector.load %arg8[%c3_200, %c17_201] : memref<8x290xf32, #tpu.memory_space<vmem>>, vector<1x256xf32>
    %c0_202 = arith.constant 0 : index
    %c19_203 = arith.constant 19 : index
    %377 = vector.load %arg4[%c0_202, %c19_203] : memref<4x36xf32, #tpu.memory_space<vmem>>, vector<4x1xf32>
    %378 = vector.broadcast %377 : vector<4x1xf32> to vector<4x256xf32>
    %379 = vector.broadcast %376 : vector<1x256xf32> to vector<4x256xf32>
    %380 = arith.mulf %378, %379 : vector<4x256xf32>
    %381 = arith.addf %375, %380 : vector<4x256xf32>
    %c0_204 = arith.constant 0 : index
    %c18_205 = arith.constant 18 : index
    %382 = vector.load %arg8[%c0_204, %c18_205] : memref<8x290xf32, #tpu.memory_space<vmem>>, vector<1x256xf32>
    %383 = arith.mulf %382, %1 : vector<1x256xf32>
    %c0_206 = arith.constant 0 : index
    %c20_207 = arith.constant 20 : index
    %384 = vector.load %arg4[%c0_206, %c20_207] : memref<4x36xf32, #tpu.memory_space<vmem>>, vector<4x1xf32>
    %385 = vector.broadcast %384 : vector<4x1xf32> to vector<4x256xf32>
    %386 = vector.broadcast %383 : vector<1x256xf32> to vector<4x256xf32>
    %387 = arith.mulf %385, %386 : vector<4x256xf32>
    %388 = arith.addf %381, %387 : vector<4x256xf32>
    %c1_208 = arith.constant 1 : index
    %c18_209 = arith.constant 18 : index
    %389 = vector.load %arg8[%c1_208, %c18_209] : memref<8x290xf32, #tpu.memory_space<vmem>>, vector<1x256xf32>
    %390 = arith.mulf %389, %1 : vector<1x256xf32>
    %c0_210 = arith.constant 0 : index
    %c21_211 = arith.constant 21 : index
    %391 = vector.load %arg4[%c0_210, %c21_211] : memref<4x36xf32, #tpu.memory_space<vmem>>, vector<4x1xf32>
    %392 = vector.broadcast %391 : vector<4x1xf32> to vector<4x256xf32>
    %393 = vector.broadcast %390 : vector<1x256xf32> to vector<4x256xf32>
    %394 = arith.mulf %392, %393 : vector<4x256xf32>
    %395 = arith.addf %388, %394 : vector<4x256xf32>
    %c2_212 = arith.constant 2 : index
    %c18_213 = arith.constant 18 : index
    %396 = vector.load %arg8[%c2_212, %c18_213] : memref<8x290xf32, #tpu.memory_space<vmem>>, vector<1x256xf32>
    %397 = arith.mulf %396, %1 : vector<1x256xf32>
    %c0_214 = arith.constant 0 : index
    %c22_215 = arith.constant 22 : index
    %398 = vector.load %arg4[%c0_214, %c22_215] : memref<4x36xf32, #tpu.memory_space<vmem>>, vector<4x1xf32>
    %399 = vector.broadcast %398 : vector<4x1xf32> to vector<4x256xf32>
    %400 = vector.broadcast %397 : vector<1x256xf32> to vector<4x256xf32>
    %401 = arith.mulf %399, %400 : vector<4x256xf32>
    %402 = arith.addf %395, %401 : vector<4x256xf32>
    %c3_216 = arith.constant 3 : index
    %c18_217 = arith.constant 18 : index
    %403 = vector.load %arg8[%c3_216, %c18_217] : memref<8x290xf32, #tpu.memory_space<vmem>>, vector<1x256xf32>
    %404 = arith.mulf %403, %1 : vector<1x256xf32>
    %c0_218 = arith.constant 0 : index
    %c23_219 = arith.constant 23 : index
    %405 = vector.load %arg4[%c0_218, %c23_219] : memref<4x36xf32, #tpu.memory_space<vmem>>, vector<4x1xf32>
    %406 = vector.broadcast %405 : vector<4x1xf32> to vector<4x256xf32>
    %407 = vector.broadcast %404 : vector<1x256xf32> to vector<4x256xf32>
    %408 = arith.mulf %406, %407 : vector<4x256xf32>
    %409 = arith.addf %402, %408 : vector<4x256xf32>
    %c0_220 = arith.constant 0 : index
    %c32_221 = arith.constant 32 : index
    %410 = vector.load %arg8[%c0_220, %c32_221] : memref<8x290xf32, #tpu.memory_space<vmem>>, vector<1x256xf32>
    %411 = arith.mulf %410, %0 : vector<1x256xf32>
    %c0_222 = arith.constant 0 : index
    %c24_223 = arith.constant 24 : index
    %412 = vector.load %arg4[%c0_222, %c24_223] : memref<4x36xf32, #tpu.memory_space<vmem>>, vector<4x1xf32>
    %413 = vector.broadcast %412 : vector<4x1xf32> to vector<4x256xf32>
    %414 = vector.broadcast %411 : vector<1x256xf32> to vector<4x256xf32>
    %415 = arith.mulf %413, %414 : vector<4x256xf32>
    %c1_224 = arith.constant 1 : index
    %c32_225 = arith.constant 32 : index
    %416 = vector.load %arg8[%c1_224, %c32_225] : memref<8x290xf32, #tpu.memory_space<vmem>>, vector<1x256xf32>
    %417 = arith.mulf %416, %0 : vector<1x256xf32>
    %c0_226 = arith.constant 0 : index
    %c25_227 = arith.constant 25 : index
    %418 = vector.load %arg4[%c0_226, %c25_227] : memref<4x36xf32, #tpu.memory_space<vmem>>, vector<4x1xf32>
    %419 = vector.broadcast %418 : vector<4x1xf32> to vector<4x256xf32>
    %420 = vector.broadcast %417 : vector<1x256xf32> to vector<4x256xf32>
    %421 = arith.mulf %419, %420 : vector<4x256xf32>
    %422 = arith.addf %415, %421 : vector<4x256xf32>
    %c2_228 = arith.constant 2 : index
    %c32_229 = arith.constant 32 : index
    %423 = vector.load %arg8[%c2_228, %c32_229] : memref<8x290xf32, #tpu.memory_space<vmem>>, vector<1x256xf32>
    %424 = arith.mulf %423, %0 : vector<1x256xf32>
    %c0_230 = arith.constant 0 : index
    %c26_231 = arith.constant 26 : index
    %425 = vector.load %arg4[%c0_230, %c26_231] : memref<4x36xf32, #tpu.memory_space<vmem>>, vector<4x1xf32>
    %426 = vector.broadcast %425 : vector<4x1xf32> to vector<4x256xf32>
    %427 = vector.broadcast %424 : vector<1x256xf32> to vector<4x256xf32>
    %428 = arith.mulf %426, %427 : vector<4x256xf32>
    %429 = arith.addf %422, %428 : vector<4x256xf32>
    %c3_232 = arith.constant 3 : index
    %c32_233 = arith.constant 32 : index
    %430 = vector.load %arg8[%c3_232, %c32_233] : memref<8x290xf32, #tpu.memory_space<vmem>>, vector<1x256xf32>
    %431 = arith.mulf %430, %0 : vector<1x256xf32>
    %c0_234 = arith.constant 0 : index
    %c27_235 = arith.constant 27 : index
    %432 = vector.load %arg4[%c0_234, %c27_235] : memref<4x36xf32, #tpu.memory_space<vmem>>, vector<4x1xf32>
    %433 = vector.broadcast %432 : vector<4x1xf32> to vector<4x256xf32>
    %434 = vector.broadcast %431 : vector<1x256xf32> to vector<4x256xf32>
    %435 = arith.mulf %433, %434 : vector<4x256xf32>
    %436 = arith.addf %429, %435 : vector<4x256xf32>
    %c0_236 = arith.constant 0 : index
    %c33_237 = arith.constant 33 : index
    %437 = vector.load %arg8[%c0_236, %c33_237] : memref<8x290xf32, #tpu.memory_space<vmem>>, vector<1x256xf32>
    %c0_238 = arith.constant 0 : index
    %c28_239 = arith.constant 28 : index
    %438 = vector.load %arg4[%c0_238, %c28_239] : memref<4x36xf32, #tpu.memory_space<vmem>>, vector<4x1xf32>
    %439 = vector.broadcast %438 : vector<4x1xf32> to vector<4x256xf32>
    %440 = vector.broadcast %437 : vector<1x256xf32> to vector<4x256xf32>
    %441 = arith.mulf %439, %440 : vector<4x256xf32>
    %442 = arith.addf %436, %441 : vector<4x256xf32>
    %c1_240 = arith.constant 1 : index
    %c33_241 = arith.constant 33 : index
    %443 = vector.load %arg8[%c1_240, %c33_241] : memref<8x290xf32, #tpu.memory_space<vmem>>, vector<1x256xf32>
    %c0_242 = arith.constant 0 : index
    %c29_243 = arith.constant 29 : index
    %444 = vector.load %arg4[%c0_242, %c29_243] : memref<4x36xf32, #tpu.memory_space<vmem>>, vector<4x1xf32>
    %445 = vector.broadcast %444 : vector<4x1xf32> to vector<4x256xf32>
    %446 = vector.broadcast %443 : vector<1x256xf32> to vector<4x256xf32>
    %447 = arith.mulf %445, %446 : vector<4x256xf32>
    %448 = arith.addf %442, %447 : vector<4x256xf32>
    %c2_244 = arith.constant 2 : index
    %c33_245 = arith.constant 33 : index
    %449 = vector.load %arg8[%c2_244, %c33_245] : memref<8x290xf32, #tpu.memory_space<vmem>>, vector<1x256xf32>
    %c0_246 = arith.constant 0 : index
    %c30_247 = arith.constant 30 : index
    %450 = vector.load %arg4[%c0_246, %c30_247] : memref<4x36xf32, #tpu.memory_space<vmem>>, vector<4x1xf32>
    %451 = vector.broadcast %450 : vector<4x1xf32> to vector<4x256xf32>
    %452 = vector.broadcast %449 : vector<1x256xf32> to vector<4x256xf32>
    %453 = arith.mulf %451, %452 : vector<4x256xf32>
    %454 = arith.addf %448, %453 : vector<4x256xf32>
    %c3_248 = arith.constant 3 : index
    %c33_249 = arith.constant 33 : index
    %455 = vector.load %arg8[%c3_248, %c33_249] : memref<8x290xf32, #tpu.memory_space<vmem>>, vector<1x256xf32>
    %c0_250 = arith.constant 0 : index
    %c31_251 = arith.constant 31 : index
    %456 = vector.load %arg4[%c0_250, %c31_251] : memref<4x36xf32, #tpu.memory_space<vmem>>, vector<4x1xf32>
    %457 = vector.broadcast %456 : vector<4x1xf32> to vector<4x256xf32>
    %458 = vector.broadcast %455 : vector<1x256xf32> to vector<4x256xf32>
    %459 = arith.mulf %457, %458 : vector<4x256xf32>
    %460 = arith.addf %454, %459 : vector<4x256xf32>
    %c0_252 = arith.constant 0 : index
    %c34_253 = arith.constant 34 : index
    %461 = vector.load %arg8[%c0_252, %c34_253] : memref<8x290xf32, #tpu.memory_space<vmem>>, vector<1x256xf32>
    %462 = arith.mulf %461, %1 : vector<1x256xf32>
    %c0_254 = arith.constant 0 : index
    %c32_255 = arith.constant 32 : index
    %463 = vector.load %arg4[%c0_254, %c32_255] : memref<4x36xf32, #tpu.memory_space<vmem>>, vector<4x1xf32>
    %464 = vector.broadcast %463 : vector<4x1xf32> to vector<4x256xf32>
    %465 = vector.broadcast %462 : vector<1x256xf32> to vector<4x256xf32>
    %466 = arith.mulf %464, %465 : vector<4x256xf32>
    %467 = arith.addf %460, %466 : vector<4x256xf32>
    %c1_256 = arith.constant 1 : index
    %c34_257 = arith.constant 34 : index
    %468 = vector.load %arg8[%c1_256, %c34_257] : memref<8x290xf32, #tpu.memory_space<vmem>>, vector<1x256xf32>
    %469 = arith.mulf %468, %1 : vector<1x256xf32>
    %c0_258 = arith.constant 0 : index
    %c33_259 = arith.constant 33 : index
    %470 = vector.load %arg4[%c0_258, %c33_259] : memref<4x36xf32, #tpu.memory_space<vmem>>, vector<4x1xf32>
    %471 = vector.broadcast %470 : vector<4x1xf32> to vector<4x256xf32>
    %472 = vector.broadcast %469 : vector<1x256xf32> to vector<4x256xf32>
    %473 = arith.mulf %471, %472 : vector<4x256xf32>
    %474 = arith.addf %467, %473 : vector<4x256xf32>
    %c2_260 = arith.constant 2 : index
    %c34_261 = arith.constant 34 : index
    %475 = vector.load %arg8[%c2_260, %c34_261] : memref<8x290xf32, #tpu.memory_space<vmem>>, vector<1x256xf32>
    %476 = arith.mulf %475, %1 : vector<1x256xf32>
    %c0_262 = arith.constant 0 : index
    %c34_263 = arith.constant 34 : index
    %477 = vector.load %arg4[%c0_262, %c34_263] : memref<4x36xf32, #tpu.memory_space<vmem>>, vector<4x1xf32>
    %478 = vector.broadcast %477 : vector<4x1xf32> to vector<4x256xf32>
    %479 = vector.broadcast %476 : vector<1x256xf32> to vector<4x256xf32>
    %480 = arith.mulf %478, %479 : vector<4x256xf32>
    %481 = arith.addf %474, %480 : vector<4x256xf32>
    %c3_264 = arith.constant 3 : index
    %c34_265 = arith.constant 34 : index
    %482 = vector.load %arg8[%c3_264, %c34_265] : memref<8x290xf32, #tpu.memory_space<vmem>>, vector<1x256xf32>
    %483 = arith.mulf %482, %1 : vector<1x256xf32>
    %c0_266 = arith.constant 0 : index
    %c35_267 = arith.constant 35 : index
    %484 = vector.load %arg4[%c0_266, %c35_267] : memref<4x36xf32, #tpu.memory_space<vmem>>, vector<4x1xf32>
    %485 = vector.broadcast %484 : vector<4x1xf32> to vector<4x256xf32>
    %486 = vector.broadcast %483 : vector<1x256xf32> to vector<4x256xf32>
    %487 = arith.mulf %485, %486 : vector<4x256xf32>
    %488 = arith.addf %481, %487 : vector<4x256xf32>
    %489 = arith.addf %330, %409 : vector<4x256xf32>
    %490 = arith.addf %489, %488 : vector<4x256xf32>
    %c0_268 = arith.constant 0 : index
    %c0_269 = arith.constant 0 : index
    %491 = vector.load %arg5[%c0_268, %c0_269] : memref<4x1xf32, #tpu.memory_space<vmem>>, vector<4x1xf32>
    %492 = vector.broadcast %491 : vector<4x1xf32> to vector<4x256xf32>
    %493 = arith.addf %490, %492 : vector<4x256xf32>
    %c0_270 = arith.constant 0 : index
    %c0_271 = arith.constant 0 : index
    %494 = vector.load %arg1[%c0_270, %c0_271] : memref<8x256xf32, #tpu.memory_space<vmem>>, vector<4x256xf32>
    %495 = arith.addf %493, %494 : vector<4x256xf32>
    %cst_272 = arith.constant 0.000000e+00 : f32
    %496 = vector.broadcast %cst_272 : f32 to vector<4x256xf32>
    %497 = arith.maximumf %495, %496 : vector<4x256xf32>
    %c0_273 = arith.constant 0 : index
    %c0_274 = arith.constant 0 : index
    %498 = vector.load %arg7[%c0_273, %c0_274] : memref<8x256xf32, #tpu.memory_space<vmem>>, vector<4x256xf32>
    tpu.vector_store %arg7[%c0_273, %c0_274], %497 {strides = array<i32>} : memref<8x256xf32, #tpu.memory_space<vmem>>, vector<4x256xf32>,
    %c4_275 = arith.constant 4 : index
    %c0_276 = arith.constant 0 : index
    %499 = vector.load %arg8[%c4_275, %c0_276] : memref<8x290xf32, #tpu.memory_space<vmem>>, vector<1x256xf32>
    %500 = arith.mulf %499, %0 : vector<1x256xf32>
    %c0_277 = arith.constant 0 : index
    %c0_278 = arith.constant 0 : index
    %501 = vector.load %arg2[%c0_277, %c0_278] : memref<4x36xf32, #tpu.memory_space<vmem>>, vector<4x1xf32>
    %502 = vector.broadcast %501 : vector<4x1xf32> to vector<4x256xf32>
    %503 = vector.broadcast %500 : vector<1x256xf32> to vector<4x256xf32>
    %504 = arith.mulf %502, %503 : vector<4x256xf32>
    %c5_279 = arith.constant 5 : index
    %c0_280 = arith.constant 0 : index
    %505 = vector.load %arg8[%c5_279, %c0_280] : memref<8x290xf32, #tpu.memory_space<vmem>>, vector<1x256xf32>
    %506 = arith.mulf %505, %0 : vector<1x256xf32>
    %c0_281 = arith.constant 0 : index
    %c1_282 = arith.constant 1 : index
    %507 = vector.load %arg2[%c0_281, %c1_282] : memref<4x36xf32, #tpu.memory_space<vmem>>, vector<4x1xf32>
    %508 = vector.broadcast %507 : vector<4x1xf32> to vector<4x256xf32>
    %509 = vector.broadcast %506 : vector<1x256xf32> to vector<4x256xf32>
    %510 = arith.mulf %508, %509 : vector<4x256xf32>
    %511 = arith.addf %504, %510 : vector<4x256xf32>
    %c6_283 = arith.constant 6 : index
    %c0_284 = arith.constant 0 : index
    %512 = vector.load %arg8[%c6_283, %c0_284] : memref<8x290xf32, #tpu.memory_space<vmem>>, vector<1x256xf32>
    %513 = arith.mulf %512, %0 : vector<1x256xf32>
    %c0_285 = arith.constant 0 : index
    %c2_286 = arith.constant 2 : index
    %514 = vector.load %arg2[%c0_285, %c2_286] : memref<4x36xf32, #tpu.memory_space<vmem>>, vector<4x1xf32>
    %515 = vector.broadcast %514 : vector<4x1xf32> to vector<4x256xf32>
    %516 = vector.broadcast %513 : vector<1x256xf32> to vector<4x256xf32>
    %517 = arith.mulf %515, %516 : vector<4x256xf32>
    %518 = arith.addf %511, %517 : vector<4x256xf32>
    %c7_287 = arith.constant 7 : index
    %c0_288 = arith.constant 0 : index
    %519 = vector.load %arg8[%c7_287, %c0_288] : memref<8x290xf32, #tpu.memory_space<vmem>>, vector<1x256xf32>
    %520 = arith.mulf %519, %0 : vector<1x256xf32>
    %c0_289 = arith.constant 0 : index
    %c3_290 = arith.constant 3 : index
    %521 = vector.load %arg2[%c0_289, %c3_290] : memref<4x36xf32, #tpu.memory_space<vmem>>, vector<4x1xf32>
    %522 = vector.broadcast %521 : vector<4x1xf32> to vector<4x256xf32>
    %523 = vector.broadcast %520 : vector<1x256xf32> to vector<4x256xf32>
    %524 = arith.mulf %522, %523 : vector<4x256xf32>
    %525 = arith.addf %518, %524 : vector<4x256xf32>
    %c4_291 = arith.constant 4 : index
    %c1_292 = arith.constant 1 : index
    %526 = vector.load %arg8[%c4_291, %c1_292] : memref<8x290xf32, #tpu.memory_space<vmem>>, vector<1x256xf32>
    %c0_293 = arith.constant 0 : index
    %c4_294 = arith.constant 4 : index
    %527 = vector.load %arg2[%c0_293, %c4_294] : memref<4x36xf32, #tpu.memory_space<vmem>>, vector<4x1xf32>
    %528 = vector.broadcast %527 : vector<4x1xf32> to vector<4x256xf32>
    %529 = vector.broadcast %526 : vector<1x256xf32> to vector<4x256xf32>
    %530 = arith.mulf %528, %529 : vector<4x256xf32>
    %531 = arith.addf %525, %530 : vector<4x256xf32>
    %c5_295 = arith.constant 5 : index
    %c1_296 = arith.constant 1 : index
    %532 = vector.load %arg8[%c5_295, %c1_296] : memref<8x290xf32, #tpu.memory_space<vmem>>, vector<1x256xf32>
    %c0_297 = arith.constant 0 : index
    %c5_298 = arith.constant 5 : index
    %533 = vector.load %arg2[%c0_297, %c5_298] : memref<4x36xf32, #tpu.memory_space<vmem>>, vector<4x1xf32>
    %534 = vector.broadcast %533 : vector<4x1xf32> to vector<4x256xf32>
    %535 = vector.broadcast %532 : vector<1x256xf32> to vector<4x256xf32>
    %536 = arith.mulf %534, %535 : vector<4x256xf32>
    %537 = arith.addf %531, %536 : vector<4x256xf32>
    %c6_299 = arith.constant 6 : index
    %c1_300 = arith.constant 1 : index
    %538 = vector.load %arg8[%c6_299, %c1_300] : memref<8x290xf32, #tpu.memory_space<vmem>>, vector<1x256xf32>
    %c0_301 = arith.constant 0 : index
    %c6_302 = arith.constant 6 : index
    %539 = vector.load %arg2[%c0_301, %c6_302] : memref<4x36xf32, #tpu.memory_space<vmem>>, vector<4x1xf32>
    %540 = vector.broadcast %539 : vector<4x1xf32> to vector<4x256xf32>
    %541 = vector.broadcast %538 : vector<1x256xf32> to vector<4x256xf32>
    %542 = arith.mulf %540, %541 : vector<4x256xf32>
    %543 = arith.addf %537, %542 : vector<4x256xf32>
    %c7_303 = arith.constant 7 : index
    %c1_304 = arith.constant 1 : index
    %544 = vector.load %arg8[%c7_303, %c1_304] : memref<8x290xf32, #tpu.memory_space<vmem>>, vector<1x256xf32>
    %c0_305 = arith.constant 0 : index
    %c7_306 = arith.constant 7 : index
    %545 = vector.load %arg2[%c0_305, %c7_306] : memref<4x36xf32, #tpu.memory_space<vmem>>, vector<4x1xf32>
    %546 = vector.broadcast %545 : vector<4x1xf32> to vector<4x256xf32>
    %547 = vector.broadcast %544 : vector<1x256xf32> to vector<4x256xf32>
    %548 = arith.mulf %546, %547 : vector<4x256xf32>
    %549 = arith.addf %543, %548 : vector<4x256xf32>
    %c4_307 = arith.constant 4 : index
    %c2_308 = arith.constant 2 : index
    %550 = vector.load %arg8[%c4_307, %c2_308] : memref<8x290xf32, #tpu.memory_space<vmem>>, vector<1x256xf32>
    %551 = arith.mulf %550, %1 : vector<1x256xf32>
    %c0_309 = arith.constant 0 : index
    %c8_310 = arith.constant 8 : index
    %552 = vector.load %arg2[%c0_309, %c8_310] : memref<4x36xf32, #tpu.memory_space<vmem>>, vector<4x1xf32>
    %553 = vector.broadcast %552 : vector<4x1xf32> to vector<4x256xf32>
    %554 = vector.broadcast %551 : vector<1x256xf32> to vector<4x256xf32>
    %555 = arith.mulf %553, %554 : vector<4x256xf32>
    %556 = arith.addf %549, %555 : vector<4x256xf32>
    %c5_311 = arith.constant 5 : index
    %c2_312 = arith.constant 2 : index
    %557 = vector.load %arg8[%c5_311, %c2_312] : memref<8x290xf32, #tpu.memory_space<vmem>>, vector<1x256xf32>
    %558 = arith.mulf %557, %1 : vector<1x256xf32>
    %c0_313 = arith.constant 0 : index
    %c9_314 = arith.constant 9 : index
    %559 = vector.load %arg2[%c0_313, %c9_314] : memref<4x36xf32, #tpu.memory_space<vmem>>, vector<4x1xf32>
    %560 = vector.broadcast %559 : vector<4x1xf32> to vector<4x256xf32>
    %561 = vector.broadcast %558 : vector<1x256xf32> to vector<4x256xf32>
    %562 = arith.mulf %560, %561 : vector<4x256xf32>
    %563 = arith.addf %556, %562 : vector<4x256xf32>
    %c6_315 = arith.constant 6 : index
    %c2_316 = arith.constant 2 : index
    %564 = vector.load %arg8[%c6_315, %c2_316] : memref<8x290xf32, #tpu.memory_space<vmem>>, vector<1x256xf32>
    %565 = arith.mulf %564, %1 : vector<1x256xf32>
    %c0_317 = arith.constant 0 : index
    %c10_318 = arith.constant 10 : index
    %566 = vector.load %arg2[%c0_317, %c10_318] : memref<4x36xf32, #tpu.memory_space<vmem>>, vector<4x1xf32>
    %567 = vector.broadcast %566 : vector<4x1xf32> to vector<4x256xf32>
    %568 = vector.broadcast %565 : vector<1x256xf32> to vector<4x256xf32>
    %569 = arith.mulf %567, %568 : vector<4x256xf32>
    %570 = arith.addf %563, %569 : vector<4x256xf32>
    %c7_319 = arith.constant 7 : index
    %c2_320 = arith.constant 2 : index
    %571 = vector.load %arg8[%c7_319, %c2_320] : memref<8x290xf32, #tpu.memory_space<vmem>>, vector<1x256xf32>
    %572 = arith.mulf %571, %1 : vector<1x256xf32>
    %c0_321 = arith.constant 0 : index
    %c11_322 = arith.constant 11 : index
    %573 = vector.load %arg2[%c0_321, %c11_322] : memref<4x36xf32, #tpu.memory_space<vmem>>, vector<4x1xf32>
    %574 = vector.broadcast %573 : vector<4x1xf32> to vector<4x256xf32>
    %575 = vector.broadcast %572 : vector<1x256xf32> to vector<4x256xf32>
    %576 = arith.mulf %574, %575 : vector<4x256xf32>
    %577 = arith.addf %570, %576 : vector<4x256xf32>
    %c4_323 = arith.constant 4 : index
    %c16_324 = arith.constant 16 : index
    %578 = vector.load %arg8[%c4_323, %c16_324] : memref<8x290xf32, #tpu.memory_space<vmem>>, vector<1x256xf32>
    %579 = arith.mulf %578, %0 : vector<1x256xf32>
    %c0_325 = arith.constant 0 : index
    %c12_326 = arith.constant 12 : index
    %580 = vector.load %arg2[%c0_325, %c12_326] : memref<4x36xf32, #tpu.memory_space<vmem>>, vector<4x1xf32>
    %581 = vector.broadcast %580 : vector<4x1xf32> to vector<4x256xf32>
    %582 = vector.broadcast %579 : vector<1x256xf32> to vector<4x256xf32>
    %583 = arith.mulf %581, %582 : vector<4x256xf32>
    %c5_327 = arith.constant 5 : index
    %c16_328 = arith.constant 16 : index
    %584 = vector.load %arg8[%c5_327, %c16_328] : memref<8x290xf32, #tpu.memory_space<vmem>>, vector<1x256xf32>
    %585 = arith.mulf %584, %0 : vector<1x256xf32>
    %c0_329 = arith.constant 0 : index
    %c13_330 = arith.constant 13 : index
    %586 = vector.load %arg2[%c0_329, %c13_330] : memref<4x36xf32, #tpu.memory_space<vmem>>, vector<4x1xf32>
    %587 = vector.broadcast %586 : vector<4x1xf32> to vector<4x256xf32>
    %588 = vector.broadcast %585 : vector<1x256xf32> to vector<4x256xf32>
    %589 = arith.mulf %587, %588 : vector<4x256xf32>
    %590 = arith.addf %583, %589 : vector<4x256xf32>
    %c6_331 = arith.constant 6 : index
    %c16_332 = arith.constant 16 : index
    %591 = vector.load %arg8[%c6_331, %c16_332] : memref<8x290xf32, #tpu.memory_space<vmem>>, vector<1x256xf32>
    %592 = arith.mulf %591, %0 : vector<1x256xf32>
    %c0_333 = arith.constant 0 : index
    %c14_334 = arith.constant 14 : index
    %593 = vector.load %arg2[%c0_333, %c14_334] : memref<4x36xf32, #tpu.memory_space<vmem>>, vector<4x1xf32>
    %594 = vector.broadcast %593 : vector<4x1xf32> to vector<4x256xf32>
    %595 = vector.broadcast %592 : vector<1x256xf32> to vector<4x256xf32>
    %596 = arith.mulf %594, %595 : vector<4x256xf32>
    %597 = arith.addf %590, %596 : vector<4x256xf32>
    %c7_335 = arith.constant 7 : index
    %c16_336 = arith.constant 16 : index
    %598 = vector.load %arg8[%c7_335, %c16_336] : memref<8x290xf32, #tpu.memory_space<vmem>>, vector<1x256xf32>
    %599 = arith.mulf %598, %0 : vector<1x256xf32>
    %c0_337 = arith.constant 0 : index
    %c15_338 = arith.constant 15 : index
    %600 = vector.load %arg2[%c0_337, %c15_338] : memref<4x36xf32, #tpu.memory_space<vmem>>, vector<4x1xf32>
    %601 = vector.broadcast %600 : vector<4x1xf32> to vector<4x256xf32>
    %602 = vector.broadcast %599 : vector<1x256xf32> to vector<4x256xf32>
    %603 = arith.mulf %601, %602 : vector<4x256xf32>
    %604 = arith.addf %597, %603 : vector<4x256xf32>
    %c4_339 = arith.constant 4 : index
    %c17_340 = arith.constant 17 : index
    %605 = vector.load %arg8[%c4_339, %c17_340] : memref<8x290xf32, #tpu.memory_space<vmem>>, vector<1x256xf32>
    %c0_341 = arith.constant 0 : index
    %c16_342 = arith.constant 16 : index
    %606 = vector.load %arg2[%c0_341, %c16_342] : memref<4x36xf32, #tpu.memory_space<vmem>>, vector<4x1xf32>
    %607 = vector.broadcast %606 : vector<4x1xf32> to vector<4x256xf32>
    %608 = vector.broadcast %605 : vector<1x256xf32> to vector<4x256xf32>
    %609 = arith.mulf %607, %608 : vector<4x256xf32>
    %610 = arith.addf %604, %609 : vector<4x256xf32>
    %c5_343 = arith.constant 5 : index
    %c17_344 = arith.constant 17 : index
    %611 = vector.load %arg8[%c5_343, %c17_344] : memref<8x290xf32, #tpu.memory_space<vmem>>, vector<1x256xf32>
    %c0_345 = arith.constant 0 : index
    %c17_346 = arith.constant 17 : index
    %612 = vector.load %arg2[%c0_345, %c17_346] : memref<4x36xf32, #tpu.memory_space<vmem>>, vector<4x1xf32>
    %613 = vector.broadcast %612 : vector<4x1xf32> to vector<4x256xf32>
    %614 = vector.broadcast %611 : vector<1x256xf32> to vector<4x256xf32>
    %615 = arith.mulf %613, %614 : vector<4x256xf32>
    %616 = arith.addf %610, %615 : vector<4x256xf32>
    %c6_347 = arith.constant 6 : index
    %c17_348 = arith.constant 17 : index
    %617 = vector.load %arg8[%c6_347, %c17_348] : memref<8x290xf32, #tpu.memory_space<vmem>>, vector<1x256xf32>
    %c0_349 = arith.constant 0 : index
    %c18_350 = arith.constant 18 : index
    %618 = vector.load %arg2[%c0_349, %c18_350] : memref<4x36xf32, #tpu.memory_space<vmem>>, vector<4x1xf32>
    %619 = vector.broadcast %618 : vector<4x1xf32> to vector<4x256xf32>
    %620 = vector.broadcast %617 : vector<1x256xf32> to vector<4x256xf32>
    %621 = arith.mulf %619, %620 : vector<4x256xf32>
    %622 = arith.addf %616, %621 : vector<4x256xf32>
    %c7_351 = arith.constant 7 : index
    %c17_352 = arith.constant 17 : index
    %623 = vector.load %arg8[%c7_351, %c17_352] : memref<8x290xf32, #tpu.memory_space<vmem>>, vector<1x256xf32>
    %c0_353 = arith.constant 0 : index
    %c19_354 = arith.constant 19 : index
    %624 = vector.load %arg2[%c0_353, %c19_354] : memref<4x36xf32, #tpu.memory_space<vmem>>, vector<4x1xf32>
    %625 = vector.broadcast %624 : vector<4x1xf32> to vector<4x256xf32>
    %626 = vector.broadcast %623 : vector<1x256xf32> to vector<4x256xf32>
    %627 = arith.mulf %625, %626 : vector<4x256xf32>
    %628 = arith.addf %622, %627 : vector<4x256xf32>
    %c4_355 = arith.constant 4 : index
    %c18_356 = arith.constant 18 : index
    %629 = vector.load %arg8[%c4_355, %c18_356] : memref<8x290xf32, #tpu.memory_space<vmem>>, vector<1x256xf32>
    %630 = arith.mulf %629, %1 : vector<1x256xf32>
    %c0_357 = arith.constant 0 : index
    %c20_358 = arith.constant 20 : index
    %631 = vector.load %arg2[%c0_357, %c20_358] : memref<4x36xf32, #tpu.memory_space<vmem>>, vector<4x1xf32>
    %632 = vector.broadcast %631 : vector<4x1xf32> to vector<4x256xf32>
    %633 = vector.broadcast %630 : vector<1x256xf32> to vector<4x256xf32>
    %634 = arith.mulf %632, %633 : vector<4x256xf32>
    %635 = arith.addf %628, %634 : vector<4x256xf32>
    %c5_359 = arith.constant 5 : index
    %c18_360 = arith.constant 18 : index
    %636 = vector.load %arg8[%c5_359, %c18_360] : memref<8x290xf32, #tpu.memory_space<vmem>>, vector<1x256xf32>
    %637 = arith.mulf %636, %1 : vector<1x256xf32>
    %c0_361 = arith.constant 0 : index
    %c21_362 = arith.constant 21 : index
    %638 = vector.load %arg2[%c0_361, %c21_362] : memref<4x36xf32, #tpu.memory_space<vmem>>, vector<4x1xf32>
    %639 = vector.broadcast %638 : vector<4x1xf32> to vector<4x256xf32>
    %640 = vector.broadcast %637 : vector<1x256xf32> to vector<4x256xf32>
    %641 = arith.mulf %639, %640 : vector<4x256xf32>
    %642 = arith.addf %635, %641 : vector<4x256xf32>
    %c6_363 = arith.constant 6 : index
    %c18_364 = arith.constant 18 : index
    %643 = vector.load %arg8[%c6_363, %c18_364] : memref<8x290xf32, #tpu.memory_space<vmem>>, vector<1x256xf32>
    %644 = arith.mulf %643, %1 : vector<1x256xf32>
    %c0_365 = arith.constant 0 : index
    %c22_366 = arith.constant 22 : index
    %645 = vector.load %arg2[%c0_365, %c22_366] : memref<4x36xf32, #tpu.memory_space<vmem>>, vector<4x1xf32>
    %646 = vector.broadcast %645 : vector<4x1xf32> to vector<4x256xf32>
    %647 = vector.broadcast %644 : vector<1x256xf32> to vector<4x256xf32>
    %648 = arith.mulf %646, %647 : vector<4x256xf32>
    %649 = arith.addf %642, %648 : vector<4x256xf32>
    %c7_367 = arith.constant 7 : index
    %c18_368 = arith.constant 18 : index
    %650 = vector.load %arg8[%c7_367, %c18_368] : memref<8x290xf32, #tpu.memory_space<vmem>>, vector<1x256xf32>
    %651 = arith.mulf %650, %1 : vector<1x256xf32>
    %c0_369 = arith.constant 0 : index
    %c23_370 = arith.constant 23 : index
    %652 = vector.load %arg2[%c0_369, %c23_370] : memref<4x36xf32, #tpu.memory_space<vmem>>, vector<4x1xf32>
    %653 = vector.broadcast %652 : vector<4x1xf32> to vector<4x256xf32>
    %654 = vector.broadcast %651 : vector<1x256xf32> to vector<4x256xf32>
    %655 = arith.mulf %653, %654 : vector<4x256xf32>
    %656 = arith.addf %649, %655 : vector<4x256xf32>
    %c4_371 = arith.constant 4 : index
    %c32_372 = arith.constant 32 : index
    %657 = vector.load %arg8[%c4_371, %c32_372] : memref<8x290xf32, #tpu.memory_space<vmem>>, vector<1x256xf32>
    %658 = arith.mulf %657, %0 : vector<1x256xf32>
    %c0_373 = arith.constant 0 : index
    %c24_374 = arith.constant 24 : index
    %659 = vector.load %arg2[%c0_373, %c24_374] : memref<4x36xf32, #tpu.memory_space<vmem>>, vector<4x1xf32>
    %660 = vector.broadcast %659 : vector<4x1xf32> to vector<4x256xf32>
    %661 = vector.broadcast %658 : vector<1x256xf32> to vector<4x256xf32>
    %662 = arith.mulf %660, %661 : vector<4x256xf32>
    %c5_375 = arith.constant 5 : index
    %c32_376 = arith.constant 32 : index
    %663 = vector.load %arg8[%c5_375, %c32_376] : memref<8x290xf32, #tpu.memory_space<vmem>>, vector<1x256xf32>
    %664 = arith.mulf %663, %0 : vector<1x256xf32>
    %c0_377 = arith.constant 0 : index
    %c25_378 = arith.constant 25 : index
    %665 = vector.load %arg2[%c0_377, %c25_378] : memref<4x36xf32, #tpu.memory_space<vmem>>, vector<4x1xf32>
    %666 = vector.broadcast %665 : vector<4x1xf32> to vector<4x256xf32>
    %667 = vector.broadcast %664 : vector<1x256xf32> to vector<4x256xf32>
    %668 = arith.mulf %666, %667 : vector<4x256xf32>
    %669 = arith.addf %662, %668 : vector<4x256xf32>
    %c6_379 = arith.constant 6 : index
    %c32_380 = arith.constant 32 : index
    %670 = vector.load %arg8[%c6_379, %c32_380] : memref<8x290xf32, #tpu.memory_space<vmem>>, vector<1x256xf32>
    %671 = arith.mulf %670, %0 : vector<1x256xf32>
    %c0_381 = arith.constant 0 : index
    %c26_382 = arith.constant 26 : index
    %672 = vector.load %arg2[%c0_381, %c26_382] : memref<4x36xf32, #tpu.memory_space<vmem>>, vector<4x1xf32>
    %673 = vector.broadcast %672 : vector<4x1xf32> to vector<4x256xf32>
    %674 = vector.broadcast %671 : vector<1x256xf32> to vector<4x256xf32>
    %675 = arith.mulf %673, %674 : vector<4x256xf32>
    %676 = arith.addf %669, %675 : vector<4x256xf32>
    %c7_383 = arith.constant 7 : index
    %c32_384 = arith.constant 32 : index
    %677 = vector.load %arg8[%c7_383, %c32_384] : memref<8x290xf32, #tpu.memory_space<vmem>>, vector<1x256xf32>
    %678 = arith.mulf %677, %0 : vector<1x256xf32>
    %c0_385 = arith.constant 0 : index
    %c27_386 = arith.constant 27 : index
    %679 = vector.load %arg2[%c0_385, %c27_386] : memref<4x36xf32, #tpu.memory_space<vmem>>, vector<4x1xf32>
    %680 = vector.broadcast %679 : vector<4x1xf32> to vector<4x256xf32>
    %681 = vector.broadcast %678 : vector<1x256xf32> to vector<4x256xf32>
    %682 = arith.mulf %680, %681 : vector<4x256xf32>
    %683 = arith.addf %676, %682 : vector<4x256xf32>
    %c4_387 = arith.constant 4 : index
    %c33_388 = arith.constant 33 : index
    %684 = vector.load %arg8[%c4_387, %c33_388] : memref<8x290xf32, #tpu.memory_space<vmem>>, vector<1x256xf32>
    %c0_389 = arith.constant 0 : index
    %c28_390 = arith.constant 28 : index
    %685 = vector.load %arg2[%c0_389, %c28_390] : memref<4x36xf32, #tpu.memory_space<vmem>>, vector<4x1xf32>
    %686 = vector.broadcast %685 : vector<4x1xf32> to vector<4x256xf32>
    %687 = vector.broadcast %684 : vector<1x256xf32> to vector<4x256xf32>
    %688 = arith.mulf %686, %687 : vector<4x256xf32>
    %689 = arith.addf %683, %688 : vector<4x256xf32>
    %c5_391 = arith.constant 5 : index
    %c33_392 = arith.constant 33 : index
    %690 = vector.load %arg8[%c5_391, %c33_392] : memref<8x290xf32, #tpu.memory_space<vmem>>, vector<1x256xf32>
    %c0_393 = arith.constant 0 : index
    %c29_394 = arith.constant 29 : index
    %691 = vector.load %arg2[%c0_393, %c29_394] : memref<4x36xf32, #tpu.memory_space<vmem>>, vector<4x1xf32>
    %692 = vector.broadcast %691 : vector<4x1xf32> to vector<4x256xf32>
    %693 = vector.broadcast %690 : vector<1x256xf32> to vector<4x256xf32>
    %694 = arith.mulf %692, %693 : vector<4x256xf32>
    %695 = arith.addf %689, %694 : vector<4x256xf32>
    %c6_395 = arith.constant 6 : index
    %c33_396 = arith.constant 33 : index
    %696 = vector.load %arg8[%c6_395, %c33_396] : memref<8x290xf32, #tpu.memory_space<vmem>>, vector<1x256xf32>
    %c0_397 = arith.constant 0 : index
    %c30_398 = arith.constant 30 : index
    %697 = vector.load %arg2[%c0_397, %c30_398] : memref<4x36xf32, #tpu.memory_space<vmem>>, vector<4x1xf32>
    %698 = vector.broadcast %697 : vector<4x1xf32> to vector<4x256xf32>
    %699 = vector.broadcast %696 : vector<1x256xf32> to vector<4x256xf32>
    %700 = arith.mulf %698, %699 : vector<4x256xf32>
    %701 = arith.addf %695, %700 : vector<4x256xf32>
    %c7_399 = arith.constant 7 : index
    %c33_400 = arith.constant 33 : index
    %702 = vector.load %arg8[%c7_399, %c33_400] : memref<8x290xf32, #tpu.memory_space<vmem>>, vector<1x256xf32>
    %c0_401 = arith.constant 0 : index
    %c31_402 = arith.constant 31 : index
    %703 = vector.load %arg2[%c0_401, %c31_402] : memref<4x36xf32, #tpu.memory_space<vmem>>, vector<4x1xf32>
    %704 = vector.broadcast %703 : vector<4x1xf32> to vector<4x256xf32>
    %705 = vector.broadcast %702 : vector<1x256xf32> to vector<4x256xf32>
    %706 = arith.mulf %704, %705 : vector<4x256xf32>
    %707 = arith.addf %701, %706 : vector<4x256xf32>
    %c4_403 = arith.constant 4 : index
    %c34_404 = arith.constant 34 : index
    %708 = vector.load %arg8[%c4_403, %c34_404] : memref<8x290xf32, #tpu.memory_space<vmem>>, vector<1x256xf32>
    %709 = arith.mulf %708, %1 : vector<1x256xf32>
    %c0_405 = arith.constant 0 : index
    %c32_406 = arith.constant 32 : index
    %710 = vector.load %arg2[%c0_405, %c32_406] : memref<4x36xf32, #tpu.memory_space<vmem>>, vector<4x1xf32>
    %711 = vector.broadcast %710 : vector<4x1xf32> to vector<4x256xf32>
    %712 = vector.broadcast %709 : vector<1x256xf32> to vector<4x256xf32>
    %713 = arith.mulf %711, %712 : vector<4x256xf32>
    %714 = arith.addf %707, %713 : vector<4x256xf32>
    %c5_407 = arith.constant 5 : index
    %c34_408 = arith.constant 34 : index
    %715 = vector.load %arg8[%c5_407, %c34_408] : memref<8x290xf32, #tpu.memory_space<vmem>>, vector<1x256xf32>
    %716 = arith.mulf %715, %1 : vector<1x256xf32>
    %c0_409 = arith.constant 0 : index
    %c33_410 = arith.constant 33 : index
    %717 = vector.load %arg2[%c0_409, %c33_410] : memref<4x36xf32, #tpu.memory_space<vmem>>, vector<4x1xf32>
    %718 = vector.broadcast %717 : vector<4x1xf32> to vector<4x256xf32>
    %719 = vector.broadcast %716 : vector<1x256xf32> to vector<4x256xf32>
    %720 = arith.mulf %718, %719 : vector<4x256xf32>
    %721 = arith.addf %714, %720 : vector<4x256xf32>
    %c6_411 = arith.constant 6 : index
    %c34_412 = arith.constant 34 : index
    %722 = vector.load %arg8[%c6_411, %c34_412] : memref<8x290xf32, #tpu.memory_space<vmem>>, vector<1x256xf32>
    %723 = arith.mulf %722, %1 : vector<1x256xf32>
    %c0_413 = arith.constant 0 : index
    %c34_414 = arith.constant 34 : index
    %724 = vector.load %arg2[%c0_413, %c34_414] : memref<4x36xf32, #tpu.memory_space<vmem>>, vector<4x1xf32>
    %725 = vector.broadcast %724 : vector<4x1xf32> to vector<4x256xf32>
    %726 = vector.broadcast %723 : vector<1x256xf32> to vector<4x256xf32>
    %727 = arith.mulf %725, %726 : vector<4x256xf32>
    %728 = arith.addf %721, %727 : vector<4x256xf32>
    %c7_415 = arith.constant 7 : index
    %c34_416 = arith.constant 34 : index
    %729 = vector.load %arg8[%c7_415, %c34_416] : memref<8x290xf32, #tpu.memory_space<vmem>>, vector<1x256xf32>
    %730 = arith.mulf %729, %1 : vector<1x256xf32>
    %c0_417 = arith.constant 0 : index
    %c35_418 = arith.constant 35 : index
    %731 = vector.load %arg2[%c0_417, %c35_418] : memref<4x36xf32, #tpu.memory_space<vmem>>, vector<4x1xf32>
    %732 = vector.broadcast %731 : vector<4x1xf32> to vector<4x256xf32>
    %733 = vector.broadcast %730 : vector<1x256xf32> to vector<4x256xf32>
    %734 = arith.mulf %732, %733 : vector<4x256xf32>
    %735 = arith.addf %728, %734 : vector<4x256xf32>
    %736 = arith.addf %577, %656 : vector<4x256xf32>
    %737 = arith.addf %736, %735 : vector<4x256xf32>
    %c0_419 = arith.constant 0 : index
    %c0_420 = arith.constant 0 : index
    %738 = vector.load %arg3[%c0_419, %c0_420] : memref<4x1xf32, #tpu.memory_space<vmem>>, vector<4x1xf32>
    %739 = vector.broadcast %738 : vector<4x1xf32> to vector<4x256xf32>
    %740 = arith.addf %737, %739 : vector<4x256xf32>
    %cst_421 = arith.constant 0.000000e+00 : f32
    %741 = vector.broadcast %cst_421 : f32 to vector<4x256xf32>
    %742 = arith.maximumf %740, %741 : vector<4x256xf32>
    %c4_422 = arith.constant 4 : index
    %c17_423 = arith.constant 17 : index
    %743 = vector.load %arg8[%c4_422, %c17_423] : memref<8x290xf32, #tpu.memory_space<vmem>>, vector<4x256xf32>
    tpu.vector_store %arg8[%c4_422, %c17_423], %742 {strides = array<i32>} : memref<8x290xf32, #tpu.memory_space<vmem>>, vector<4x256xf32>,
    %c4_424 = arith.constant 4 : index
    %c0_425 = arith.constant 0 : index
    %744 = vector.load %arg8[%c4_424, %c0_425] : memref<8x290xf32, #tpu.memory_space<vmem>>, vector<1x256xf32>
    %745 = arith.mulf %744, %0 : vector<1x256xf32>
    %c0_426 = arith.constant 0 : index
    %c0_427 = arith.constant 0 : index
    %746 = vector.load %arg4[%c0_426, %c0_427] : memref<4x36xf32, #tpu.memory_space<vmem>>, vector<4x1xf32>
    %747 = vector.broadcast %746 : vector<4x1xf32> to vector<4x256xf32>
    %748 = vector.broadcast %745 : vector<1x256xf32> to vector<4x256xf32>
    %749 = arith.mulf %747, %748 : vector<4x256xf32>
    %c5_428 = arith.constant 5 : index
    %c0_429 = arith.constant 0 : index
    %750 = vector.load %arg8[%c5_428, %c0_429] : memref<8x290xf32, #tpu.memory_space<vmem>>, vector<1x256xf32>
    %751 = arith.mulf %750, %0 : vector<1x256xf32>
    %c0_430 = arith.constant 0 : index
    %c1_431 = arith.constant 1 : index
    %752 = vector.load %arg4[%c0_430, %c1_431] : memref<4x36xf32, #tpu.memory_space<vmem>>, vector<4x1xf32>
    %753 = vector.broadcast %752 : vector<4x1xf32> to vector<4x256xf32>
    %754 = vector.broadcast %751 : vector<1x256xf32> to vector<4x256xf32>
    %755 = arith.mulf %753, %754 : vector<4x256xf32>
    %756 = arith.addf %749, %755 : vector<4x256xf32>
    %c6_432 = arith.constant 6 : index
    %c0_433 = arith.constant 0 : index
    %757 = vector.load %arg8[%c6_432, %c0_433] : memref<8x290xf32, #tpu.memory_space<vmem>>, vector<1x256xf32>
    %758 = arith.mulf %757, %0 : vector<1x256xf32>
    %c0_434 = arith.constant 0 : index
    %c2_435 = arith.constant 2 : index
    %759 = vector.load %arg4[%c0_434, %c2_435] : memref<4x36xf32, #tpu.memory_space<vmem>>, vector<4x1xf32>
    %760 = vector.broadcast %759 : vector<4x1xf32> to vector<4x256xf32>
    %761 = vector.broadcast %758 : vector<1x256xf32> to vector<4x256xf32>
    %762 = arith.mulf %760, %761 : vector<4x256xf32>
    %763 = arith.addf %756, %762 : vector<4x256xf32>
    %c7_436 = arith.constant 7 : index
    %c0_437 = arith.constant 0 : index
    %764 = vector.load %arg8[%c7_436, %c0_437] : memref<8x290xf32, #tpu.memory_space<vmem>>, vector<1x256xf32>
    %765 = arith.mulf %764, %0 : vector<1x256xf32>
    %c0_438 = arith.constant 0 : index
    %c3_439 = arith.constant 3 : index
    %766 = vector.load %arg4[%c0_438, %c3_439] : memref<4x36xf32, #tpu.memory_space<vmem>>, vector<4x1xf32>
    %767 = vector.broadcast %766 : vector<4x1xf32> to vector<4x256xf32>
    %768 = vector.broadcast %765 : vector<1x256xf32> to vector<4x256xf32>
    %769 = arith.mulf %767, %768 : vector<4x256xf32>
    %770 = arith.addf %763, %769 : vector<4x256xf32>
    %c4_440 = arith.constant 4 : index
    %c1_441 = arith.constant 1 : index
    %771 = vector.load %arg8[%c4_440, %c1_441] : memref<8x290xf32, #tpu.memory_space<vmem>>, vector<1x256xf32>
    %c0_442 = arith.constant 0 : index
    %c4_443 = arith.constant 4 : index
    %772 = vector.load %arg4[%c0_442, %c4_443] : memref<4x36xf32, #tpu.memory_space<vmem>>, vector<4x1xf32>
    %773 = vector.broadcast %772 : vector<4x1xf32> to vector<4x256xf32>
    %774 = vector.broadcast %771 : vector<1x256xf32> to vector<4x256xf32>
    %775 = arith.mulf %773, %774 : vector<4x256xf32>
    %776 = arith.addf %770, %775 : vector<4x256xf32>
    %c5_444 = arith.constant 5 : index
    %c1_445 = arith.constant 1 : index
    %777 = vector.load %arg8[%c5_444, %c1_445] : memref<8x290xf32, #tpu.memory_space<vmem>>, vector<1x256xf32>
    %c0_446 = arith.constant 0 : index
    %c5_447 = arith.constant 5 : index
    %778 = vector.load %arg4[%c0_446, %c5_447] : memref<4x36xf32, #tpu.memory_space<vmem>>, vector<4x1xf32>
    %779 = vector.broadcast %778 : vector<4x1xf32> to vector<4x256xf32>
    %780 = vector.broadcast %777 : vector<1x256xf32> to vector<4x256xf32>
    %781 = arith.mulf %779, %780 : vector<4x256xf32>
    %782 = arith.addf %776, %781 : vector<4x256xf32>
    %c6_448 = arith.constant 6 : index
    %c1_449 = arith.constant 1 : index
    %783 = vector.load %arg8[%c6_448, %c1_449] : memref<8x290xf32, #tpu.memory_space<vmem>>, vector<1x256xf32>
    %c0_450 = arith.constant 0 : index
    %c6_451 = arith.constant 6 : index
    %784 = vector.load %arg4[%c0_450, %c6_451] : memref<4x36xf32, #tpu.memory_space<vmem>>, vector<4x1xf32>
    %785 = vector.broadcast %784 : vector<4x1xf32> to vector<4x256xf32>
    %786 = vector.broadcast %783 : vector<1x256xf32> to vector<4x256xf32>
    %787 = arith.mulf %785, %786 : vector<4x256xf32>
    %788 = arith.addf %782, %787 : vector<4x256xf32>
    %c7_452 = arith.constant 7 : index
    %c1_453 = arith.constant 1 : index
    %789 = vector.load %arg8[%c7_452, %c1_453] : memref<8x290xf32, #tpu.memory_space<vmem>>, vector<1x256xf32>
    %c0_454 = arith.constant 0 : index
    %c7_455 = arith.constant 7 : index
    %790 = vector.load %arg4[%c0_454, %c7_455] : memref<4x36xf32, #tpu.memory_space<vmem>>, vector<4x1xf32>
    %791 = vector.broadcast %790 : vector<4x1xf32> to vector<4x256xf32>
    %792 = vector.broadcast %789 : vector<1x256xf32> to vector<4x256xf32>
    %793 = arith.mulf %791, %792 : vector<4x256xf32>
    %794 = arith.addf %788, %793 : vector<4x256xf32>
    %c4_456 = arith.constant 4 : index
    %c2_457 = arith.constant 2 : index
    %795 = vector.load %arg8[%c4_456, %c2_457] : memref<8x290xf32, #tpu.memory_space<vmem>>, vector<1x256xf32>
    %796 = arith.mulf %795, %1 : vector<1x256xf32>
    %c0_458 = arith.constant 0 : index
    %c8_459 = arith.constant 8 : index
    %797 = vector.load %arg4[%c0_458, %c8_459] : memref<4x36xf32, #tpu.memory_space<vmem>>, vector<4x1xf32>
    %798 = vector.broadcast %797 : vector<4x1xf32> to vector<4x256xf32>
    %799 = vector.broadcast %796 : vector<1x256xf32> to vector<4x256xf32>
    %800 = arith.mulf %798, %799 : vector<4x256xf32>
    %801 = arith.addf %794, %800 : vector<4x256xf32>
    %c5_460 = arith.constant 5 : index
    %c2_461 = arith.constant 2 : index
    %802 = vector.load %arg8[%c5_460, %c2_461] : memref<8x290xf32, #tpu.memory_space<vmem>>, vector<1x256xf32>
    %803 = arith.mulf %802, %1 : vector<1x256xf32>
    %c0_462 = arith.constant 0 : index
    %c9_463 = arith.constant 9 : index
    %804 = vector.load %arg4[%c0_462, %c9_463] : memref<4x36xf32, #tpu.memory_space<vmem>>, vector<4x1xf32>
    %805 = vector.broadcast %804 : vector<4x1xf32> to vector<4x256xf32>
    %806 = vector.broadcast %803 : vector<1x256xf32> to vector<4x256xf32>
    %807 = arith.mulf %805, %806 : vector<4x256xf32>
    %808 = arith.addf %801, %807 : vector<4x256xf32>
    %c6_464 = arith.constant 6 : index
    %c2_465 = arith.constant 2 : index
    %809 = vector.load %arg8[%c6_464, %c2_465] : memref<8x290xf32, #tpu.memory_space<vmem>>, vector<1x256xf32>
    %810 = arith.mulf %809, %1 : vector<1x256xf32>
    %c0_466 = arith.constant 0 : index
    %c10_467 = arith.constant 10 : index
    %811 = vector.load %arg4[%c0_466, %c10_467] : memref<4x36xf32, #tpu.memory_space<vmem>>, vector<4x1xf32>
    %812 = vector.broadcast %811 : vector<4x1xf32> to vector<4x256xf32>
    %813 = vector.broadcast %810 : vector<1x256xf32> to vector<4x256xf32>
    %814 = arith.mulf %812, %813 : vector<4x256xf32>
    %815 = arith.addf %808, %814 : vector<4x256xf32>
    %c7_468 = arith.constant 7 : index
    %c2_469 = arith.constant 2 : index
    %816 = vector.load %arg8[%c7_468, %c2_469] : memref<8x290xf32, #tpu.memory_space<vmem>>, vector<1x256xf32>
    %817 = arith.mulf %816, %1 : vector<1x256xf32>
    %c0_470 = arith.constant 0 : index
    %c11_471 = arith.constant 11 : index
    %818 = vector.load %arg4[%c0_470, %c11_471] : memref<4x36xf32, #tpu.memory_space<vmem>>, vector<4x1xf32>
    %819 = vector.broadcast %818 : vector<4x1xf32> to vector<4x256xf32>
    %820 = vector.broadcast %817 : vector<1x256xf32> to vector<4x256xf32>
    %821 = arith.mulf %819, %820 : vector<4x256xf32>
    %822 = arith.addf %815, %821 : vector<4x256xf32>
    %c4_472 = arith.constant 4 : index
    %c16_473 = arith.constant 16 : index
    %823 = vector.load %arg8[%c4_472, %c16_473] : memref<8x290xf32, #tpu.memory_space<vmem>>, vector<1x256xf32>
    %824 = arith.mulf %823, %0 : vector<1x256xf32>
    %c0_474 = arith.constant 0 : index
    %c12_475 = arith.constant 12 : index
    %825 = vector.load %arg4[%c0_474, %c12_475] : memref<4x36xf32, #tpu.memory_space<vmem>>, vector<4x1xf32>
    %826 = vector.broadcast %825 : vector<4x1xf32> to vector<4x256xf32>
    %827 = vector.broadcast %824 : vector<1x256xf32> to vector<4x256xf32>
    %828 = arith.mulf %826, %827 : vector<4x256xf32>
    %c5_476 = arith.constant 5 : index
    %c16_477 = arith.constant 16 : index
    %829 = vector.load %arg8[%c5_476, %c16_477] : memref<8x290xf32, #tpu.memory_space<vmem>>, vector<1x256xf32>
    %830 = arith.mulf %829, %0 : vector<1x256xf32>
    %c0_478 = arith.constant 0 : index
    %c13_479 = arith.constant 13 : index
    %831 = vector.load %arg4[%c0_478, %c13_479] : memref<4x36xf32, #tpu.memory_space<vmem>>, vector<4x1xf32>
    %832 = vector.broadcast %831 : vector<4x1xf32> to vector<4x256xf32>
    %833 = vector.broadcast %830 : vector<1x256xf32> to vector<4x256xf32>
    %834 = arith.mulf %832, %833 : vector<4x256xf32>
    %835 = arith.addf %828, %834 : vector<4x256xf32>
    %c6_480 = arith.constant 6 : index
    %c16_481 = arith.constant 16 : index
    %836 = vector.load %arg8[%c6_480, %c16_481] : memref<8x290xf32, #tpu.memory_space<vmem>>, vector<1x256xf32>
    %837 = arith.mulf %836, %0 : vector<1x256xf32>
    %c0_482 = arith.constant 0 : index
    %c14_483 = arith.constant 14 : index
    %838 = vector.load %arg4[%c0_482, %c14_483] : memref<4x36xf32, #tpu.memory_space<vmem>>, vector<4x1xf32>
    %839 = vector.broadcast %838 : vector<4x1xf32> to vector<4x256xf32>
    %840 = vector.broadcast %837 : vector<1x256xf32> to vector<4x256xf32>
    %841 = arith.mulf %839, %840 : vector<4x256xf32>
    %842 = arith.addf %835, %841 : vector<4x256xf32>
    %c7_484 = arith.constant 7 : index
    %c16_485 = arith.constant 16 : index
    %843 = vector.load %arg8[%c7_484, %c16_485] : memref<8x290xf32, #tpu.memory_space<vmem>>, vector<1x256xf32>
    %844 = arith.mulf %843, %0 : vector<1x256xf32>
    %c0_486 = arith.constant 0 : index
    %c15_487 = arith.constant 15 : index
    %845 = vector.load %arg4[%c0_486, %c15_487] : memref<4x36xf32, #tpu.memory_space<vmem>>, vector<4x1xf32>
    %846 = vector.broadcast %845 : vector<4x1xf32> to vector<4x256xf32>
    %847 = vector.broadcast %844 : vector<1x256xf32> to vector<4x256xf32>
    %848 = arith.mulf %846, %847 : vector<4x256xf32>
    %849 = arith.addf %842, %848 : vector<4x256xf32>
    %c4_488 = arith.constant 4 : index
    %c17_489 = arith.constant 17 : index
    %850 = vector.load %arg8[%c4_488, %c17_489] : memref<8x290xf32, #tpu.memory_space<vmem>>, vector<1x256xf32>
    %c0_490 = arith.constant 0 : index
    %c16_491 = arith.constant 16 : index
    %851 = vector.load %arg4[%c0_490, %c16_491] : memref<4x36xf32, #tpu.memory_space<vmem>>, vector<4x1xf32>
    %852 = vector.broadcast %851 : vector<4x1xf32> to vector<4x256xf32>
    %853 = vector.broadcast %850 : vector<1x256xf32> to vector<4x256xf32>
    %854 = arith.mulf %852, %853 : vector<4x256xf32>
    %855 = arith.addf %849, %854 : vector<4x256xf32>
    %c5_492 = arith.constant 5 : index
    %c17_493 = arith.constant 17 : index
    %856 = vector.load %arg8[%c5_492, %c17_493] : memref<8x290xf32, #tpu.memory_space<vmem>>, vector<1x256xf32>
    %c0_494 = arith.constant 0 : index
    %c17_495 = arith.constant 17 : index
    %857 = vector.load %arg4[%c0_494, %c17_495] : memref<4x36xf32, #tpu.memory_space<vmem>>, vector<4x1xf32>
    %858 = vector.broadcast %857 : vector<4x1xf32> to vector<4x256xf32>
    %859 = vector.broadcast %856 : vector<1x256xf32> to vector<4x256xf32>
    %860 = arith.mulf %858, %859 : vector<4x256xf32>
    %861 = arith.addf %855, %860 : vector<4x256xf32>
    %c6_496 = arith.constant 6 : index
    %c17_497 = arith.constant 17 : index
    %862 = vector.load %arg8[%c6_496, %c17_497] : memref<8x290xf32, #tpu.memory_space<vmem>>, vector<1x256xf32>
    %c0_498 = arith.constant 0 : index
    %c18_499 = arith.constant 18 : index
    %863 = vector.load %arg4[%c0_498, %c18_499] : memref<4x36xf32, #tpu.memory_space<vmem>>, vector<4x1xf32>
    %864 = vector.broadcast %863 : vector<4x1xf32> to vector<4x256xf32>
    %865 = vector.broadcast %862 : vector<1x256xf32> to vector<4x256xf32>
    %866 = arith.mulf %864, %865 : vector<4x256xf32>
    %867 = arith.addf %861, %866 : vector<4x256xf32>
    %c7_500 = arith.constant 7 : index
    %c17_501 = arith.constant 17 : index
    %868 = vector.load %arg8[%c7_500, %c17_501] : memref<8x290xf32, #tpu.memory_space<vmem>>, vector<1x256xf32>
    %c0_502 = arith.constant 0 : index
    %c19_503 = arith.constant 19 : index
    %869 = vector.load %arg4[%c0_502, %c19_503] : memref<4x36xf32, #tpu.memory_space<vmem>>, vector<4x1xf32>
    %870 = vector.broadcast %869 : vector<4x1xf32> to vector<4x256xf32>
    %871 = vector.broadcast %868 : vector<1x256xf32> to vector<4x256xf32>
    %872 = arith.mulf %870, %871 : vector<4x256xf32>
    %873 = arith.addf %867, %872 : vector<4x256xf32>
    %c4_504 = arith.constant 4 : index
    %c18_505 = arith.constant 18 : index
    %874 = vector.load %arg8[%c4_504, %c18_505] : memref<8x290xf32, #tpu.memory_space<vmem>>, vector<1x256xf32>
    %875 = arith.mulf %874, %1 : vector<1x256xf32>
    %c0_506 = arith.constant 0 : index
    %c20_507 = arith.constant 20 : index
    %876 = vector.load %arg4[%c0_506, %c20_507] : memref<4x36xf32, #tpu.memory_space<vmem>>, vector<4x1xf32>
    %877 = vector.broadcast %876 : vector<4x1xf32> to vector<4x256xf32>
    %878 = vector.broadcast %875 : vector<1x256xf32> to vector<4x256xf32>
    %879 = arith.mulf %877, %878 : vector<4x256xf32>
    %880 = arith.addf %873, %879 : vector<4x256xf32>
    %c5_508 = arith.constant 5 : index
    %c18_509 = arith.constant 18 : index
    %881 = vector.load %arg8[%c5_508, %c18_509] : memref<8x290xf32, #tpu.memory_space<vmem>>, vector<1x256xf32>
    %882 = arith.mulf %881, %1 : vector<1x256xf32>
    %c0_510 = arith.constant 0 : index
    %c21_511 = arith.constant 21 : index
    %883 = vector.load %arg4[%c0_510, %c21_511] : memref<4x36xf32, #tpu.memory_space<vmem>>, vector<4x1xf32>
    %884 = vector.broadcast %883 : vector<4x1xf32> to vector<4x256xf32>
    %885 = vector.broadcast %882 : vector<1x256xf32> to vector<4x256xf32>
    %886 = arith.mulf %884, %885 : vector<4x256xf32>
    %887 = arith.addf %880, %886 : vector<4x256xf32>
    %c6_512 = arith.constant 6 : index
    %c18_513 = arith.constant 18 : index
    %888 = vector.load %arg8[%c6_512, %c18_513] : memref<8x290xf32, #tpu.memory_space<vmem>>, vector<1x256xf32>
    %889 = arith.mulf %888, %1 : vector<1x256xf32>
    %c0_514 = arith.constant 0 : index
    %c22_515 = arith.constant 22 : index
    %890 = vector.load %arg4[%c0_514, %c22_515] : memref<4x36xf32, #tpu.memory_space<vmem>>, vector<4x1xf32>
    %891 = vector.broadcast %890 : vector<4x1xf32> to vector<4x256xf32>
    %892 = vector.broadcast %889 : vector<1x256xf32> to vector<4x256xf32>
    %893 = arith.mulf %891, %892 : vector<4x256xf32>
    %894 = arith.addf %887, %893 : vector<4x256xf32>
    %c7_516 = arith.constant 7 : index
    %c18_517 = arith.constant 18 : index
    %895 = vector.load %arg8[%c7_516, %c18_517] : memref<8x290xf32, #tpu.memory_space<vmem>>, vector<1x256xf32>
    %896 = arith.mulf %895, %1 : vector<1x256xf32>
    %c0_518 = arith.constant 0 : index
    %c23_519 = arith.constant 23 : index
    %897 = vector.load %arg4[%c0_518, %c23_519] : memref<4x36xf32, #tpu.memory_space<vmem>>, vector<4x1xf32>
    %898 = vector.broadcast %897 : vector<4x1xf32> to vector<4x256xf32>
    %899 = vector.broadcast %896 : vector<1x256xf32> to vector<4x256xf32>
    %900 = arith.mulf %898, %899 : vector<4x256xf32>
    %901 = arith.addf %894, %900 : vector<4x256xf32>
    %c4_520 = arith.constant 4 : index
    %c32_521 = arith.constant 32 : index
    %902 = vector.load %arg8[%c4_520, %c32_521] : memref<8x290xf32, #tpu.memory_space<vmem>>, vector<1x256xf32>
    %903 = arith.mulf %902, %0 : vector<1x256xf32>
    %c0_522 = arith.constant 0 : index
    %c24_523 = arith.constant 24 : index
    %904 = vector.load %arg4[%c0_522, %c24_523] : memref<4x36xf32, #tpu.memory_space<vmem>>, vector<4x1xf32>
    %905 = vector.broadcast %904 : vector<4x1xf32> to vector<4x256xf32>
    %906 = vector.broadcast %903 : vector<1x256xf32> to vector<4x256xf32>
    %907 = arith.mulf %905, %906 : vector<4x256xf32>
    %c5_524 = arith.constant 5 : index
    %c32_525 = arith.constant 32 : index
    %908 = vector.load %arg8[%c5_524, %c32_525] : memref<8x290xf32, #tpu.memory_space<vmem>>, vector<1x256xf32>
    %909 = arith.mulf %908, %0 : vector<1x256xf32>
    %c0_526 = arith.constant 0 : index
    %c25_527 = arith.constant 25 : index
    %910 = vector.load %arg4[%c0_526, %c25_527] : memref<4x36xf32, #tpu.memory_space<vmem>>, vector<4x1xf32>
    %911 = vector.broadcast %910 : vector<4x1xf32> to vector<4x256xf32>
    %912 = vector.broadcast %909 : vector<1x256xf32> to vector<4x256xf32>
    %913 = arith.mulf %911, %912 : vector<4x256xf32>
    %914 = arith.addf %907, %913 : vector<4x256xf32>
    %c6_528 = arith.constant 6 : index
    %c32_529 = arith.constant 32 : index
    %915 = vector.load %arg8[%c6_528, %c32_529] : memref<8x290xf32, #tpu.memory_space<vmem>>, vector<1x256xf32>
    %916 = arith.mulf %915, %0 : vector<1x256xf32>
    %c0_530 = arith.constant 0 : index
    %c26_531 = arith.constant 26 : index
    %917 = vector.load %arg4[%c0_530, %c26_531] : memref<4x36xf32, #tpu.memory_space<vmem>>, vector<4x1xf32>
    %918 = vector.broadcast %917 : vector<4x1xf32> to vector<4x256xf32>
    %919 = vector.broadcast %916 : vector<1x256xf32> to vector<4x256xf32>
    %920 = arith.mulf %918, %919 : vector<4x256xf32>
    %921 = arith.addf %914, %920 : vector<4x256xf32>
    %c7_532 = arith.constant 7 : index
    %c32_533 = arith.constant 32 : index
    %922 = vector.load %arg8[%c7_532, %c32_533] : memref<8x290xf32, #tpu.memory_space<vmem>>, vector<1x256xf32>
    %923 = arith.mulf %922, %0 : vector<1x256xf32>
    %c0_534 = arith.constant 0 : index
    %c27_535 = arith.constant 27 : index
    %924 = vector.load %arg4[%c0_534, %c27_535] : memref<4x36xf32, #tpu.memory_space<vmem>>, vector<4x1xf32>
    %925 = vector.broadcast %924 : vector<4x1xf32> to vector<4x256xf32>
    %926 = vector.broadcast %923 : vector<1x256xf32> to vector<4x256xf32>
    %927 = arith.mulf %925, %926 : vector<4x256xf32>
    %928 = arith.addf %921, %927 : vector<4x256xf32>
    %c4_536 = arith.constant 4 : index
    %c33_537 = arith.constant 33 : index
    %929 = vector.load %arg8[%c4_536, %c33_537] : memref<8x290xf32, #tpu.memory_space<vmem>>, vector<1x256xf32>
    %c0_538 = arith.constant 0 : index
    %c28_539 = arith.constant 28 : index
    %930 = vector.load %arg4[%c0_538, %c28_539] : memref<4x36xf32, #tpu.memory_space<vmem>>, vector<4x1xf32>
    %931 = vector.broadcast %930 : vector<4x1xf32> to vector<4x256xf32>
    %932 = vector.broadcast %929 : vector<1x256xf32> to vector<4x256xf32>
    %933 = arith.mulf %931, %932 : vector<4x256xf32>
    %934 = arith.addf %928, %933 : vector<4x256xf32>
    %c5_540 = arith.constant 5 : index
    %c33_541 = arith.constant 33 : index
    %935 = vector.load %arg8[%c5_540, %c33_541] : memref<8x290xf32, #tpu.memory_space<vmem>>, vector<1x256xf32>
    %c0_542 = arith.constant 0 : index
    %c29_543 = arith.constant 29 : index
    %936 = vector.load %arg4[%c0_542, %c29_543] : memref<4x36xf32, #tpu.memory_space<vmem>>, vector<4x1xf32>
    %937 = vector.broadcast %936 : vector<4x1xf32> to vector<4x256xf32>
    %938 = vector.broadcast %935 : vector<1x256xf32> to vector<4x256xf32>
    %939 = arith.mulf %937, %938 : vector<4x256xf32>
    %940 = arith.addf %934, %939 : vector<4x256xf32>
    %c6_544 = arith.constant 6 : index
    %c33_545 = arith.constant 33 : index
    %941 = vector.load %arg8[%c6_544, %c33_545] : memref<8x290xf32, #tpu.memory_space<vmem>>, vector<1x256xf32>
    %c0_546 = arith.constant 0 : index
    %c30_547 = arith.constant 30 : index
    %942 = vector.load %arg4[%c0_546, %c30_547] : memref<4x36xf32, #tpu.memory_space<vmem>>, vector<4x1xf32>
    %943 = vector.broadcast %942 : vector<4x1xf32> to vector<4x256xf32>
    %944 = vector.broadcast %941 : vector<1x256xf32> to vector<4x256xf32>
    %945 = arith.mulf %943, %944 : vector<4x256xf32>
    %946 = arith.addf %940, %945 : vector<4x256xf32>
    %c7_548 = arith.constant 7 : index
    %c33_549 = arith.constant 33 : index
    %947 = vector.load %arg8[%c7_548, %c33_549] : memref<8x290xf32, #tpu.memory_space<vmem>>, vector<1x256xf32>
    %c0_550 = arith.constant 0 : index
    %c31_551 = arith.constant 31 : index
    %948 = vector.load %arg4[%c0_550, %c31_551] : memref<4x36xf32, #tpu.memory_space<vmem>>, vector<4x1xf32>
    %949 = vector.broadcast %948 : vector<4x1xf32> to vector<4x256xf32>
    %950 = vector.broadcast %947 : vector<1x256xf32> to vector<4x256xf32>
    %951 = arith.mulf %949, %950 : vector<4x256xf32>
    %952 = arith.addf %946, %951 : vector<4x256xf32>
    %c4_552 = arith.constant 4 : index
    %c34_553 = arith.constant 34 : index
    %953 = vector.load %arg8[%c4_552, %c34_553] : memref<8x290xf32, #tpu.memory_space<vmem>>, vector<1x256xf32>
    %954 = arith.mulf %953, %1 : vector<1x256xf32>
    %c0_554 = arith.constant 0 : index
    %c32_555 = arith.constant 32 : index
    %955 = vector.load %arg4[%c0_554, %c32_555] : memref<4x36xf32, #tpu.memory_space<vmem>>, vector<4x1xf32>
    %956 = vector.broadcast %955 : vector<4x1xf32> to vector<4x256xf32>
    %957 = vector.broadcast %954 : vector<1x256xf32> to vector<4x256xf32>
    %958 = arith.mulf %956, %957 : vector<4x256xf32>
    %959 = arith.addf %952, %958 : vector<4x256xf32>
    %c5_556 = arith.constant 5 : index
    %c34_557 = arith.constant 34 : index
    %960 = vector.load %arg8[%c5_556, %c34_557] : memref<8x290xf32, #tpu.memory_space<vmem>>, vector<1x256xf32>
    %961 = arith.mulf %960, %1 : vector<1x256xf32>
    %c0_558 = arith.constant 0 : index
    %c33_559 = arith.constant 33 : index
    %962 = vector.load %arg4[%c0_558, %c33_559] : memref<4x36xf32, #tpu.memory_space<vmem>>, vector<4x1xf32>
    %963 = vector.broadcast %962 : vector<4x1xf32> to vector<4x256xf32>
    %964 = vector.broadcast %961 : vector<1x256xf32> to vector<4x256xf32>
    %965 = arith.mulf %963, %964 : vector<4x256xf32>
    %966 = arith.addf %959, %965 : vector<4x256xf32>
    %c6_560 = arith.constant 6 : index
    %c34_561 = arith.constant 34 : index
    %967 = vector.load %arg8[%c6_560, %c34_561] : memref<8x290xf32, #tpu.memory_space<vmem>>, vector<1x256xf32>
    %968 = arith.mulf %967, %1 : vector<1x256xf32>
    %c0_562 = arith.constant 0 : index
    %c34_563 = arith.constant 34 : index
    %969 = vector.load %arg4[%c0_562, %c34_563] : memref<4x36xf32, #tpu.memory_space<vmem>>, vector<4x1xf32>
    %970 = vector.broadcast %969 : vector<4x1xf32> to vector<4x256xf32>
    %971 = vector.broadcast %968 : vector<1x256xf32> to vector<4x256xf32>
    %972 = arith.mulf %970, %971 : vector<4x256xf32>
    %973 = arith.addf %966, %972 : vector<4x256xf32>
    %c7_564 = arith.constant 7 : index
    %c34_565 = arith.constant 34 : index
    %974 = vector.load %arg8[%c7_564, %c34_565] : memref<8x290xf32, #tpu.memory_space<vmem>>, vector<1x256xf32>
    %975 = arith.mulf %974, %1 : vector<1x256xf32>
    %c0_566 = arith.constant 0 : index
    %c35_567 = arith.constant 35 : index
    %976 = vector.load %arg4[%c0_566, %c35_567] : memref<4x36xf32, #tpu.memory_space<vmem>>, vector<4x1xf32>
    %977 = vector.broadcast %976 : vector<4x1xf32> to vector<4x256xf32>
    %978 = vector.broadcast %975 : vector<1x256xf32> to vector<4x256xf32>
    %979 = arith.mulf %977, %978 : vector<4x256xf32>
    %980 = arith.addf %973, %979 : vector<4x256xf32>
    %981 = arith.addf %822, %901 : vector<4x256xf32>
    %982 = arith.addf %981, %980 : vector<4x256xf32>
    %c0_568 = arith.constant 0 : index
    %c0_569 = arith.constant 0 : index
    %983 = vector.load %arg5[%c0_568, %c0_569] : memref<4x1xf32, #tpu.memory_space<vmem>>, vector<4x1xf32>
    %984 = vector.broadcast %983 : vector<4x1xf32> to vector<4x256xf32>
    %985 = arith.addf %982, %984 : vector<4x256xf32>
    %c4_570 = arith.constant 4 : index
    %c0_571 = arith.constant 0 : index
    %986 = vector.load %arg1[%c4_570, %c0_571] : memref<8x256xf32, #tpu.memory_space<vmem>>, vector<4x256xf32>
    %987 = arith.addf %985, %986 : vector<4x256xf32>
    %cst_572 = arith.constant 0.000000e+00 : f32
    %988 = vector.broadcast %cst_572 : f32 to vector<4x256xf32>
    %989 = arith.maximumf %987, %988 : vector<4x256xf32>
    %c4_573 = arith.constant 4 : index
    %c0_574 = arith.constant 0 : index
    %990 = vector.load %arg7[%c4_573, %c0_574] : memref<8x256xf32, #tpu.memory_space<vmem>>, vector<4x256xf32>
    tpu.vector_store %arg7[%c4_573, %c0_574], %989 {strides = array<i32>} : memref<8x256xf32, #tpu.memory_space<vmem>>, vector<4x256xf32>,
    return
  }
  func.func @transform_0(%arg0: i32) -> (i32, i32) {
    %c0_i32 = arith.constant 0 : i32
    %c0_i32_0 = arith.constant 0 : i32
    return %arg0, %c0_i32 : i32, i32
  }
  func.func @transform_1(%arg0: i32) -> (i32, i32) {
    %c0_i32 = arith.constant 0 : i32
    %c0_i32_0 = arith.constant 0 : i32
    %c0_i32_1 = arith.constant 0 : i32
    return %c0_i32, %c0_i32_0 : i32, i32
  }
  func.func @transform_2(%arg0: i32) -> (i32, i32) {
    %c0_i32 = arith.constant 0 : i32
    %c0_i32_0 = arith.constant 0 : i32
    %c0_i32_1 = arith.constant 0 : i32
    return %c0_i32, %c0_i32_0 : i32, i32
  }
  func.func @transform_3(%arg0: i32) -> (i32, i32) {
    %c0_i32 = arith.constant 0 : i32
    %c0_i32_0 = arith.constant 0 : i32
    %c0_i32_1 = arith.constant 0 : i32
    return %c0_i32, %c0_i32_0 : i32, i32
  }
  func.func @transform_4(%arg0: i32) -> (i32, i32) {
    %c0_i32 = arith.constant 0 : i32
    %c0_i32_0 = arith.constant 0 : i32
    %c0_i32_1 = arith.constant 0 : i32
    return %c0_i32, %c0_i32_0 : i32, i32
  }
  func.func @transform_5(%arg0: i32) -> (i32, i32) {
    %c0_i32 = arith.constant 0 : i32
    %c0_i32_0 = arith.constant 0 : i32
    %c0_i32_1 = arith.constant 0 : i32
    return %c0_i32, %c0_i32_0 : i32, i32
  }
  func.func @transform_6(%arg0: i32) -> (i32, i32) {
    %c0_i32 = arith.constant 0 : i32
    %c0_i32_0 = arith.constant 0 : i32
    return %arg0, %c0_i32 : i32, i32
  }
}

</mosaic_0001>

<llo_original>
// kernel: tpu_custom_call.1
$region0: #{tpu_custom_call.1}
  #allocation0 [shape = 'u32[]', space=smem, size = 0x4, offset = 0x4, fixed_abs, tag = 'smem constant byte address 0x4 - core index']
  #allocation1 [shape = 'u32[144,128]{1,0:T(1,128)}', space=vmem, size = 0x12000, scoped, tag = 'internal scratch']
  #allocation2 [shape = 'f32[8,290]{1,0:T(8,128)}', space=vmem, size = 0x3000, scoped, tag = 'scratch operand']
  %s0 = inlined_call_operand.hbm [shape: f32[8,256], index: 0, kind: input, shape index: {}]
  %s1 = inlined_call_operand.vmem [shape: f32[4,36], index: 1, kind: input, shape index: {}]
  %s2 = inlined_call_operand.vmem [shape: f32[4,1], index: 2, kind: input, shape index: {}]
  %s3 = inlined_call_operand.vmem [shape: f32[4,36], index: 3, kind: input, shape index: {}]
  %s4 = inlined_call_operand.vmem [shape: f32[4,1], index: 4, kind: input, shape index: {}]
  %s5 = inlined_call_operand.vmem [shape: f32[2,256], index: 5, kind: input, shape index: {}]
  %s6 = inlined_call_operand.hbm [shape: f32[8,256], index: 6, kind: output, shape index: {}]
  %s7 = sld [smem:[#allocation0]]
  $region38: #{tpu_custom_call.1} parent=0
    _
  %s9 = ssub.s32 1, %s7
  %s10 = scalar_select 0, %s9, %s7
  $region1: #{tpu_custom_call.1} parent=0
    #allocation3 [shape = 'u8[8192]{0}', space=vmem, size = 0x2000, scoped, tag = 'input window, operand 0, single buffered']
    #allocation4 [shape = 's32[1]{0}', space=sflag, size = 0x4, scoped, tag = 'scoped memory for tpu_custom_call.1']
    #allocation5 [shape = 's32[1]{0}', space=sflag, size = 0x4, scoped, tag = 'scoped memory for tpu_custom_call.1']
    #allocation6 [shape = 'u8[8192]{0}', space=vmem, size = 0x2000, scoped, tag = 'output window, operand 0, single buffered']
    %11 = vsyncpa [#allocation4], 0
    %12 = vsyncpa [#allocation5], 0
    // Predicated region
    $region2: #{tpu_custom_call.1} parent=1 // pred_check
      _
    $region3: #{tpu_custom_call.1} parent=1 // pred_check_branch
      %14 = sbr.rel (0) target = $region5
    $region4: #{tpu_custom_call.1} parent=1 // pred_region
      %s16 = ssub.s32 256, 256
      %17 = vsyncadd [#allocation4], %s16
      %s19 = sshll.u32 [#allocation3], 4
      %s20 = int_to_ptr.vmem [resolvable:$true] %s19
      %22 = dma.hbm_to_vmem [thread:$0]  %s0, 256, %s20, [#allocation4]
    $region5: #{tpu_custom_call.1} parent=1 // pred_fallthru
      _
    // Predicated region
    $region6: #{tpu_custom_call.1} parent=1 // pred_check
      _
    $region7: #{tpu_custom_call.1} parent=1 // pred_check_branch
      %24 = sbr.rel (0) target = $region9
    $region8: #{tpu_custom_call.1} parent=1 // pred_region
      _
    $region9: #{tpu_custom_call.1} parent=1 // pred_fallthru
      _
    // Predicated region
    $region10: #{tpu_custom_call.1} parent=1 // pred_check
      _
    $region11: #{tpu_custom_call.1} parent=1 // pred_check_branch
      %26 = sbr.rel (0) target = $region13
    $region12: #{tpu_custom_call.1} parent=1 // pred_region
      _
    $region13: #{tpu_custom_call.1} parent=1 // pred_fallthru
      _
    // Predicated region
    $region14: #{tpu_custom_call.1} parent=1 // pred_check
      _
    $region15: #{tpu_custom_call.1} parent=1 // pred_check_branch
      %28 = sbr.rel (0) target = $region17
    $region16: #{tpu_custom_call.1} parent=1 // pred_region
      _
    $region17: #{tpu_custom_call.1} parent=1 // pred_fallthru
      _
    // Predicated region
    $region18: #{tpu_custom_call.1} parent=1 // pred_check
      _
    $region19: #{tpu_custom_call.1} parent=1 // pred_check_branch
      %30 = sbr.rel (0) target = $region21
    $region20: #{tpu_custom_call.1} parent=1 // pred_region
      _
    $region21: #{tpu_custom_call.1} parent=1 // pred_fallthru
      _
    // Predicated region
    $region22: #{tpu_custom_call.1} parent=1 // pred_check
      _
    $region23: #{tpu_custom_call.1} parent=1 // pred_check_branch
      %32 = sbr.rel (0) target = $region25
    $region24: #{tpu_custom_call.1} parent=1 // pred_region
      _
    $region25: #{tpu_custom_call.1} parent=1 // pred_fallthru
      _
    // Predicated region
    $region26: #{tpu_custom_call.1} parent=1 // pred_check
      _
    $region27: #{tpu_custom_call.1} parent=1 // pred_check_branch
      %34 = sbr.rel (0) target = $region29
    $region28: #{tpu_custom_call.1} parent=1 // pred_region
      %35 = dma.done [#allocation4], 256
    $region29: #{tpu_custom_call.1} parent=1 // pred_fallthru
      _
    %v36 = vld [vmem:[%s5] ss:$2 sm:$0x3]
    %s37 = scalar_lea.vmem %s5, 1
    %v38 = vld [vmem:[%s37] ss:$2 sm:$0x3]
    %vm39 = vcmask 138240
    %40 = vst.msk [vmem:[#allocation2] sm:$0xff] %vm39, 0.0
    %vm41 = vcmask 277640
    %42 = vst.msk [vmem:[#allocation2 + $0x10] sm:$0xff] %vm41, 0.0
    %v43 = vld [vmem:[#allocation3] sm:$0xff]
    %v44 = vld [vmem:[#allocation3 + $0x8] sm:$0xff]
    %47 = vrot.lane.b32.xlu0 %v43, 17
    %v48 = vpop.permute.xlu0 %47
    %49 = vrot.lane.b32.xlu0 %v44, 17
    %v50 = vpop.permute.xlu0 %49
    %v51 = vsel %vm39, %v48, %v50
    %vm55 = vcmask 1047688
    %56 = vst.msk [vmem:[#allocation2] sm:$0xff] %vm55, %v48
    %57 = vst [vmem:[#allocation2 + $0x8] sm:$0xff] %v51
    %58 = vst.msk [vmem:[#allocation2 + $0x10] sm:$0xff] %vm39, %v50
    %v59 = vld [vmem:[#allocation2] ss:$8 sm:$0x3]
    %v60 = vmul.f32 %v59, %v36
    %v61 = vld [vmem:[%s1] sm:$0xf]
    %63 = vset.pattern.permute.xlu0 0
    %64 = vperm.xlu0 %63, %v61
    %v65 = vpop.permute.xlu0 %64
    %v68 = vlaneseq
    %v69 = vshrl.u32 %v68, 7
    %v70 = vsub.s32 0, %v69
    %v71 = vrot.slane %v60, %v70
    %v72 = vlaneseq
    %v73 = vshrl.u32 %v72, 7
    %v74 = vsub.s32 1, %v73
    %v75 = vrot.slane %v60, %v74
    %v78 = vmul.f32 %v65, %v71
    %v79 = vmul.f32 %v65, %v75
    %s80 = scalar_lea.vmem [#allocation2], 1
    %v81 = vld [vmem:[%s80] ss:$8 sm:$0x3]
    %v82 = vmul.f32 %v81, %v36
    %83 = vset.pattern.permute.xlu0 1
    %84 = vperm.xlu0 %83, %v61
    %v85 = vpop.permute.xlu0 %84
    %v88 = vlaneseq
    %v89 = vshrl.u32 %v88, 7
    %v90 = vsub.s32 0, %v89
    %v91 = vrot.slane %v82, %v90
    %v92 = vlaneseq
    %v93 = vshrl.u32 %v92, 7
    %v94 = vsub.s32 1, %v93
    %v95 = vrot.slane %v82, %v94
    %v98 = vmul.f32 %v85, %v91
    %v99 = vmul.f32 %v85, %v95
    %v100 = vadd.f32 %v78, %v98
    %v101 = vadd.f32 %v79, %v99
    %s102 = scalar_lea.vmem [#allocation2], 2
    %v103 = vld [vmem:[%s102] ss:$8 sm:$0x3]
    %v104 = vmul.f32 %v103, %v36
    %105 = vset.pattern.permute.xlu0 2
    %106 = vperm.xlu0 %105, %v61
    %v107 = vpop.permute.xlu0 %106
    %v110 = vlaneseq
    %v111 = vshrl.u32 %v110, 7
    %v112 = vsub.s32 0, %v111
    %v113 = vrot.slane %v104, %v112
    %v114 = vlaneseq
    %v115 = vshrl.u32 %v114, 7
    %v116 = vsub.s32 1, %v115
    %v117 = vrot.slane %v104, %v116
    %v120 = vmul.f32 %v107, %v113
    %v121 = vmul.f32 %v107, %v117
    %v122 = vadd.f32 %v100, %v120
    %v123 = vadd.f32 %v101, %v121
    %s124 = scalar_lea.vmem [#allocation2], 3
    %v125 = vld [vmem:[%s124] ss:$8 sm:$0x3]
    %v126 = vmul.f32 %v125, %v36
    %127 = vset.pattern.permute.xlu0 3
    %128 = vperm.xlu0 %127, %v61
    %v129 = vpop.permute.xlu0 %128
    %v132 = vlaneseq
    %v133 = vshrl.u32 %v132, 7
    %v134 = vsub.s32 0, %v133
    %v135 = vrot.slane %v126, %v134
    %v136 = vlaneseq
    %v137 = vshrl.u32 %v136, 7
    %v138 = vsub.s32 1, %v137
    %v139 = vrot.slane %v126, %v138
    %v142 = vmul.f32 %v129, %v135
    %v143 = vmul.f32 %v129, %v139
    %v144 = vadd.f32 %v122, %v142
    %v145 = vadd.f32 %v123, %v143
    %v146 = vld [vmem:[#allocation2] ss:$8 sm:$0x7]
    %147 = vset.pattern.permute.xlu0 4
    %148 = vperm.xlu0 %147, %v61
    %v149 = vpop.permute.xlu0 %148
    %v152 = vlaneseq
    %v153 = vshrl.u32 %v152, 7
    %v154 = vsub.s32 0, %v153
    %v155 = vrot.slane %v146, %v154
    %v156 = vlaneseq
    %v157 = vshrl.u32 %v156, 7
    %v158 = vsub.s32 1, %v157
    %v159 = vrot.slane %v146, %v158
    %v160 = vlaneseq
    %v161 = vshrl.u32 %v160, 7
    %v162 = vsub.s32 2, %v161
    %v163 = vrot.slane %v146, %v162
    %v167 = vmul.f32 %v149, %v155
    %v168 = vmul.f32 %v149, %v159
    %v169 = vmul.f32 %v149, %v163
    %173 = vrot.lane.b32.xlu0 %v167, 127
    %v174 = vpop.permute.xlu0 %173
    %175 = vrot.lane.b32.xlu0 %v168, 127
    %v176 = vpop.permute.xlu0 %175
    %177 = vrot.lane.b32.xlu0 %v169, 127
    %v178 = vpop.permute.xlu0 %177
    %vm179 = vcmask 1039360
    %v180 = vsel %vm179, %v174, %v176
    %v181 = vsel %vm179, %v176, %v178
    %v184 = vadd.f32 %v144, %v180
    %v185 = vadd.f32 %v145, %v181
    %v186 = vld [vmem:[%s80] ss:$8 sm:$0x7]
    %187 = vset.pattern.permute.xlu0 5
    %188 = vperm.xlu0 %187, %v61
    %v189 = vpop.permute.xlu0 %188
    %v192 = vlaneseq
    %v193 = vshrl.u32 %v192, 7
    %v194 = vsub.s32 0, %v193
    %v195 = vrot.slane %v186, %v194
    %v196 = vlaneseq
    %v197 = vshrl.u32 %v196, 7
    %v198 = vsub.s32 1, %v197
    %v199 = vrot.slane %v186, %v198
    %v200 = vlaneseq
    %v201 = vshrl.u32 %v200, 7
    %v202 = vsub.s32 2, %v201
    %v203 = vrot.slane %v186, %v202
    %v207 = vmul.f32 %v189, %v195
    %v208 = vmul.f32 %v189, %v199
    %v209 = vmul.f32 %v189, %v203
    %213 = vrot.lane.b32.xlu0 %v207, 127
    %v214 = vpop.permute.xlu0 %213
    %215 = vrot.lane.b32.xlu0 %v208, 127
    %v216 = vpop.permute.xlu0 %215
    %217 = vrot.lane.b32.xlu0 %v209, 127
    %v218 = vpop.permute.xlu0 %217
    %v219 = vsel %vm179, %v214, %v216
    %v220 = vsel %vm179, %v216, %v218
    %v223 = vadd.f32 %v184, %v219
    %v224 = vadd.f32 %v185, %v220
    %v225 = vld [vmem:[%s102] ss:$8 sm:$0x7]
    %226 = vset.pattern.permute.xlu0 6
    %227 = vperm.xlu0 %226, %v61
    %v228 = vpop.permute.xlu0 %227
    %v231 = vlaneseq
    %v232 = vshrl.u32 %v231, 7
    %v233 = vsub.s32 0, %v232
    %v234 = vrot.slane %v225, %v233
    %v235 = vlaneseq
    %v236 = vshrl.u32 %v235, 7
    %v237 = vsub.s32 1, %v236
    %v238 = vrot.slane %v225, %v237
    %v239 = vlaneseq
    %v240 = vshrl.u32 %v239, 7
    %v241 = vsub.s32 2, %v240
    %v242 = vrot.slane %v225, %v241
    %v246 = vmul.f32 %v228, %v234
    %v247 = vmul.f32 %v228, %v238
    %v248 = vmul.f32 %v228, %v242
    %252 = vrot.lane.b32.xlu0 %v246, 127
    %v253 = vpop.permute.xlu0 %252
    %254 = vrot.lane.b32.xlu0 %v247, 127
    %v255 = vpop.permute.xlu0 %254
    %256 = vrot.lane.b32.xlu0 %v248, 127
    %v257 = vpop.permute.xlu0 %256
    %v258 = vsel %vm179, %v253, %v255
    %v259 = vsel %vm179, %v255, %v257
    %v262 = vadd.f32 %v223, %v258
    %v263 = vadd.f32 %v224, %v259
    %v264 = vld [vmem:[%s124] ss:$8 sm:$0x7]
    %265 = vset.pattern.permute.xlu0 7
    %266 = vperm.xlu0 %265, %v61
    %v267 = vpop.permute.xlu0 %266
    %v270 = vlaneseq
    %v271 = vshrl.u32 %v270, 7
    %v272 = vsub.s32 0, %v271
    %v273 = vrot.slane %v264, %v272
    %v274 = vlaneseq
    %v275 = vshrl.u32 %v274, 7
    %v276 = vsub.s32 1, %v275
    %v277 = vrot.slane %v264, %v276
    %v278 = vlaneseq
    %v279 = vshrl.u32 %v278, 7
    %v280 = vsub.s32 2, %v279
    %v281 = vrot.slane %v264, %v280
    %v285 = vmul.f32 %v267, %v273
    %v286 = vmul.f32 %v267, %v277
    %v287 = vmul.f32 %v267, %v281
    %291 = vrot.lane.b32.xlu0 %v285, 127
    %v292 = vpop.permute.xlu0 %291
    %293 = vrot.lane.b32.xlu0 %v286, 127
    %v294 = vpop.permute.xlu0 %293
    %295 = vrot.lane.b32.xlu0 %v287, 127
    %v296 = vpop.permute.xlu0 %295
    %v297 = vsel %vm179, %v292, %v294
    %v298 = vsel %vm179, %v294, %v296
    %v301 = vadd.f32 %v262, %v297
    %v302 = vadd.f32 %v263, %v298
    %304 = vrot.lane.b32.xlu0 %v38, 2
    %v305 = vpop.permute.xlu0 %304
    %v306 = vrot.slane %v305, 7
    %vm307 = vcmask 15360
    %v308 = vsel %vm307, %v306, %v305
    %v310 = vmul.f32 %v146, %v308
    %311 = vset.pattern.permute.xlu0 8
    %312 = vperm.xlu0 %311, %v61
    %v313 = vpop.permute.xlu0 %312
    %v316 = vlaneseq
    %v317 = vshrl.u32 %v316, 7
    %v318 = vsub.s32 0, %v317
    %v319 = vrot.slane %v310, %v318
    %v320 = vlaneseq
    %v321 = vshrl.u32 %v320, 7
    %v322 = vsub.s32 1, %v321
    %v323 = vrot.slane %v310, %v322
    %v324 = vlaneseq
    %v325 = vshrl.u32 %v324, 7
    %v326 = vsub.s32 2, %v325
    %v327 = vrot.slane %v310, %v326
    %v331 = vmul.f32 %v313, %v319
    %v332 = vmul.f32 %v313, %v323
    %v333 = vmul.f32 %v313, %v327
    %337 = vrot.lane.b32.xlu0 %v331, 126
    %v338 = vpop.permute.xlu0 %337
    %339 = vrot.lane.b32.xlu0 %v332, 126
    %v340 = vpop.permute.xlu0 %339
    %341 = vrot.lane.b32.xlu0 %v333, 126
    %v342 = vpop.permute.xlu0 %341
    %vm343 = vcmask 1031168
    %v344 = vsel %vm343, %v338, %v340
    %v345 = vsel %vm343, %v340, %v342
    %v348 = vadd.f32 %v301, %v344
    %v349 = vadd.f32 %v302, %v345
    %v350 = vmul.f32 %v186, %v308
    %351 = vset.pattern.permute.xlu0 9
    %352 = vperm.xlu0 %351, %v61
    %v353 = vpop.permute.xlu0 %352
    %v356 = vlaneseq
    %v357 = vshrl.u32 %v356, 7
    %v358 = vsub.s32 0, %v357
    %v359 = vrot.slane %v350, %v358
    %v360 = vlaneseq
    %v361 = vshrl.u32 %v360, 7
    %v362 = vsub.s32 1, %v361
    %v363 = vrot.slane %v350, %v362
    %v364 = vlaneseq
    %v365 = vshrl.u32 %v364, 7
    %v366 = vsub.s32 2, %v365
    %v367 = vrot.slane %v350, %v366
    %v371 = vmul.f32 %v353, %v359
    %v372 = vmul.f32 %v353, %v363
    %v373 = vmul.f32 %v353, %v367
    %377 = vrot.lane.b32.xlu0 %v371, 126
    %v378 = vpop.permute.xlu0 %377
    %379 = vrot.lane.b32.xlu0 %v372, 126
    %v380 = vpop.permute.xlu0 %379
    %381 = vrot.lane.b32.xlu0 %v373, 126
    %v382 = vpop.permute.xlu0 %381
    %v383 = vsel %vm343, %v378, %v380
    %v384 = vsel %vm343, %v380, %v382
    %v387 = vadd.f32 %v348, %v383
    %v388 = vadd.f32 %v349, %v384
    %v389 = vmul.f32 %v225, %v308
    %390 = vset.pattern.permute.xlu0 10
    %391 = vperm.xlu0 %390, %v61
    %v392 = vpop.permute.xlu0 %391
    %v395 = vlaneseq
    %v396 = vshrl.u32 %v395, 7
    %v397 = vsub.s32 0, %v396
    %v398 = vrot.slane %v389, %v397
    %v399 = vlaneseq
    %v400 = vshrl.u32 %v399, 7
    %v401 = vsub.s32 1, %v400
    %v402 = vrot.slane %v389, %v401
    %v403 = vlaneseq
    %v404 = vshrl.u32 %v403, 7
    %v405 = vsub.s32 2, %v404
    %v406 = vrot.slane %v389, %v405
    %v410 = vmul.f32 %v392, %v398
    %v411 = vmul.f32 %v392, %v402
    %v412 = vmul.f32 %v392, %v406
    %416 = vrot.lane.b32.xlu0 %v410, 126
    %v417 = vpop.permute.xlu0 %416
    %418 = vrot.lane.b32.xlu0 %v411, 126
    %v419 = vpop.permute.xlu0 %418
    %420 = vrot.lane.b32.xlu0 %v412, 126
    %v421 = vpop.permute.xlu0 %420
    %v422 = vsel %vm343, %v417, %v419
    %v423 = vsel %vm343, %v419, %v421
    %v426 = vadd.f32 %v387, %v422
    %v427 = vadd.f32 %v388, %v423
    %v428 = vmul.f32 %v264, %v308
    %429 = vset.pattern.permute.xlu0 11
    %430 = vperm.xlu0 %429, %v61
    %v431 = vpop.permute.xlu0 %430
    %v434 = vlaneseq
    %v435 = vshrl.u32 %v434, 7
    %v436 = vsub.s32 0, %v435
    %v437 = vrot.slane %v428, %v436
    %v438 = vlaneseq
    %v439 = vshrl.u32 %v438, 7
    %v440 = vsub.s32 1, %v439
    %v441 = vrot.slane %v428, %v440
    %v442 = vlaneseq
    %v443 = vshrl.u32 %v442, 7
    %v444 = vsub.s32 2, %v443
    %v445 = vrot.slane %v428, %v444
    %v449 = vmul.f32 %v431, %v437
    %v450 = vmul.f32 %v431, %v441
    %v451 = vmul.f32 %v431, %v445
    %455 = vrot.lane.b32.xlu0 %v449, 126
    %v456 = vpop.permute.xlu0 %455
    %457 = vrot.lane.b32.xlu0 %v450, 126
    %v458 = vpop.permute.xlu0 %457
    %459 = vrot.lane.b32.xlu0 %v451, 126
    %v460 = vpop.permute.xlu0 %459
    %v461 = vsel %vm343, %v456, %v458
    %v462 = vsel %vm343, %v458, %v460
    %v465 = vadd.f32 %v426, %v461
    %v466 = vadd.f32 %v427, %v462
    %468 = vrot.lane.b32.xlu0 %v36, 16
    %v469 = vpop.permute.xlu0 %468
    %v470 = vrot.slane %v469, 7
    %vm471 = vcmask 130048
    %v472 = vsel %vm471, %v470, %v469
    %v474 = vmul.f32 %v146, %v472
    %475 = vset.pattern.permute.xlu0 12
    %476 = vperm.xlu0 %475, %v61
    %v477 = vpop.permute.xlu0 %476
    %v480 = vlaneseq
    %v481 = vshrl.u32 %v480, 7
    %v482 = vsub.s32 0, %v481
    %v483 = vrot.slane %v474, %v482
    %v484 = vlaneseq
    %v485 = vshrl.u32 %v484, 7
    %v486 = vsub.s32 1, %v485
    %v487 = vrot.slane %v474, %v486
    %v488 = vlaneseq
    %v489 = vshrl.u32 %v488, 7
    %v490 = vsub.s32 2, %v489
    %v491 = vrot.slane %v474, %v490
    %v495 = vmul.f32 %v477, %v483
    %v496 = vmul.f32 %v477, %v487
    %v497 = vmul.f32 %v477, %v491
    %v498 = vmul.f32 %v186, %v472
    %499 = vset.pattern.permute.xlu0 13
    %500 = vperm.xlu0 %499, %v61
    %v501 = vpop.permute.xlu0 %500
    %v504 = vlaneseq
    %v505 = vshrl.u32 %v504, 7
    %v506 = vsub.s32 0, %v505
    %v507 = vrot.slane %v498, %v506
    %v508 = vlaneseq
    %v509 = vshrl.u32 %v508, 7
    %v510 = vsub.s32 1, %v509
    %v511 = vrot.slane %v498, %v510
    %v512 = vlaneseq
    %v513 = vshrl.u32 %v512, 7
    %v514 = vsub.s32 2, %v513
    %v515 = vrot.slane %v498, %v514
    %v519 = vmul.f32 %v501, %v507
    %v520 = vmul.f32 %v501, %v511
    %v521 = vmul.f32 %v501, %v515
    %v522 = vadd.f32 %v495, %v519
    %v523 = vadd.f32 %v496, %v520
    %v524 = vadd.f32 %v497, %v521
    %v525 = vmul.f32 %v225, %v472
    %526 = vset.pattern.permute.xlu0 14
    %527 = vperm.xlu0 %526, %v61
    %v528 = vpop.permute.xlu0 %527
    %v531 = vlaneseq
    %v532 = vshrl.u32 %v531, 7
    %v533 = vsub.s32 0, %v532
    %v534 = vrot.slane %v525, %v533
    %v535 = vlaneseq
    %v536 = vshrl.u32 %v535, 7
    %v537 = vsub.s32 1, %v536
    %v538 = vrot.slane %v525, %v537
    %v539 = vlaneseq
    %v540 = vshrl.u32 %v539, 7
    %v541 = vsub.s32 2, %v540
    %v542 = vrot.slane %v525, %v541
    %v546 = vmul.f32 %v528, %v534
    %v547 = vmul.f32 %v528, %v538
    %v548 = vmul.f32 %v528, %v542
    %v549 = vadd.f32 %v522, %v546
    %v550 = vadd.f32 %v523, %v547
    %v551 = vadd.f32 %v524, %v548
    %v552 = vmul.f32 %v264, %v472
    %553 = vset.pattern.permute.xlu0 15
    %554 = vperm.xlu0 %553, %v61
    %v555 = vpop.permute.xlu0 %554
    %v558 = vlaneseq
    %v559 = vshrl.u32 %v558, 7
    %v560 = vsub.s32 0, %v559
    %v561 = vrot.slane %v552, %v560
    %v562 = vlaneseq
    %v563 = vshrl.u32 %v562, 7
    %v564 = vsub.s32 1, %v563
    %v565 = vrot.slane %v552, %v564
    %v566 = vlaneseq
    %v567 = vshrl.u32 %v566, 7
    %v568 = vsub.s32 2, %v567
    %v569 = vrot.slane %v552, %v568
    %v573 = vmul.f32 %v555, %v561
    %v574 = vmul.f32 %v555, %v565
    %v575 = vmul.f32 %v555, %v569
    %v576 = vadd.f32 %v549, %v573
    %v577 = vadd.f32 %v550, %v574
    %v578 = vadd.f32 %v551, %v575
    %579 = vset.pattern.permute.xlu0 16
    %580 = vperm.xlu0 %579, %v61
    %v581 = vpop.permute.xlu0 %580
    %v583 = vmul.f32 %v581, %v155
    %v584 = vmul.f32 %v581, %v159
    %v585 = vmul.f32 %v581, %v163
    %589 = vrot.lane.b32.xlu0 %v583, 127
    %v590 = vpop.permute.xlu0 %589
    %591 = vrot.lane.b32.xlu0 %v584, 127
    %v592 = vpop.permute.xlu0 %591
    %593 = vrot.lane.b32.xlu0 %v585, 127
    %v594 = vpop.permute.xlu0 %593
    %v595 = vsel %vm179, %v590, %v592
    %v596 = vsel %vm179, %v592, %v594
    %v600 = vadd.f32 %v576, %v595
    %v601 = vadd.f32 %v577, %v596
    %v602 = vadd.f32 %v578, %v594
    %603 = vset.pattern.permute.xlu0 17
    %604 = vperm.xlu0 %603, %v61
    %v605 = vpop.permute.xlu0 %604
    %v607 = vmul.f32 %v605, %v195
    %v608 = vmul.f32 %v605, %v199
    %v609 = vmul.f32 %v605, %v203
    %613 = vrot.lane.b32.xlu0 %v607, 127
    %v614 = vpop.permute.xlu0 %613
    %615 = vrot.lane.b32.xlu0 %v608, 127
    %v616 = vpop.permute.xlu0 %615
    %617 = vrot.lane.b32.xlu0 %v609, 127
    %v618 = vpop.permute.xlu0 %617
    %v619 = vsel %vm179, %v614, %v616
    %v620 = vsel %vm179, %v616, %v618
    %v624 = vadd.f32 %v600, %v619
    %v625 = vadd.f32 %v601, %v620
    %v626 = vadd.f32 %v602, %v618
    %627 = vset.pattern.permute.xlu0 18
    %628 = vperm.xlu0 %627, %v61
    %v629 = vpop.permute.xlu0 %628
    %v631 = vmul.f32 %v629, %v234
    %v632 = vmul.f32 %v629, %v238
    %v633 = vmul.f32 %v629, %v242
    %637 = vrot.lane.b32.xlu0 %v631, 127
    %v638 = vpop.permute.xlu0 %637
    %639 = vrot.lane.b32.xlu0 %v632, 127
    %v640 = vpop.permute.xlu0 %639
    %641 = vrot.lane.b32.xlu0 %v633, 127
    %v642 = vpop.permute.xlu0 %641
    %v643 = vsel %vm179, %v638, %v640
    %v644 = vsel %vm179, %v640, %v642
    %v648 = vadd.f32 %v624, %v643
    %v649 = vadd.f32 %v625, %v644
    %v650 = vadd.f32 %v626, %v642
    %651 = vset.pattern.permute.xlu0 19
    %652 = vperm.xlu0 %651, %v61
    %v653 = vpop.permute.xlu0 %652
    %v655 = vmul.f32 %v653, %v273
    %v656 = vmul.f32 %v653, %v277
    %v657 = vmul.f32 %v653, %v281
    %661 = vrot.lane.b32.xlu0 %v655, 127
    %v662 = vpop.permute.xlu0 %661
    %663 = vrot.lane.b32.xlu0 %v656, 127
    %v664 = vpop.permute.xlu0 %663
    %665 = vrot.lane.b32.xlu0 %v657, 127
    %v666 = vpop.permute.xlu0 %665
    %v667 = vsel %vm179, %v662, %v664
    %v668 = vsel %vm179, %v664, %v666
    %v672 = vadd.f32 %v648, %v667
    %v673 = vadd.f32 %v649, %v668
    %v674 = vadd.f32 %v650, %v666
    %675 = vrot.lane.b32.xlu0 %v38, 18
    %v676 = vpop.permute.xlu0 %675
    %v677 = vrot.slane %v676, 7
    %vm678 = vcmask 146432
    %v679 = vsel %vm678, %v677, %v676
    %v681 = vmul.f32 %v146, %v679
    %682 = vset.pattern.permute.xlu0 20
    %683 = vperm.xlu0 %682, %v61
    %v684 = vpop.permute.xlu0 %683
    %v687 = vlaneseq
    %v688 = vshrl.u32 %v687, 7
    %v689 = vsub.s32 0, %v688
    %v690 = vrot.slane %v681, %v689
    %v691 = vlaneseq
    %v692 = vshrl.u32 %v691, 7
    %v693 = vsub.s32 1, %v692
    %v694 = vrot.slane %v681, %v693
    %v695 = vlaneseq
    %v696 = vshrl.u32 %v695, 7
    %v697 = vsub.s32 2, %v696
    %v698 = vrot.slane %v681, %v697
    %v702 = vmul.f32 %v684, %v690
    %v703 = vmul.f32 %v684, %v694
    %v704 = vmul.f32 %v684, %v698
    %708 = vrot.lane.b32.xlu0 %v702, 126
    %v709 = vpop.permute.xlu0 %708
    %710 = vrot.lane.b32.xlu0 %v703, 126
    %v711 = vpop.permute.xlu0 %710
    %712 = vrot.lane.b32.xlu0 %v704, 126
    %v713 = vpop.permute.xlu0 %712
    %v714 = vsel %vm343, %v709, %v711
    %v715 = vsel %vm343, %v711, %v713
    %v719 = vadd.f32 %v672, %v714
    %v720 = vadd.f32 %v673, %v715
    %v721 = vadd.f32 %v674, %v713
    %v722 = vmul.f32 %v186, %v679
    %723 = vset.pattern.permute.xlu0 21
    %724 = vperm.xlu0 %723, %v61
    %v725 = vpop.permute.xlu0 %724
    %v728 = vlaneseq
    %v729 = vshrl.u32 %v728, 7
    %v730 = vsub.s32 0, %v729
    %v731 = vrot.slane %v722, %v730
    %v732 = vlaneseq
    %v733 = vshrl.u32 %v732, 7
    %v734 = vsub.s32 1, %v733
    %v735 = vrot.slane %v722, %v734
    %v736 = vlaneseq
    %v737 = vshrl.u32 %v736, 7
    %v738 = vsub.s32 2, %v737
    %v739 = vrot.slane %v722, %v738
    %v743 = vmul.f32 %v725, %v731
    %v744 = vmul.f32 %v725, %v735
    %v745 = vmul.f32 %v725, %v739
    %749 = vrot.lane.b32.xlu0 %v743, 126
    %v750 = vpop.permute.xlu0 %749
    %751 = vrot.lane.b32.xlu0 %v744, 126
    %v752 = vpop.permute.xlu0 %751
    %753 = vrot.lane.b32.xlu0 %v745, 126
    %v754 = vpop.permute.xlu0 %753
    %v755 = vsel %vm343, %v750, %v752
    %v756 = vsel %vm343, %v752, %v754
    %v760 = vadd.f32 %v719, %v755
    %v761 = vadd.f32 %v720, %v756
    %v762 = vadd.f32 %v721, %v754
    %v763 = vmul.f32 %v225, %v679
    %764 = vset.pattern.permute.xlu0 22
    %765 = vperm.xlu0 %764, %v61
    %v766 = vpop.permute.xlu0 %765
    %v769 = vlaneseq
    %v770 = vshrl.u32 %v769, 7
    %v771 = vsub.s32 0, %v770
    %v772 = vrot.slane %v763, %v771
    %v773 = vlaneseq
    %v774 = vshrl.u32 %v773, 7
    %v775 = vsub.s32 1, %v774
    %v776 = vrot.slane %v763, %v775
    %v777 = vlaneseq
    %v778 = vshrl.u32 %v777, 7
    %v779 = vsub.s32 2, %v778
    %v780 = vrot.slane %v763, %v779
    %v784 = vmul.f32 %v766, %v772
    %v785 = vmul.f32 %v766, %v776
    %v786 = vmul.f32 %v766, %v780
    %790 = vrot.lane.b32.xlu0 %v784, 126
    %v791 = vpop.permute.xlu0 %790
    %792 = vrot.lane.b32.xlu0 %v785, 126
    %v793 = vpop.permute.xlu0 %792
    %794 = vrot.lane.b32.xlu0 %v786, 126
    %v795 = vpop.permute.xlu0 %794
    %v796 = vsel %vm343, %v791, %v793
    %v797 = vsel %vm343, %v793, %v795
    %v801 = vadd.f32 %v760, %v796
    %v802 = vadd.f32 %v761, %v797
    %v803 = vadd.f32 %v762, %v795
    %v804 = vmul.f32 %v264, %v679
    %805 = vset.pattern.permute.xlu0 23
    %806 = vperm.xlu0 %805, %v61
    %v807 = vpop.permute.xlu0 %806
    %v810 = vlaneseq
    %v811 = vshrl.u32 %v810, 7
    %v812 = vsub.s32 0, %v811
    %v813 = vrot.slane %v804, %v812
    %v814 = vlaneseq
    %v815 = vshrl.u32 %v814, 7
    %v816 = vsub.s32 1, %v815
    %v817 = vrot.slane %v804, %v816
    %v818 = vlaneseq
    %v819 = vshrl.u32 %v818, 7
    %v820 = vsub.s32 2, %v819
    %v821 = vrot.slane %v804, %v820
    %v825 = vmul.f32 %v807, %v813
    %v826 = vmul.f32 %v807, %v817
    %v827 = vmul.f32 %v807, %v821
    %831 = vrot.lane.b32.xlu0 %v825, 126
    %v832 = vpop.permute.xlu0 %831
    %833 = vrot.lane.b32.xlu0 %v826, 126
    %v834 = vpop.permute.xlu0 %833
    %835 = vrot.lane.b32.xlu0 %v827, 126
    %v836 = vpop.permute.xlu0 %835
    %v837 = vsel %vm343, %v832, %v834
    %v838 = vsel %vm343, %v834, %v836
    %v842 = vadd.f32 %v801, %v837
    %v843 = vadd.f32 %v802, %v838
    %v844 = vadd.f32 %v803, %v836
    %845 = vrot.lane.b32.xlu0 %v36, 32
    %v846 = vpop.permute.xlu0 %845
    %v847 = vrot.slane %v846, 7
    %vm848 = vcmask 261120
    %v849 = vsel %vm848, %v847, %v846
    %v851 = vmul.f32 %v146, %v849
    %852 = vset.pattern.permute.xlu0 24
    %853 = vperm.xlu0 %852, %v61
    %v854 = vpop.permute.xlu0 %853
    %v857 = vlaneseq
    %v858 = vshrl.u32 %v857, 7
    %v859 = vsub.s32 0, %v858
    %v860 = vrot.slane %v851, %v859
    %v861 = vlaneseq
    %v862 = vshrl.u32 %v861, 7
    %v863 = vsub.s32 1, %v862
    %v864 = vrot.slane %v851, %v863
    %v865 = vlaneseq
    %v866 = vshrl.u32 %v865, 7
    %v867 = vsub.s32 2, %v866
    %v868 = vrot.slane %v851, %v867
    %v872 = vmul.f32 %v854, %v860
    %v873 = vmul.f32 %v854, %v864
    %v874 = vmul.f32 %v854, %v868
    %v875 = vmul.f32 %v186, %v849
    %876 = vset.pattern.permute.xlu0 25
    %877 = vperm.xlu0 %876, %v61
    %v878 = vpop.permute.xlu0 %877
    %v881 = vlaneseq
    %v882 = vshrl.u32 %v881, 7
    %v883 = vsub.s32 0, %v882
    %v884 = vrot.slane %v875, %v883
    %v885 = vlaneseq
    %v886 = vshrl.u32 %v885, 7
    %v887 = vsub.s32 1, %v886
    %v888 = vrot.slane %v875, %v887
    %v889 = vlaneseq
    %v890 = vshrl.u32 %v889, 7
    %v891 = vsub.s32 2, %v890
    %v892 = vrot.slane %v875, %v891
    %v896 = vmul.f32 %v878, %v884
    %v897 = vmul.f32 %v878, %v888
    %v898 = vmul.f32 %v878, %v892
    %v899 = vadd.f32 %v872, %v896
    %v900 = vadd.f32 %v873, %v897
    %v901 = vadd.f32 %v874, %v898
    %v902 = vmul.f32 %v225, %v849
    %903 = vset.pattern.permute.xlu0 26
    %904 = vperm.xlu0 %903, %v61
    %v905 = vpop.permute.xlu0 %904
    %v908 = vlaneseq
    %v909 = vshrl.u32 %v908, 7
    %v910 = vsub.s32 0, %v909
    %v911 = vrot.slane %v902, %v910
    %v912 = vlaneseq
    %v913 = vshrl.u32 %v912, 7
    %v914 = vsub.s32 1, %v913
    %v915 = vrot.slane %v902, %v914
    %v916 = vlaneseq
    %v917 = vshrl.u32 %v916, 7
    %v918 = vsub.s32 2, %v917
    %v919 = vrot.slane %v902, %v918
    %v923 = vmul.f32 %v905, %v911
    %v924 = vmul.f32 %v905, %v915
    %v925 = vmul.f32 %v905, %v919
    %v926 = vadd.f32 %v899, %v923
    %v927 = vadd.f32 %v900, %v924
    %v928 = vadd.f32 %v901, %v925
    %v929 = vmul.f32 %v264, %v849
    %930 = vset.pattern.permute.xlu0 27
    %931 = vperm.xlu0 %930, %v61
    %v932 = vpop.permute.xlu0 %931
    %v935 = vlaneseq
    %v936 = vshrl.u32 %v935, 7
    %v937 = vsub.s32 0, %v936
    %v938 = vrot.slane %v929, %v937
    %v939 = vlaneseq
    %v940 = vshrl.u32 %v939, 7
    %v941 = vsub.s32 1, %v940
    %v942 = vrot.slane %v929, %v941
    %v943 = vlaneseq
    %v944 = vshrl.u32 %v943, 7
    %v945 = vsub.s32 2, %v944
    %v946 = vrot.slane %v929, %v945
    %v950 = vmul.f32 %v932, %v938
    %v951 = vmul.f32 %v932, %v942
    %v952 = vmul.f32 %v932, %v946
    %v953 = vadd.f32 %v926, %v950
    %v954 = vadd.f32 %v927, %v951
    %v955 = vadd.f32 %v928, %v952
    %956 = vset.pattern.permute.xlu0 28
    %957 = vperm.xlu0 %956, %v61
    %v958 = vpop.permute.xlu0 %957
    %v960 = vmul.f32 %v958, %v155
    %v961 = vmul.f32 %v958, %v159
    %v962 = vmul.f32 %v958, %v163
    %966 = vrot.lane.b32.xlu0 %v960, 127
    %v967 = vpop.permute.xlu0 %966
    %968 = vrot.lane.b32.xlu0 %v961, 127
    %v969 = vpop.permute.xlu0 %968
    %970 = vrot.lane.b32.xlu0 %v962, 127
    %v971 = vpop.permute.xlu0 %970
    %v972 = vsel %vm179, %v967, %v969
    %v973 = vsel %vm179, %v969, %v971
    %v977 = vadd.f32 %v953, %v972
    %v978 = vadd.f32 %v954, %v973
    %v979 = vadd.f32 %v955, %v971
    %980 = vset.pattern.permute.xlu0 29
    %981 = vperm.xlu0 %980, %v61
    %v982 = vpop.permute.xlu0 %981
    %v984 = vmul.f32 %v982, %v195
    %v985 = vmul.f32 %v982, %v199
    %v986 = vmul.f32 %v982, %v203
    %990 = vrot.lane.b32.xlu0 %v984, 127
    %v991 = vpop.permute.xlu0 %990
    %992 = vrot.lane.b32.xlu0 %v985, 127
    %v993 = vpop.permute.xlu0 %992
    %994 = vrot.lane.b32.xlu0 %v986, 127
    %v995 = vpop.permute.xlu0 %994
    %v996 = vsel %vm179, %v991, %v993
    %v997 = vsel %vm179, %v993, %v995
    %v1001 = vadd.f32 %v977, %v996
    %v1002 = vadd.f32 %v978, %v997
    %v1003 = vadd.f32 %v979, %v995
    %1004 = vset.pattern.permute.xlu0 30
    %1005 = vperm.xlu0 %1004, %v61
    %v1006 = vpop.permute.xlu0 %1005
    %v1008 = vmul.f32 %v1006, %v234
    %v1009 = vmul.f32 %v1006, %v238
    %v1010 = vmul.f32 %v1006, %v242
    %1014 = vrot.lane.b32.xlu0 %v1008, 127
    %v1015 = vpop.permute.xlu0 %1014
    %1016 = vrot.lane.b32.xlu0 %v1009, 127
    %v1017 = vpop.permute.xlu0 %1016
    %1018 = vrot.lane.b32.xlu0 %v1010, 127
    %v1019 = vpop.permute.xlu0 %1018
    %v1020 = vsel %vm179, %v1015, %v1017
    %v1021 = vsel %vm179, %v1017, %v1019
    %v1025 = vadd.f32 %v1001, %v1020
    %v1026 = vadd.f32 %v1002, %v1021
    %v1027 = vadd.f32 %v1003, %v1019
    %1028 = vset.pattern.permute.xlu0 31
    %1029 = vperm.xlu0 %1028, %v61
    %v1030 = vpop.permute.xlu0 %1029
    %v1032 = vmul.f32 %v1030, %v273
    %v1033 = vmul.f32 %v1030, %v277
    %v1034 = vmul.f32 %v1030, %v281
    %1038 = vrot.lane.b32.xlu0 %v1032, 127
    %v1039 = vpop.permute.xlu0 %1038
    %1040 = vrot.lane.b32.xlu0 %v1033, 127
    %v1041 = vpop.permute.xlu0 %1040
    %1042 = vrot.lane.b32.xlu0 %v1034, 127
    %v1043 = vpop.permute.xlu0 %1042
    %v1044 = vsel %vm179, %v1039, %v1041
    %v1045 = vsel %vm179, %v1041, %v1043
    %v1049 = vadd.f32 %v1025, %v1044
    %v1050 = vadd.f32 %v1026, %v1045
    %v1051 = vadd.f32 %v1027, %v1043
    %1052 = vrot.lane.b32.xlu0 %v38, 34
    %v1053 = vpop.permute.xlu0 %1052
    %v1054 = vrot.slane %v1053, 7
    %vm1055 = vcmask 277504
    %v1056 = vsel %vm1055, %v1054, %v1053
    %v1058 = vmul.f32 %v146, %v1056
    %1059 = vset.pattern.permute.xlu0 32
    %1060 = vperm.xlu0 %1059, %v61
    %v1061 = vpop.permute.xlu0 %1060
    %v1064 = vlaneseq
    %v1065 = vshrl.u32 %v1064, 7
    %v1066 = vsub.s32 0, %v1065
    %v1067 = vrot.slane %v1058, %v1066
    %v1068 = vlaneseq
    %v1069 = vshrl.u32 %v1068, 7
    %v1070 = vsub.s32 1, %v1069
    %v1071 = vrot.slane %v1058, %v1070
    %v1072 = vlaneseq
    %v1073 = vshrl.u32 %v1072, 7
    %v1074 = vsub.s32 2, %v1073
    %v1075 = vrot.slane %v1058, %v1074
    %v1079 = vmul.f32 %v1061, %v1067
    %v1080 = vmul.f32 %v1061, %v1071
    %v1081 = vmul.f32 %v1061, %v1075
    %1085 = vrot.lane.b32.xlu0 %v1079, 126
    %v1086 = vpop.permute.xlu0 %1085
    %1087 = vrot.lane.b32.xlu0 %v1080, 126
    %v1088 = vpop.permute.xlu0 %1087
    %1089 = vrot.lane.b32.xlu0 %v1081, 126
    %v1090 = vpop.permute.xlu0 %1089
    %v1091 = vsel %vm343, %v1086, %v1088
    %v1092 = vsel %vm343, %v1088, %v1090
    %v1096 = vadd.f32 %v1049, %v1091
    %v1097 = vadd.f32 %v1050, %v1092
    %v1098 = vadd.f32 %v1051, %v1090
    %v1099 = vmul.f32 %v186, %v1056
    %1100 = vset.pattern.permute.xlu0 33
    %1101 = vperm.xlu0 %1100, %v61
    %v1102 = vpop.permute.xlu0 %1101
    %v1105 = vlaneseq
    %v1106 = vshrl.u32 %v1105, 7
    %v1107 = vsub.s32 0, %v1106
    %v1108 = vrot.slane %v1099, %v1107
    %v1109 = vlaneseq
    %v1110 = vshrl.u32 %v1109, 7
    %v1111 = vsub.s32 1, %v1110
    %v1112 = vrot.slane %v1099, %v1111
    %v1113 = vlaneseq
    %v1114 = vshrl.u32 %v1113, 7
    %v1115 = vsub.s32 2, %v1114
    %v1116 = vrot.slane %v1099, %v1115
    %v1120 = vmul.f32 %v1102, %v1108
    %v1121 = vmul.f32 %v1102, %v1112
    %v1122 = vmul.f32 %v1102, %v1116
    %1126 = vrot.lane.b32.xlu0 %v1120, 126
    %v1127 = vpop.permute.xlu0 %1126
    %1128 = vrot.lane.b32.xlu0 %v1121, 126
    %v1129 = vpop.permute.xlu0 %1128
    %1130 = vrot.lane.b32.xlu0 %v1122, 126
    %v1131 = vpop.permute.xlu0 %1130
    %v1132 = vsel %vm343, %v1127, %v1129
    %v1133 = vsel %vm343, %v1129, %v1131
    %v1137 = vadd.f32 %v1096, %v1132
    %v1138 = vadd.f32 %v1097, %v1133
    %v1139 = vadd.f32 %v1098, %v1131
    %v1140 = vmul.f32 %v225, %v1056
    %1141 = vset.pattern.permute.xlu0 34
    %1142 = vperm.xlu0 %1141, %v61
    %v1143 = vpop.permute.xlu0 %1142
    %v1146 = vlaneseq
    %v1147 = vshrl.u32 %v1146, 7
    %v1148 = vsub.s32 0, %v1147
    %v1149 = vrot.slane %v1140, %v1148
    %v1150 = vlaneseq
    %v1151 = vshrl.u32 %v1150, 7
    %v1152 = vsub.s32 1, %v1151
    %v1153 = vrot.slane %v1140, %v1152
    %v1154 = vlaneseq
    %v1155 = vshrl.u32 %v1154, 7
    %v1156 = vsub.s32 2, %v1155
    %v1157 = vrot.slane %v1140, %v1156
    %v1161 = vmul.f32 %v1143, %v1149
    %v1162 = vmul.f32 %v1143, %v1153
    %v1163 = vmul.f32 %v1143, %v1157
    %1167 = vrot.lane.b32.xlu0 %v1161, 126
    %v1168 = vpop.permute.xlu0 %1167
    %1169 = vrot.lane.b32.xlu0 %v1162, 126
    %v1170 = vpop.permute.xlu0 %1169
    %1171 = vrot.lane.b32.xlu0 %v1163, 126
    %v1172 = vpop.permute.xlu0 %1171
    %v1173 = vsel %vm343, %v1168, %v1170
    %v1174 = vsel %vm343, %v1170, %v1172
    %v1178 = vadd.f32 %v1137, %v1173
    %v1179 = vadd.f32 %v1138, %v1174
    %v1180 = vadd.f32 %v1139, %v1172
    %v1181 = vmul.f32 %v264, %v1056
    %1182 = vset.pattern.permute.xlu0 35
    %1183 = vperm.xlu0 %1182, %v61
    %v1184 = vpop.permute.xlu0 %1183
    %v1187 = vlaneseq
    %v1188 = vshrl.u32 %v1187, 7
    %v1189 = vsub.s32 0, %v1188
    %v1190 = vrot.slane %v1181, %v1189
    %v1191 = vlaneseq
    %v1192 = vshrl.u32 %v1191, 7
    %v1193 = vsub.s32 1, %v1192
    %v1194 = vrot.slane %v1181, %v1193
    %v1195 = vlaneseq
    %v1196 = vshrl.u32 %v1195, 7
    %v1197 = vsub.s32 2, %v1196
    %v1198 = vrot.slane %v1181, %v1197
    %v1202 = vmul.f32 %v1184, %v1190
    %v1203 = vmul.f32 %v1184, %v1194
    %v1204 = vmul.f32 %v1184, %v1198
    %1208 = vrot.lane.b32.xlu0 %v1202, 126
    %v1209 = vpop.permute.xlu0 %1208
    %1210 = vrot.lane.b32.xlu0 %v1203, 126
    %v1211 = vpop.permute.xlu0 %1210
    %1212 = vrot.lane.b32.xlu0 %v1204, 126
    %v1213 = vpop.permute.xlu0 %1212
    %v1214 = vsel %vm343, %v1209, %v1211
    %v1215 = vsel %vm343, %v1211, %v1213
    %v1219 = vadd.f32 %v1178, %v1214
    %v1220 = vadd.f32 %v1179, %v1215
    %v1221 = vadd.f32 %v1180, %v1213
    %1225 = vrot.lane.b32.xlu0 %v842, 112
    %v1226 = vpop.permute.xlu0 %1225
    %1227 = vrot.lane.b32.xlu0 %v843, 112
    %v1228 = vpop.permute.xlu0 %1227
    %1229 = vrot.lane.b32.xlu0 %v844, 112
    %v1230 = vpop.permute.xlu0 %1229
    %vm1231 = vcmask 916480
    %v1232 = vsel %vm1231, %v1226, %v1228
    %v1233 = vsel %vm1231, %v1228, %v1230
    %v1236 = vadd.f32 %v465, %v1232
    %v1237 = vadd.f32 %v466, %v1233
    %1241 = vrot.lane.b32.xlu0 %v1219, 96
    %v1242 = vpop.permute.xlu0 %1241
    %1243 = vrot.lane.b32.xlu0 %v1220, 96
    %v1244 = vpop.permute.xlu0 %1243
    %1245 = vrot.lane.b32.xlu0 %v1221, 96
    %v1246 = vpop.permute.xlu0 %1245
    %vm1247 = vcmask 785408
    %v1248 = vsel %vm1247, %v1242, %v1244
    %v1249 = vsel %vm1247, %v1244, %v1246
    %v1252 = vadd.f32 %v1236, %v1248
    %v1253 = vadd.f32 %v1237, %v1249
    %v1254 = vld [vmem:[%s2] sm:$0xf]
    %1256 = vset.pattern.permute.xlu0 0
    %1257 = vperm.xlu0 %1256, %v1254
    %v1258 = vpop.permute.xlu0 %1257
    %v1260 = vadd.f32 %v1252, %v1258
    %v1261 = vadd.f32 %v1253, %v1258
    %v1262 = vmax.f32 %v1260, 0.0
    %v1263 = vmax.f32 %v1261, 0.0
    %1266 = vrot.lane.b32.xlu0 %v1262, 17
    %v1267 = vpop.permute.xlu0 %1266
    %1268 = vrot.lane.b32.xlu0 %v1263, 17
    %v1269 = vpop.permute.xlu0 %1268
    %v1270 = vsel %vm39, %v1267, %v1269
    %vm1274 = vcmask 1043592
    %1275 = vst.msk [vmem:[#allocation2] sm:$0xf] %vm1274, %v1267
    %1276 = vst [vmem:[#allocation2 + $0x8] sm:$0xf] %v1270
    %vm1277 = vcmask 134144
    %1278 = vst.msk [vmem:[#allocation2 + $0x10] sm:$0xf] %vm1277, %v1269
    %v1279 = vld [vmem:[#allocation2] ss:$8 sm:$0x3]
    %v1280 = vmul.f32 %v1279, %v36
    %v1281 = vld [vmem:[%s3] sm:$0xf]
    %1283 = vset.pattern.permute.xlu0 0
    %1284 = vperm.xlu0 %1283, %v1281
    %v1285 = vpop.permute.xlu0 %1284
    %v1288 = vlaneseq
    %v1289 = vshrl.u32 %v1288, 7
    %v1290 = vsub.s32 0, %v1289
    %v1291 = vrot.slane %v1280, %v1290
    %v1292 = vlaneseq
    %v1293 = vshrl.u32 %v1292, 7
    %v1294 = vsub.s32 1, %v1293
    %v1295 = vrot.slane %v1280, %v1294
    %v1298 = vmul.f32 %v1285, %v1291
    %v1299 = vmul.f32 %v1285, %v1295
    %v1300 = vld [vmem:[%s80] ss:$8 sm:$0x3]
    %v1301 = vmul.f32 %v1300, %v36
    %1302 = vset.pattern.permute.xlu0 1
    %1303 = vperm.xlu0 %1302, %v1281
    %v1304 = vpop.permute.xlu0 %1303
    %v1307 = vlaneseq
    %v1308 = vshrl.u32 %v1307, 7
    %v1309 = vsub.s32 0, %v1308
    %v1310 = vrot.slane %v1301, %v1309
    %v1311 = vlaneseq
    %v1312 = vshrl.u32 %v1311, 7
    %v1313 = vsub.s32 1, %v1312
    %v1314 = vrot.slane %v1301, %v1313
    %v1317 = vmul.f32 %v1304, %v1310
    %v1318 = vmul.f32 %v1304, %v1314
    %v1319 = vadd.f32 %v1298, %v1317
    %v1320 = vadd.f32 %v1299, %v1318
    %v1321 = vld [vmem:[%s102] ss:$8 sm:$0x3]
    %v1322 = vmul.f32 %v1321, %v36
    %1323 = vset.pattern.permute.xlu0 2
    %1324 = vperm.xlu0 %1323, %v1281
    %v1325 = vpop.permute.xlu0 %1324
    %v1328 = vlaneseq
    %v1329 = vshrl.u32 %v1328, 7
    %v1330 = vsub.s32 0, %v1329
    %v1331 = vrot.slane %v1322, %v1330
    %v1332 = vlaneseq
    %v1333 = vshrl.u32 %v1332, 7
    %v1334 = vsub.s32 1, %v1333
    %v1335 = vrot.slane %v1322, %v1334
    %v1338 = vmul.f32 %v1325, %v1331
    %v1339 = vmul.f32 %v1325, %v1335
    %v1340 = vadd.f32 %v1319, %v1338
    %v1341 = vadd.f32 %v1320, %v1339
    %v1342 = vld [vmem:[%s124] ss:$8 sm:$0x3]
    %v1343 = vmul.f32 %v1342, %v36
    %1344 = vset.pattern.permute.xlu0 3
    %1345 = vperm.xlu0 %1344, %v1281
    %v1346 = vpop.permute.xlu0 %1345
    %v1349 = vlaneseq
    %v1350 = vshrl.u32 %v1349, 7
    %v1351 = vsub.s32 0, %v1350
    %v1352 = vrot.slane %v1343, %v1351
    %v1353 = vlaneseq
    %v1354 = vshrl.u32 %v1353, 7
    %v1355 = vsub.s32 1, %v1354
    %v1356 = vrot.slane %v1343, %v1355
    %v1359 = vmul.f32 %v1346, %v1352
    %v1360 = vmul.f32 %v1346, %v1356
    %v1361 = vadd.f32 %v1340, %v1359
    %v1362 = vadd.f32 %v1341, %v1360
    %v1363 = vld [vmem:[#allocation2] ss:$8 sm:$0x7]
    %1364 = vset.pattern.permute.xlu0 4
    %1365 = vperm.xlu0 %1364, %v1281
    %v1366 = vpop.permute.xlu0 %1365
    %v1369 = vlaneseq
    %v1370 = vshrl.u32 %v1369, 7
    %v1371 = vsub.s32 0, %v1370
    %v1372 = vrot.slane %v1363, %v1371
    %v1373 = vlaneseq
    %v1374 = vshrl.u32 %v1373, 7
    %v1375 = vsub.s32 1, %v1374
    %v1376 = vrot.slane %v1363, %v1375
    %v1377 = vlaneseq
    %v1378 = vshrl.u32 %v1377, 7
    %v1379 = vsub.s32 2, %v1378
    %v1380 = vrot.slane %v1363, %v1379
    %v1384 = vmul.f32 %v1366, %v1372
    %v1385 = vmul.f32 %v1366, %v1376
    %v1386 = vmul.f32 %v1366, %v1380
    %1390 = vrot.lane.b32.xlu0 %v1384, 127
    %v1391 = vpop.permute.xlu0 %1390
    %1392 = vrot.lane.b32.xlu0 %v1385, 127
    %v1393 = vpop.permute.xlu0 %1392
    %1394 = vrot.lane.b32.xlu0 %v1386, 127
    %v1395 = vpop.permute.xlu0 %1394
    %v1396 = vsel %vm179, %v1391, %v1393
    %v1397 = vsel %vm179, %v1393, %v1395
    %v1400 = vadd.f32 %v1361, %v1396
    %v1401 = vadd.f32 %v1362, %v1397
    %v1402 = vld [vmem:[%s80] ss:$8 sm:$0x7]
    %1403 = vset.pattern.permute.xlu0 5
    %1404 = vperm.xlu0 %1403, %v1281
    %v1405 = vpop.permute.xlu0 %1404
    %v1408 = vlaneseq
    %v1409 = vshrl.u32 %v1408, 7
    %v1410 = vsub.s32 0, %v1409
    %v1411 = vrot.slane %v1402, %v1410
    %v1412 = vlaneseq
    %v1413 = vshrl.u32 %v1412, 7
    %v1414 = vsub.s32 1, %v1413
    %v1415 = vrot.slane %v1402, %v1414
    %v1416 = vlaneseq
    %v1417 = vshrl.u32 %v1416, 7
    %v1418 = vsub.s32 2, %v1417
    %v1419 = vrot.slane %v1402, %v1418
    %v1423 = vmul.f32 %v1405, %v1411
    %v1424 = vmul.f32 %v1405, %v1415
    %v1425 = vmul.f32 %v1405, %v1419
    %1429 = vrot.lane.b32.xlu0 %v1423, 127
    %v1430 = vpop.permute.xlu0 %1429
    %1431 = vrot.lane.b32.xlu0 %v1424, 127
    %v1432 = vpop.permute.xlu0 %1431
    %1433 = vrot.lane.b32.xlu0 %v1425, 127
    %v1434 = vpop.permute.xlu0 %1433
    %v1435 = vsel %vm179, %v1430, %v1432
    %v1436 = vsel %vm179, %v1432, %v1434
    %v1439 = vadd.f32 %v1400, %v1435
    %v1440 = vadd.f32 %v1401, %v1436
    %v1441 = vld [vmem:[%s102] ss:$8 sm:$0x7]
    %1442 = vset.pattern.permute.xlu0 6
    %1443 = vperm.xlu0 %1442, %v1281
    %v1444 = vpop.permute.xlu0 %1443
    %v1447 = vlaneseq
    %v1448 = vshrl.u32 %v1447, 7
    %v1449 = vsub.s32 0, %v1448
    %v1450 = vrot.slane %v1441, %v1449
    %v1451 = vlaneseq
    %v1452 = vshrl.u32 %v1451, 7
    %v1453 = vsub.s32 1, %v1452
    %v1454 = vrot.slane %v1441, %v1453
    %v1455 = vlaneseq
    %v1456 = vshrl.u32 %v1455, 7
    %v1457 = vsub.s32 2, %v1456
    %v1458 = vrot.slane %v1441, %v1457
    %v1462 = vmul.f32 %v1444, %v1450
    %v1463 = vmul.f32 %v1444, %v1454
    %v1464 = vmul.f32 %v1444, %v1458
    %1468 = vrot.lane.b32.xlu0 %v1462, 127
    %v1469 = vpop.permute.xlu0 %1468
    %1470 = vrot.lane.b32.xlu0 %v1463, 127
    %v1471 = vpop.permute.xlu0 %1470
    %1472 = vrot.lane.b32.xlu0 %v1464, 127
    %v1473 = vpop.permute.xlu0 %1472
    %v1474 = vsel %vm179, %v1469, %v1471
    %v1475 = vsel %vm179, %v1471, %v1473
    %v1478 = vadd.f32 %v1439, %v1474
    %v1479 = vadd.f32 %v1440, %v1475
    %v1480 = vld [vmem:[%s124] ss:$8 sm:$0x7]
    %1481 = vset.pattern.permute.xlu0 7
    %1482 = vperm.xlu0 %1481, %v1281
    %v1483 = vpop.permute.xlu0 %1482
    %v1486 = vlaneseq
    %v1487 = vshrl.u32 %v1486, 7
    %v1488 = vsub.s32 0, %v1487
    %v1489 = vrot.slane %v1480, %v1488
    %v1490 = vlaneseq
    %v1491 = vshrl.u32 %v1490, 7
    %v1492 = vsub.s32 1, %v1491
    %v1493 = vrot.slane %v1480, %v1492
    %v1494 = vlaneseq
    %v1495 = vshrl.u32 %v1494, 7
    %v1496 = vsub.s32 2, %v1495
    %v1497 = vrot.slane %v1480, %v1496
    %v1501 = vmul.f32 %v1483, %v1489
    %v1502 = vmul.f32 %v1483, %v1493
    %v1503 = vmul.f32 %v1483, %v1497
    %1507 = vrot.lane.b32.xlu0 %v1501, 127
    %v1508 = vpop.permute.xlu0 %1507
    %1509 = vrot.lane.b32.xlu0 %v1502, 127
    %v1510 = vpop.permute.xlu0 %1509
    %1511 = vrot.lane.b32.xlu0 %v1503, 127
    %v1512 = vpop.permute.xlu0 %1511
    %v1513 = vsel %vm179, %v1508, %v1510
    %v1514 = vsel %vm179, %v1510, %v1512
    %v1517 = vadd.f32 %v1478, %v1513
    %v1518 = vadd.f32 %v1479, %v1514
    %v1519 = vmul.f32 %v1363, %v308
    %1520 = vset.pattern.permute.xlu0 8
    %1521 = vperm.xlu0 %1520, %v1281
    %v1522 = vpop.permute.xlu0 %1521
    %v1525 = vlaneseq
    %v1526 = vshrl.u32 %v1525, 7
    %v1527 = vsub.s32 0, %v1526
    %v1528 = vrot.slane %v1519, %v1527
    %v1529 = vlaneseq
    %v1530 = vshrl.u32 %v1529, 7
    %v1531 = vsub.s32 1, %v1530
    %v1532 = vrot.slane %v1519, %v1531
    %v1533 = vlaneseq
    %v1534 = vshrl.u32 %v1533, 7
    %v1535 = vsub.s32 2, %v1534
    %v1536 = vrot.slane %v1519, %v1535
    %v1540 = vmul.f32 %v1522, %v1528
    %v1541 = vmul.f32 %v1522, %v1532
    %v1542 = vmul.f32 %v1522, %v1536
    %1546 = vrot.lane.b32.xlu0 %v1540, 126
    %v1547 = vpop.permute.xlu0 %1546
    %1548 = vrot.lane.b32.xlu0 %v1541, 126
    %v1549 = vpop.permute.xlu0 %1548
    %1550 = vrot.lane.b32.xlu0 %v1542, 126
    %v1551 = vpop.permute.xlu0 %1550
    %v1552 = vsel %vm343, %v1547, %v1549
    %v1553 = vsel %vm343, %v1549, %v1551
    %v1556 = vadd.f32 %v1517, %v1552
    %v1557 = vadd.f32 %v1518, %v1553
    %v1558 = vmul.f32 %v1402, %v308
    %1559 = vset.pattern.permute.xlu0 9
    %1560 = vperm.xlu0 %1559, %v1281
    %v1561 = vpop.permute.xlu0 %1560
    %v1564 = vlaneseq
    %v1565 = vshrl.u32 %v1564, 7
    %v1566 = vsub.s32 0, %v1565
    %v1567 = vrot.slane %v1558, %v1566
    %v1568 = vlaneseq
    %v1569 = vshrl.u32 %v1568, 7
    %v1570 = vsub.s32 1, %v1569
    %v1571 = vrot.slane %v1558, %v1570
    %v1572 = vlaneseq
    %v1573 = vshrl.u32 %v1572, 7
    %v1574 = vsub.s32 2, %v1573
    %v1575 = vrot.slane %v1558, %v1574
    %v1579 = vmul.f32 %v1561, %v1567
    %v1580 = vmul.f32 %v1561, %v1571
    %v1581 = vmul.f32 %v1561, %v1575
    %1585 = vrot.lane.b32.xlu0 %v1579, 126
    %v1586 = vpop.permute.xlu0 %1585
    %1587 = vrot.lane.b32.xlu0 %v1580, 126
    %v1588 = vpop.permute.xlu0 %1587
    %1589 = vrot.lane.b32.xlu0 %v1581, 126
    %v1590 = vpop.permute.xlu0 %1589
    %v1591 = vsel %vm343, %v1586, %v1588
    %v1592 = vsel %vm343, %v1588, %v1590
    %v1595 = vadd.f32 %v1556, %v1591
    %v1596 = vadd.f32 %v1557, %v1592
    %v1597 = vmul.f32 %v1441, %v308
    %1598 = vset.pattern.permute.xlu0 10
    %1599 = vperm.xlu0 %1598, %v1281
    %v1600 = vpop.permute.xlu0 %1599
    %v1603 = vlaneseq
    %v1604 = vshrl.u32 %v1603, 7
    %v1605 = vsub.s32 0, %v1604
    %v1606 = vrot.slane %v1597, %v1605
    %v1607 = vlaneseq
    %v1608 = vshrl.u32 %v1607, 7
    %v1609 = vsub.s32 1, %v1608
    %v1610 = vrot.slane %v1597, %v1609
    %v1611 = vlaneseq
    %v1612 = vshrl.u32 %v1611, 7
    %v1613 = vsub.s32 2, %v1612
    %v1614 = vrot.slane %v1597, %v1613
    %v1618 = vmul.f32 %v1600, %v1606
    %v1619 = vmul.f32 %v1600, %v1610
    %v1620 = vmul.f32 %v1600, %v1614
    %1624 = vrot.lane.b32.xlu0 %v1618, 126
    %v1625 = vpop.permute.xlu0 %1624
    %1626 = vrot.lane.b32.xlu0 %v1619, 126
    %v1627 = vpop.permute.xlu0 %1626
    %1628 = vrot.lane.b32.xlu0 %v1620, 126
    %v1629 = vpop.permute.xlu0 %1628
    %v1630 = vsel %vm343, %v1625, %v1627
    %v1631 = vsel %vm343, %v1627, %v1629
    %v1634 = vadd.f32 %v1595, %v1630
    %v1635 = vadd.f32 %v1596, %v1631
    %v1636 = vmul.f32 %v1480, %v308
    %1637 = vset.pattern.permute.xlu0 11
    %1638 = vperm.xlu0 %1637, %v1281
    %v1639 = vpop.permute.xlu0 %1638
    %v1642 = vlaneseq
    %v1643 = vshrl.u32 %v1642, 7
    %v1644 = vsub.s32 0, %v1643
    %v1645 = vrot.slane %v1636, %v1644
    %v1646 = vlaneseq
    %v1647 = vshrl.u32 %v1646, 7
    %v1648 = vsub.s32 1, %v1647
    %v1649 = vrot.slane %v1636, %v1648
    %v1650 = vlaneseq
    %v1651 = vshrl.u32 %v1650, 7
    %v1652 = vsub.s32 2, %v1651
    %v1653 = vrot.slane %v1636, %v1652
    %v1657 = vmul.f32 %v1639, %v1645
    %v1658 = vmul.f32 %v1639, %v1649
    %v1659 = vmul.f32 %v1639, %v1653
    %1663 = vrot.lane.b32.xlu0 %v1657, 126
    %v1664 = vpop.permute.xlu0 %1663
    %1665 = vrot.lane.b32.xlu0 %v1658, 126
    %v1666 = vpop.permute.xlu0 %1665
    %1667 = vrot.lane.b32.xlu0 %v1659, 126
    %v1668 = vpop.permute.xlu0 %1667
    %v1669 = vsel %vm343, %v1664, %v1666
    %v1670 = vsel %vm343, %v1666, %v1668
    %v1673 = vadd.f32 %v1634, %v1669
    %v1674 = vadd.f32 %v1635, %v1670
    %v1675 = vmul.f32 %v1363, %v472
    %1676 = vset.pattern.permute.xlu0 12
    %1677 = vperm.xlu0 %1676, %v1281
    %v1678 = vpop.permute.xlu0 %1677
    %v1681 = vlaneseq
    %v1682 = vshrl.u32 %v1681, 7
    %v1683 = vsub.s32 0, %v1682
    %v1684 = vrot.slane %v1675, %v1683
    %v1685 = vlaneseq
    %v1686 = vshrl.u32 %v1685, 7
    %v1687 = vsub.s32 1, %v1686
    %v1688 = vrot.slane %v1675, %v1687
    %v1689 = vlaneseq
    %v1690 = vshrl.u32 %v1689, 7
    %v1691 = vsub.s32 2, %v1690
    %v1692 = vrot.slane %v1675, %v1691
    %v1696 = vmul.f32 %v1678, %v1684
    %v1697 = vmul.f32 %v1678, %v1688
    %v1698 = vmul.f32 %v1678, %v1692
    %v1699 = vmul.f32 %v1402, %v472
    %1700 = vset.pattern.permute.xlu0 13
    %1701 = vperm.xlu0 %1700, %v1281
    %v1702 = vpop.permute.xlu0 %1701
    %v1705 = vlaneseq
    %v1706 = vshrl.u32 %v1705, 7
    %v1707 = vsub.s32 0, %v1706
    %v1708 = vrot.slane %v1699, %v1707
    %v1709 = vlaneseq
    %v1710 = vshrl.u32 %v1709, 7
    %v1711 = vsub.s32 1, %v1710
    %v1712 = vrot.slane %v1699, %v1711
    %v1713 = vlaneseq
    %v1714 = vshrl.u32 %v1713, 7
    %v1715 = vsub.s32 2, %v1714
    %v1716 = vrot.slane %v1699, %v1715
    %v1720 = vmul.f32 %v1702, %v1708
    %v1721 = vmul.f32 %v1702, %v1712
    %v1722 = vmul.f32 %v1702, %v1716
    %v1723 = vadd.f32 %v1696, %v1720
    %v1724 = vadd.f32 %v1697, %v1721
    %v1725 = vadd.f32 %v1698, %v1722
    %v1726 = vmul.f32 %v1441, %v472
    %1727 = vset.pattern.permute.xlu0 14
    %1728 = vperm.xlu0 %1727, %v1281
    %v1729 = vpop.permute.xlu0 %1728
    %v1732 = vlaneseq
    %v1733 = vshrl.u32 %v1732, 7
    %v1734 = vsub.s32 0, %v1733
    %v1735 = vrot.slane %v1726, %v1734
    %v1736 = vlaneseq
    %v1737 = vshrl.u32 %v1736, 7
    %v1738 = vsub.s32 1, %v1737
    %v1739 = vrot.slane %v1726, %v1738
    %v1740 = vlaneseq
    %v1741 = vshrl.u32 %v1740, 7
    %v1742 = vsub.s32 2, %v1741
    %v1743 = vrot.slane %v1726, %v1742
    %v1747 = vmul.f32 %v1729, %v1735
    %v1748 = vmul.f32 %v1729, %v1739
    %v1749 = vmul.f32 %v1729, %v1743
    %v1750 = vadd.f32 %v1723, %v1747
    %v1751 = vadd.f32 %v1724, %v1748
    %v1752 = vadd.f32 %v1725, %v1749
    %v1753 = vmul.f32 %v1480, %v472
    %1754 = vset.pattern.permute.xlu0 15
    %1755 = vperm.xlu0 %1754, %v1281
    %v1756 = vpop.permute.xlu0 %1755
    %v1759 = vlaneseq
    %v1760 = vshrl.u32 %v1759, 7
    %v1761 = vsub.s32 0, %v1760
    %v1762 = vrot.slane %v1753, %v1761
    %v1763 = vlaneseq
    %v1764 = vshrl.u32 %v1763, 7
    %v1765 = vsub.s32 1, %v1764
    %v1766 = vrot.slane %v1753, %v1765
    %v1767 = vlaneseq
    %v1768 = vshrl.u32 %v1767, 7
    %v1769 = vsub.s32 2, %v1768
    %v1770 = vrot.slane %v1753, %v1769
    %v1774 = vmul.f32 %v1756, %v1762
    %v1775 = vmul.f32 %v1756, %v1766
    %v1776 = vmul.f32 %v1756, %v1770
    %v1777 = vadd.f32 %v1750, %v1774
    %v1778 = vadd.f32 %v1751, %v1775
    %v1779 = vadd.f32 %v1752, %v1776
    %1780 = vset.pattern.permute.xlu0 16
    %1781 = vperm.xlu0 %1780, %v1281
    %v1782 = vpop.permute.xlu0 %1781
    %v1784 = vmul.f32 %v1782, %v1372
    %v1785 = vmul.f32 %v1782, %v1376
    %v1786 = vmul.f32 %v1782, %v1380
    %1790 = vrot.lane.b32.xlu0 %v1784, 127
    %v1791 = vpop.permute.xlu0 %1790
    %1792 = vrot.lane.b32.xlu0 %v1785, 127
    %v1793 = vpop.permute.xlu0 %1792
    %1794 = vrot.lane.b32.xlu0 %v1786, 127
    %v1795 = vpop.permute.xlu0 %1794
    %v1796 = vsel %vm179, %v1791, %v1793
    %v1797 = vsel %vm179, %v1793, %v1795
    %v1801 = vadd.f32 %v1777, %v1796
    %v1802 = vadd.f32 %v1778, %v1797
    %v1803 = vadd.f32 %v1779, %v1795
    %1804 = vset.pattern.permute.xlu0 17
    %1805 = vperm.xlu0 %1804, %v1281
    %v1806 = vpop.permute.xlu0 %1805
    %v1808 = vmul.f32 %v1806, %v1411
    %v1809 = vmul.f32 %v1806, %v1415
    %v1810 = vmul.f32 %v1806, %v1419
    %1814 = vrot.lane.b32.xlu0 %v1808, 127
    %v1815 = vpop.permute.xlu0 %1814
    %1816 = vrot.lane.b32.xlu0 %v1809, 127
    %v1817 = vpop.permute.xlu0 %1816
    %1818 = vrot.lane.b32.xlu0 %v1810, 127
    %v1819 = vpop.permute.xlu0 %1818
    %v1820 = vsel %vm179, %v1815, %v1817
    %v1821 = vsel %vm179, %v1817, %v1819
    %v1825 = vadd.f32 %v1801, %v1820
    %v1826 = vadd.f32 %v1802, %v1821
    %v1827 = vadd.f32 %v1803, %v1819
    %1828 = vset.pattern.permute.xlu0 18
    %1829 = vperm.xlu0 %1828, %v1281
    %v1830 = vpop.permute.xlu0 %1829
    %v1832 = vmul.f32 %v1830, %v1450
    %v1833 = vmul.f32 %v1830, %v1454
    %v1834 = vmul.f32 %v1830, %v1458
    %1838 = vrot.lane.b32.xlu0 %v1832, 127
    %v1839 = vpop.permute.xlu0 %1838
    %1840 = vrot.lane.b32.xlu0 %v1833, 127
    %v1841 = vpop.permute.xlu0 %1840
    %1842 = vrot.lane.b32.xlu0 %v1834, 127
    %v1843 = vpop.permute.xlu0 %1842
    %v1844 = vsel %vm179, %v1839, %v1841
    %v1845 = vsel %vm179, %v1841, %v1843
    %v1849 = vadd.f32 %v1825, %v1844
    %v1850 = vadd.f32 %v1826, %v1845
    %v1851 = vadd.f32 %v1827, %v1843
    %1852 = vset.pattern.permute.xlu0 19
    %1853 = vperm.xlu0 %1852, %v1281
    %v1854 = vpop.permute.xlu0 %1853
    %v1856 = vmul.f32 %v1854, %v1489
    %v1857 = vmul.f32 %v1854, %v1493
    %v1858 = vmul.f32 %v1854, %v1497
    %1862 = vrot.lane.b32.xlu0 %v1856, 127
    %v1863 = vpop.permute.xlu0 %1862
    %1864 = vrot.lane.b32.xlu0 %v1857, 127
    %v1865 = vpop.permute.xlu0 %1864
    %1866 = vrot.lane.b32.xlu0 %v1858, 127
    %v1867 = vpop.permute.xlu0 %1866
    %v1868 = vsel %vm179, %v1863, %v1865
    %v1869 = vsel %vm179, %v1865, %v1867
    %v1873 = vadd.f32 %v1849, %v1868
    %v1874 = vadd.f32 %v1850, %v1869
    %v1875 = vadd.f32 %v1851, %v1867
    %v1876 = vmul.f32 %v1363, %v679
    %1877 = vset.pattern.permute.xlu0 20
    %1878 = vperm.xlu0 %1877, %v1281
    %v1879 = vpop.permute.xlu0 %1878
    %v1882 = vlaneseq
    %v1883 = vshrl.u32 %v1882, 7
    %v1884 = vsub.s32 0, %v1883
    %v1885 = vrot.slane %v1876, %v1884
    %v1886 = vlaneseq
    %v1887 = vshrl.u32 %v1886, 7
    %v1888 = vsub.s32 1, %v1887
    %v1889 = vrot.slane %v1876, %v1888
    %v1890 = vlaneseq
    %v1891 = vshrl.u32 %v1890, 7
    %v1892 = vsub.s32 2, %v1891
    %v1893 = vrot.slane %v1876, %v1892
    %v1897 = vmul.f32 %v1879, %v1885
    %v1898 = vmul.f32 %v1879, %v1889
    %v1899 = vmul.f32 %v1879, %v1893
    %1903 = vrot.lane.b32.xlu0 %v1897, 126
    %v1904 = vpop.permute.xlu0 %1903
    %1905 = vrot.lane.b32.xlu0 %v1898, 126
    %v1906 = vpop.permute.xlu0 %1905
    %1907 = vrot.lane.b32.xlu0 %v1899, 126
    %v1908 = vpop.permute.xlu0 %1907
    %v1909 = vsel %vm343, %v1904, %v1906
    %v1910 = vsel %vm343, %v1906, %v1908
    %v1914 = vadd.f32 %v1873, %v1909
    %v1915 = vadd.f32 %v1874, %v1910
    %v1916 = vadd.f32 %v1875, %v1908
    %v1917 = vmul.f32 %v1402, %v679
    %1918 = vset.pattern.permute.xlu0 21
    %1919 = vperm.xlu0 %1918, %v1281
    %v1920 = vpop.permute.xlu0 %1919
    %v1923 = vlaneseq
    %v1924 = vshrl.u32 %v1923, 7
    %v1925 = vsub.s32 0, %v1924
    %v1926 = vrot.slane %v1917, %v1925
    %v1927 = vlaneseq
    %v1928 = vshrl.u32 %v1927, 7
    %v1929 = vsub.s32 1, %v1928
    %v1930 = vrot.slane %v1917, %v1929
    %v1931 = vlaneseq
    %v1932 = vshrl.u32 %v1931, 7
    %v1933 = vsub.s32 2, %v1932
    %v1934 = vrot.slane %v1917, %v1933
    %v1938 = vmul.f32 %v1920, %v1926
    %v1939 = vmul.f32 %v1920, %v1930
    %v1940 = vmul.f32 %v1920, %v1934
    %1944 = vrot.lane.b32.xlu0 %v1938, 126
    %v1945 = vpop.permute.xlu0 %1944
    %1946 = vrot.lane.b32.xlu0 %v1939, 126
    %v1947 = vpop.permute.xlu0 %1946
    %1948 = vrot.lane.b32.xlu0 %v1940, 126
    %v1949 = vpop.permute.xlu0 %1948
    %v1950 = vsel %vm343, %v1945, %v1947
    %v1951 = vsel %vm343, %v1947, %v1949
    %v1955 = vadd.f32 %v1914, %v1950
    %v1956 = vadd.f32 %v1915, %v1951
    %v1957 = vadd.f32 %v1916, %v1949
    %v1958 = vmul.f32 %v1441, %v679
    %1959 = vset.pattern.permute.xlu0 22
    %1960 = vperm.xlu0 %1959, %v1281
    %v1961 = vpop.permute.xlu0 %1960
    %v1964 = vlaneseq
    %v1965 = vshrl.u32 %v1964, 7
    %v1966 = vsub.s32 0, %v1965
    %v1967 = vrot.slane %v1958, %v1966
    %v1968 = vlaneseq
    %v1969 = vshrl.u32 %v1968, 7
    %v1970 = vsub.s32 1, %v1969
    %v1971 = vrot.slane %v1958, %v1970
    %v1972 = vlaneseq
    %v1973 = vshrl.u32 %v1972, 7
    %v1974 = vsub.s32 2, %v1973
    %v1975 = vrot.slane %v1958, %v1974
    %v1979 = vmul.f32 %v1961, %v1967
    %v1980 = vmul.f32 %v1961, %v1971
    %v1981 = vmul.f32 %v1961, %v1975
    %1985 = vrot.lane.b32.xlu0 %v1979, 126
    %v1986 = vpop.permute.xlu0 %1985
    %1987 = vrot.lane.b32.xlu0 %v1980, 126
    %v1988 = vpop.permute.xlu0 %1987
    %1989 = vrot.lane.b32.xlu0 %v1981, 126
    %v1990 = vpop.permute.xlu0 %1989
    %v1991 = vsel %vm343, %v1986, %v1988
    %v1992 = vsel %vm343, %v1988, %v1990
    %v1996 = vadd.f32 %v1955, %v1991
    %v1997 = vadd.f32 %v1956, %v1992
    %v1998 = vadd.f32 %v1957, %v1990
    %v1999 = vmul.f32 %v1480, %v679
    %2000 = vset.pattern.permute.xlu0 23
    %2001 = vperm.xlu0 %2000, %v1281
    %v2002 = vpop.permute.xlu0 %2001
    %v2005 = vlaneseq
    %v2006 = vshrl.u32 %v2005, 7
    %v2007 = vsub.s32 0, %v2006
    %v2008 = vrot.slane %v1999, %v2007
    %v2009 = vlaneseq
    %v2010 = vshrl.u32 %v2009, 7
    %v2011 = vsub.s32 1, %v2010
    %v2012 = vrot.slane %v1999, %v2011
    %v2013 = vlaneseq
    %v2014 = vshrl.u32 %v2013, 7
    %v2015 = vsub.s32 2, %v2014
    %v2016 = vrot.slane %v1999, %v2015
    %v2020 = vmul.f32 %v2002, %v2008
    %v2021 = vmul.f32 %v2002, %v2012
    %v2022 = vmul.f32 %v2002, %v2016
    %2026 = vrot.lane.b32.xlu0 %v2020, 126
    %v2027 = vpop.permute.xlu0 %2026
    %2028 = vrot.lane.b32.xlu0 %v2021, 126
    %v2029 = vpop.permute.xlu0 %2028
    %2030 = vrot.lane.b32.xlu0 %v2022, 126
    %v2031 = vpop.permute.xlu0 %2030
    %v2032 = vsel %vm343, %v2027, %v2029
    %v2033 = vsel %vm343, %v2029, %v2031
    %v2037 = vadd.f32 %v1996, %v2032
    %v2038 = vadd.f32 %v1997, %v2033
    %v2039 = vadd.f32 %v1998, %v2031
    %v2040 = vmul.f32 %v1363, %v849
    %2041 = vset.pattern.permute.xlu0 24
    %2042 = vperm.xlu0 %2041, %v1281
    %v2043 = vpop.permute.xlu0 %2042
    %v2046 = vlaneseq
    %v2047 = vshrl.u32 %v2046, 7
    %v2048 = vsub.s32 0, %v2047
    %v2049 = vrot.slane %v2040, %v2048
    %v2050 = vlaneseq
    %v2051 = vshrl.u32 %v2050, 7
    %v2052 = vsub.s32 1, %v2051
    %v2053 = vrot.slane %v2040, %v2052
    %v2054 = vlaneseq
    %v2055 = vshrl.u32 %v2054, 7
    %v2056 = vsub.s32 2, %v2055
    %v2057 = vrot.slane %v2040, %v2056
    %v2061 = vmul.f32 %v2043, %v2049
    %v2062 = vmul.f32 %v2043, %v2053
    %v2063 = vmul.f32 %v2043, %v2057
    %v2064 = vmul.f32 %v1402, %v849
    %2065 = vset.pattern.permute.xlu0 25
    %2066 = vperm.xlu0 %2065, %v1281
    %v2067 = vpop.permute.xlu0 %2066
    %v2070 = vlaneseq
    %v2071 = vshrl.u32 %v2070, 7
    %v2072 = vsub.s32 0, %v2071
    %v2073 = vrot.slane %v2064, %v2072
    %v2074 = vlaneseq
    %v2075 = vshrl.u32 %v2074, 7
    %v2076 = vsub.s32 1, %v2075
    %v2077 = vrot.slane %v2064, %v2076
    %v2078 = vlaneseq
    %v2079 = vshrl.u32 %v2078, 7
    %v2080 = vsub.s32 2, %v2079
    %v2081 = vrot.slane %v2064, %v2080
    %v2085 = vmul.f32 %v2067, %v2073
    %v2086 = vmul.f32 %v2067, %v2077
    %v2087 = vmul.f32 %v2067, %v2081
    %v2088 = vadd.f32 %v2061, %v2085
    %v2089 = vadd.f32 %v2062, %v2086
    %v2090 = vadd.f32 %v2063, %v2087
    %v2091 = vmul.f32 %v1441, %v849
    %2092 = vset.pattern.permute.xlu0 26
    %2093 = vperm.xlu0 %2092, %v1281
    %v2094 = vpop.permute.xlu0 %2093
    %v2097 = vlaneseq
    %v2098 = vshrl.u32 %v2097, 7
    %v2099 = vsub.s32 0, %v2098
    %v2100 = vrot.slane %v2091, %v2099
    %v2101 = vlaneseq
    %v2102 = vshrl.u32 %v2101, 7
    %v2103 = vsub.s32 1, %v2102
    %v2104 = vrot.slane %v2091, %v2103
    %v2105 = vlaneseq
    %v2106 = vshrl.u32 %v2105, 7
    %v2107 = vsub.s32 2, %v2106
    %v2108 = vrot.slane %v2091, %v2107
    %v2112 = vmul.f32 %v2094, %v2100
    %v2113 = vmul.f32 %v2094, %v2104
    %v2114 = vmul.f32 %v2094, %v2108
    %v2115 = vadd.f32 %v2088, %v2112
    %v2116 = vadd.f32 %v2089, %v2113
    %v2117 = vadd.f32 %v2090, %v2114
    %v2118 = vmul.f32 %v1480, %v849
    %2119 = vset.pattern.permute.xlu0 27
    %2120 = vperm.xlu0 %2119, %v1281
    %v2121 = vpop.permute.xlu0 %2120
    %v2124 = vlaneseq
    %v2125 = vshrl.u32 %v2124, 7
    %v2126 = vsub.s32 0, %v2125
    %v2127 = vrot.slane %v2118, %v2126
    %v2128 = vlaneseq
    %v2129 = vshrl.u32 %v2128, 7
    %v2130 = vsub.s32 1, %v2129
    %v2131 = vrot.slane %v2118, %v2130
    %v2132 = vlaneseq
    %v2133 = vshrl.u32 %v2132, 7
    %v2134 = vsub.s32 2, %v2133
    %v2135 = vrot.slane %v2118, %v2134
    %v2139 = vmul.f32 %v2121, %v2127
    %v2140 = vmul.f32 %v2121, %v2131
    %v2141 = vmul.f32 %v2121, %v2135
    %v2142 = vadd.f32 %v2115, %v2139
    %v2143 = vadd.f32 %v2116, %v2140
    %v2144 = vadd.f32 %v2117, %v2141
    %2145 = vset.pattern.permute.xlu0 28
    %2146 = vperm.xlu0 %2145, %v1281
    %v2147 = vpop.permute.xlu0 %2146
    %v2149 = vmul.f32 %v2147, %v1372
    %v2150 = vmul.f32 %v2147, %v1376
    %v2151 = vmul.f32 %v2147, %v1380
    %2155 = vrot.lane.b32.xlu0 %v2149, 127
    %v2156 = vpop.permute.xlu0 %2155
    %2157 = vrot.lane.b32.xlu0 %v2150, 127
    %v2158 = vpop.permute.xlu0 %2157
    %2159 = vrot.lane.b32.xlu0 %v2151, 127
    %v2160 = vpop.permute.xlu0 %2159
    %v2161 = vsel %vm179, %v2156, %v2158
    %v2162 = vsel %vm179, %v2158, %v2160
    %v2166 = vadd.f32 %v2142, %v2161
    %v2167 = vadd.f32 %v2143, %v2162
    %v2168 = vadd.f32 %v2144, %v2160
    %2169 = vset.pattern.permute.xlu0 29
    %2170 = vperm.xlu0 %2169, %v1281
    %v2171 = vpop.permute.xlu0 %2170
    %v2173 = vmul.f32 %v2171, %v1411
    %v2174 = vmul.f32 %v2171, %v1415
    %v2175 = vmul.f32 %v2171, %v1419
    %2179 = vrot.lane.b32.xlu0 %v2173, 127
    %v2180 = vpop.permute.xlu0 %2179
    %2181 = vrot.lane.b32.xlu0 %v2174, 127
    %v2182 = vpop.permute.xlu0 %2181
    %2183 = vrot.lane.b32.xlu0 %v2175, 127
    %v2184 = vpop.permute.xlu0 %2183
    %v2185 = vsel %vm179, %v2180, %v2182
    %v2186 = vsel %vm179, %v2182, %v2184
    %v2190 = vadd.f32 %v2166, %v2185
    %v2191 = vadd.f32 %v2167, %v2186
    %v2192 = vadd.f32 %v2168, %v2184
    %2193 = vset.pattern.permute.xlu0 30
    %2194 = vperm.xlu0 %2193, %v1281
    %v2195 = vpop.permute.xlu0 %2194
    %v2197 = vmul.f32 %v2195, %v1450
    %v2198 = vmul.f32 %v2195, %v1454
    %v2199 = vmul.f32 %v2195, %v1458
    %2203 = vrot.lane.b32.xlu0 %v2197, 127
    %v2204 = vpop.permute.xlu0 %2203
    %2205 = vrot.lane.b32.xlu0 %v2198, 127
    %v2206 = vpop.permute.xlu0 %2205
    %2207 = vrot.lane.b32.xlu0 %v2199, 127
    %v2208 = vpop.permute.xlu0 %2207
    %v2209 = vsel %vm179, %v2204, %v2206
    %v2210 = vsel %vm179, %v2206, %v2208
    %v2214 = vadd.f32 %v2190, %v2209
    %v2215 = vadd.f32 %v2191, %v2210
    %v2216 = vadd.f32 %v2192, %v2208
    %2217 = vset.pattern.permute.xlu0 31
    %2218 = vperm.xlu0 %2217, %v1281
    %v2219 = vpop.permute.xlu0 %2218
    %v2221 = vmul.f32 %v2219, %v1489
    %v2222 = vmul.f32 %v2219, %v1493
    %v2223 = vmul.f32 %v2219, %v1497
    %2227 = vrot.lane.b32.xlu0 %v2221, 127
    %v2228 = vpop.permute.xlu0 %2227
    %2229 = vrot.lane.b32.xlu0 %v2222, 127
    %v2230 = vpop.permute.xlu0 %2229
    %2231 = vrot.lane.b32.xlu0 %v2223, 127
    %v2232 = vpop.permute.xlu0 %2231
    %v2233 = vsel %vm179, %v2228, %v2230
    %v2234 = vsel %vm179, %v2230, %v2232
    %v2238 = vadd.f32 %v2214, %v2233
    %v2239 = vadd.f32 %v2215, %v2234
    %v2240 = vadd.f32 %v2216, %v2232
    %v2241 = vmul.f32 %v1363, %v1056
    %2242 = vset.pattern.permute.xlu0 32
    %2243 = vperm.xlu0 %2242, %v1281
    %v2244 = vpop.permute.xlu0 %2243
    %v2247 = vlaneseq
    %v2248 = vshrl.u32 %v2247, 7
    %v2249 = vsub.s32 0, %v2248
    %v2250 = vrot.slane %v2241, %v2249
    %v2251 = vlaneseq
    %v2252 = vshrl.u32 %v2251, 7
    %v2253 = vsub.s32 1, %v2252
    %v2254 = vrot.slane %v2241, %v2253
    %v2255 = vlaneseq
    %v2256 = vshrl.u32 %v2255, 7
    %v2257 = vsub.s32 2, %v2256
    %v2258 = vrot.slane %v2241, %v2257
    %v2262 = vmul.f32 %v2244, %v2250
    %v2263 = vmul.f32 %v2244, %v2254
    %v2264 = vmul.f32 %v2244, %v2258
    %2268 = vrot.lane.b32.xlu0 %v2262, 126
    %v2269 = vpop.permute.xlu0 %2268
    %2270 = vrot.lane.b32.xlu0 %v2263, 126
    %v2271 = vpop.permute.xlu0 %2270
    %2272 = vrot.lane.b32.xlu0 %v2264, 126
    %v2273 = vpop.permute.xlu0 %2272
    %v2274 = vsel %vm343, %v2269, %v2271
    %v2275 = vsel %vm343, %v2271, %v2273
    %v2279 = vadd.f32 %v2238, %v2274
    %v2280 = vadd.f32 %v2239, %v2275
    %v2281 = vadd.f32 %v2240, %v2273
    %v2282 = vmul.f32 %v1402, %v1056
    %2283 = vset.pattern.permute.xlu0 33
    %2284 = vperm.xlu0 %2283, %v1281
    %v2285 = vpop.permute.xlu0 %2284
    %v2288 = vlaneseq
    %v2289 = vshrl.u32 %v2288, 7
    %v2290 = vsub.s32 0, %v2289
    %v2291 = vrot.slane %v2282, %v2290
    %v2292 = vlaneseq
    %v2293 = vshrl.u32 %v2292, 7
    %v2294 = vsub.s32 1, %v2293
    %v2295 = vrot.slane %v2282, %v2294
    %v2296 = vlaneseq
    %v2297 = vshrl.u32 %v2296, 7
    %v2298 = vsub.s32 2, %v2297
    %v2299 = vrot.slane %v2282, %v2298
    %v2303 = vmul.f32 %v2285, %v2291
    %v2304 = vmul.f32 %v2285, %v2295
    %v2305 = vmul.f32 %v2285, %v2299
    %2309 = vrot.lane.b32.xlu0 %v2303, 126
    %v2310 = vpop.permute.xlu0 %2309
    %2311 = vrot.lane.b32.xlu0 %v2304, 126
    %v2312 = vpop.permute.xlu0 %2311
    %2313 = vrot.lane.b32.xlu0 %v2305, 126
    %v2314 = vpop.permute.xlu0 %2313
    %v2315 = vsel %vm343, %v2310, %v2312
    %v2316 = vsel %vm343, %v2312, %v2314
    %v2320 = vadd.f32 %v2279, %v2315
    %v2321 = vadd.f32 %v2280, %v2316
    %v2322 = vadd.f32 %v2281, %v2314
    %v2323 = vmul.f32 %v1441, %v1056
    %2324 = vset.pattern.permute.xlu0 34
    %2325 = vperm.xlu0 %2324, %v1281
    %v2326 = vpop.permute.xlu0 %2325
    %v2329 = vlaneseq
    %v2330 = vshrl.u32 %v2329, 7
    %v2331 = vsub.s32 0, %v2330
    %v2332 = vrot.slane %v2323, %v2331
    %v2333 = vlaneseq
    %v2334 = vshrl.u32 %v2333, 7
    %v2335 = vsub.s32 1, %v2334
    %v2336 = vrot.slane %v2323, %v2335
    %v2337 = vlaneseq
    %v2338 = vshrl.u32 %v2337, 7
    %v2339 = vsub.s32 2, %v2338
    %v2340 = vrot.slane %v2323, %v2339
    %v2344 = vmul.f32 %v2326, %v2332
    %v2345 = vmul.f32 %v2326, %v2336
    %v2346 = vmul.f32 %v2326, %v2340
    %2350 = vrot.lane.b32.xlu0 %v2344, 126
    %v2351 = vpop.permute.xlu0 %2350
    %2352 = vrot.lane.b32.xlu0 %v2345, 126
    %v2353 = vpop.permute.xlu0 %2352
    %2354 = vrot.lane.b32.xlu0 %v2346, 126
    %v2355 = vpop.permute.xlu0 %2354
    %v2356 = vsel %vm343, %v2351, %v2353
    %v2357 = vsel %vm343, %v2353, %v2355
    %v2361 = vadd.f32 %v2320, %v2356
    %v2362 = vadd.f32 %v2321, %v2357
    %v2363 = vadd.f32 %v2322, %v2355
    %v2364 = vmul.f32 %v1480, %v1056
    %2365 = vset.pattern.permute.xlu0 35
    %2366 = vperm.xlu0 %2365, %v1281
    %v2367 = vpop.permute.xlu0 %2366
    %v2370 = vlaneseq
    %v2371 = vshrl.u32 %v2370, 7
    %v2372 = vsub.s32 0, %v2371
    %v2373 = vrot.slane %v2364, %v2372
    %v2374 = vlaneseq
    %v2375 = vshrl.u32 %v2374, 7
    %v2376 = vsub.s32 1, %v2375
    %v2377 = vrot.slane %v2364, %v2376
    %v2378 = vlaneseq
    %v2379 = vshrl.u32 %v2378, 7
    %v2380 = vsub.s32 2, %v2379
    %v2381 = vrot.slane %v2364, %v2380
    %v2385 = vmul.f32 %v2367, %v2373
    %v2386 = vmul.f32 %v2367, %v2377
    %v2387 = vmul.f32 %v2367, %v2381
    %2391 = vrot.lane.b32.xlu0 %v2385, 126
    %v2392 = vpop.permute.xlu0 %2391
    %2393 = vrot.lane.b32.xlu0 %v2386, 126
    %v2394 = vpop.permute.xlu0 %2393
    %2395 = vrot.lane.b32.xlu0 %v2387, 126
    %v2396 = vpop.permute.xlu0 %2395
    %v2397 = vsel %vm343, %v2392, %v2394
    %v2398 = vsel %vm343, %v2394, %v2396
    %v2402 = vadd.f32 %v2361, %v2397
    %v2403 = vadd.f32 %v2362, %v2398
    %v2404 = vadd.f32 %v2363, %v2396
    %2408 = vrot.lane.b32.xlu0 %v2037, 112
    %v2409 = vpop.permute.xlu0 %2408
    %2410 = vrot.lane.b32.xlu0 %v2038, 112
    %v2411 = vpop.permute.xlu0 %2410
    %2412 = vrot.lane.b32.xlu0 %v2039, 112
    %v2413 = vpop.permute.xlu0 %2412
    %v2414 = vsel %vm1231, %v2409, %v2411
    %v2415 = vsel %vm1231, %v2411, %v2413
    %v2418 = vadd.f32 %v1673, %v2414
    %v2419 = vadd.f32 %v1674, %v2415
    %2423 = vrot.lane.b32.xlu0 %v2402, 96
    %v2424 = vpop.permute.xlu0 %2423
    %2425 = vrot.lane.b32.xlu0 %v2403, 96
    %v2426 = vpop.permute.xlu0 %2425
    %2427 = vrot.lane.b32.xlu0 %v2404, 96
    %v2428 = vpop.permute.xlu0 %2427
    %v2429 = vsel %vm1247, %v2424, %v2426
    %v2430 = vsel %vm1247, %v2426, %v2428
    %v2433 = vadd.f32 %v2418, %v2429
    %v2434 = vadd.f32 %v2419, %v2430
    %v2435 = vld [vmem:[%s4] sm:$0xf]
    %2437 = vset.pattern.permute.xlu0 0
    %2438 = vperm.xlu0 %2437, %v2435
    %v2439 = vpop.permute.xlu0 %2438
    %v2441 = vadd.f32 %v2433, %v2439
    %v2442 = vadd.f32 %v2434, %v2439
    %v2443 = vld [vmem:[#allocation3] sm:$0xf]
    %v2444 = vld [vmem:[#allocation3 + $0x8] sm:$0xf]
    %v2445 = vadd.f32 %v2441, %v2443
    %v2446 = vadd.f32 %v2442, %v2444
    %v2447 = vmax.f32 %v2445, 0.0
    %v2448 = vmax.f32 %v2446, 0.0
    %2449 = vst [vmem:[#allocation6] sm:$0xf] %v2447
    %2450 = vst [vmem:[#allocation6 + $0x8] sm:$0xf] %v2448
    %s2451 = scalar_lea.vmem [#allocation2], 4
    %v2452 = vld [vmem:[%s2451] ss:$8 sm:$0x3]
    %v2453 = vmul.f32 %v2452, %v36
    %v2454 = vld [vmem:[%s1] sm:$0xf]
    %2456 = vset.pattern.permute.xlu0 0
    %2457 = vperm.xlu0 %2456, %v2454
    %v2458 = vpop.permute.xlu0 %2457
    %v2461 = vlaneseq
    %v2462 = vshrl.u32 %v2461, 7
    %v2463 = vsub.s32 0, %v2462
    %v2464 = vrot.slane %v2453, %v2463
    %v2465 = vlaneseq
    %v2466 = vshrl.u32 %v2465, 7
    %v2467 = vsub.s32 1, %v2466
    %v2468 = vrot.slane %v2453, %v2467
    %v2471 = vmul.f32 %v2458, %v2464
    %v2472 = vmul.f32 %v2458, %v2468
    %s2473 = scalar_lea.vmem [#allocation2], 5
    %v2474 = vld [vmem:[%s2473] ss:$8 sm:$0x3]
    %v2475 = vmul.f32 %v2474, %v36
    %2476 = vset.pattern.permute.xlu0 1
    %2477 = vperm.xlu0 %2476, %v2454
    %v2478 = vpop.permute.xlu0 %2477
    %v2481 = vlaneseq
    %v2482 = vshrl.u32 %v2481, 7
    %v2483 = vsub.s32 0, %v2482
    %v2484 = vrot.slane %v2475, %v2483
    %v2485 = vlaneseq
    %v2486 = vshrl.u32 %v2485, 7
    %v2487 = vsub.s32 1, %v2486
    %v2488 = vrot.slane %v2475, %v2487
    %v2491 = vmul.f32 %v2478, %v2484
    %v2492 = vmul.f32 %v2478, %v2488
    %v2493 = vadd.f32 %v2471, %v2491
    %v2494 = vadd.f32 %v2472, %v2492
    %s2495 = scalar_lea.vmem [#allocation2], 6
    %v2496 = vld [vmem:[%s2495] ss:$8 sm:$0x3]
    %v2497 = vmul.f32 %v2496, %v36
    %2498 = vset.pattern.permute.xlu0 2
    %2499 = vperm.xlu0 %2498, %v2454
    %v2500 = vpop.permute.xlu0 %2499
    %v2503 = vlaneseq
    %v2504 = vshrl.u32 %v2503, 7
    %v2505 = vsub.s32 0, %v2504
    %v2506 = vrot.slane %v2497, %v2505
    %v2507 = vlaneseq
    %v2508 = vshrl.u32 %v2507, 7
    %v2509 = vsub.s32 1, %v2508
    %v2510 = vrot.slane %v2497, %v2509
    %v2513 = vmul.f32 %v2500, %v2506
    %v2514 = vmul.f32 %v2500, %v2510
    %v2515 = vadd.f32 %v2493, %v2513
    %v2516 = vadd.f32 %v2494, %v2514
    %s2517 = scalar_lea.vmem [#allocation2], 7
    %v2518 = vld [vmem:[%s2517] ss:$8 sm:$0x3]
    %v2519 = vmul.f32 %v2518, %v36
    %2520 = vset.pattern.permute.xlu0 3
    %2521 = vperm.xlu0 %2520, %v2454
    %v2522 = vpop.permute.xlu0 %2521
    %v2525 = vlaneseq
    %v2526 = vshrl.u32 %v2525, 7
    %v2527 = vsub.s32 0, %v2526
    %v2528 = vrot.slane %v2519, %v2527
    %v2529 = vlaneseq
    %v2530 = vshrl.u32 %v2529, 7
    %v2531 = vsub.s32 1, %v2530
    %v2532 = vrot.slane %v2519, %v2531
    %v2535 = vmul.f32 %v2522, %v2528
    %v2536 = vmul.f32 %v2522, %v2532
    %v2537 = vadd.f32 %v2515, %v2535
    %v2538 = vadd.f32 %v2516, %v2536
    %v2539 = vld [vmem:[%s2451] ss:$8 sm:$0x7]
    %2540 = vset.pattern.permute.xlu0 4
    %2541 = vperm.xlu0 %2540, %v2454
    %v2542 = vpop.permute.xlu0 %2541
    %v2545 = vlaneseq
    %v2546 = vshrl.u32 %v2545, 7
    %v2547 = vsub.s32 0, %v2546
    %v2548 = vrot.slane %v2539, %v2547
    %v2549 = vlaneseq
    %v2550 = vshrl.u32 %v2549, 7
    %v2551 = vsub.s32 1, %v2550
    %v2552 = vrot.slane %v2539, %v2551
    %v2553 = vlaneseq
    %v2554 = vshrl.u32 %v2553, 7
    %v2555 = vsub.s32 2, %v2554
    %v2556 = vrot.slane %v2539, %v2555
    %v2560 = vmul.f32 %v2542, %v2548
    %v2561 = vmul.f32 %v2542, %v2552
    %v2562 = vmul.f32 %v2542, %v2556
    %2566 = vrot.lane.b32.xlu0 %v2560, 127
    %v2567 = vpop.permute.xlu0 %2566
    %2568 = vrot.lane.b32.xlu0 %v2561, 127
    %v2569 = vpop.permute.xlu0 %2568
    %2570 = vrot.lane.b32.xlu0 %v2562, 127
    %v2571 = vpop.permute.xlu0 %2570
    %v2572 = vsel %vm179, %v2567, %v2569
    %v2573 = vsel %vm179, %v2569, %v2571
    %v2576 = vadd.f32 %v2537, %v2572
    %v2577 = vadd.f32 %v2538, %v2573
    %v2578 = vld [vmem:[%s2473] ss:$8 sm:$0x7]
    %2579 = vset.pattern.permute.xlu0 5
    %2580 = vperm.xlu0 %2579, %v2454
    %v2581 = vpop.permute.xlu0 %2580
    %v2584 = vlaneseq
    %v2585 = vshrl.u32 %v2584, 7
    %v2586 = vsub.s32 0, %v2585
    %v2587 = vrot.slane %v2578, %v2586
    %v2588 = vlaneseq
    %v2589 = vshrl.u32 %v2588, 7
    %v2590 = vsub.s32 1, %v2589
    %v2591 = vrot.slane %v2578, %v2590
    %v2592 = vlaneseq
    %v2593 = vshrl.u32 %v2592, 7
    %v2594 = vsub.s32 2, %v2593
    %v2595 = vrot.slane %v2578, %v2594
    %v2599 = vmul.f32 %v2581, %v2587
    %v2600 = vmul.f32 %v2581, %v2591
    %v2601 = vmul.f32 %v2581, %v2595
    %2605 = vrot.lane.b32.xlu0 %v2599, 127
    %v2606 = vpop.permute.xlu0 %2605
    %2607 = vrot.lane.b32.xlu0 %v2600, 127
    %v2608 = vpop.permute.xlu0 %2607
    %2609 = vrot.lane.b32.xlu0 %v2601, 127
    %v2610 = vpop.permute.xlu0 %2609
    %v2611 = vsel %vm179, %v2606, %v2608
    %v2612 = vsel %vm179, %v2608, %v2610
    %v2615 = vadd.f32 %v2576, %v2611
    %v2616 = vadd.f32 %v2577, %v2612
    %v2617 = vld [vmem:[%s2495] ss:$8 sm:$0x7]
    %2618 = vset.pattern.permute.xlu0 6
    %2619 = vperm.xlu0 %2618, %v2454
    %v2620 = vpop.permute.xlu0 %2619
    %v2623 = vlaneseq
    %v2624 = vshrl.u32 %v2623, 7
    %v2625 = vsub.s32 0, %v2624
    %v2626 = vrot.slane %v2617, %v2625
    %v2627 = vlaneseq
    %v2628 = vshrl.u32 %v2627, 7
    %v2629 = vsub.s32 1, %v2628
    %v2630 = vrot.slane %v2617, %v2629
    %v2631 = vlaneseq
    %v2632 = vshrl.u32 %v2631, 7
    %v2633 = vsub.s32 2, %v2632
    %v2634 = vrot.slane %v2617, %v2633
    %v2638 = vmul.f32 %v2620, %v2626
    %v2639 = vmul.f32 %v2620, %v2630
    %v2640 = vmul.f32 %v2620, %v2634
    %2644 = vrot.lane.b32.xlu0 %v2638, 127
    %v2645 = vpop.permute.xlu0 %2644
    %2646 = vrot.lane.b32.xlu0 %v2639, 127
    %v2647 = vpop.permute.xlu0 %2646
    %2648 = vrot.lane.b32.xlu0 %v2640, 127
    %v2649 = vpop.permute.xlu0 %2648
    %v2650 = vsel %vm179, %v2645, %v2647
    %v2651 = vsel %vm179, %v2647, %v2649
    %v2654 = vadd.f32 %v2615, %v2650
    %v2655 = vadd.f32 %v2616, %v2651
    %v2656 = vld [vmem:[%s2517] ss:$8 sm:$0x7]
    %2657 = vset.pattern.permute.xlu0 7
    %2658 = vperm.xlu0 %2657, %v2454
    %v2659 = vpop.permute.xlu0 %2658
    %v2662 = vlaneseq
    %v2663 = vshrl.u32 %v2662, 7
    %v2664 = vsub.s32 0, %v2663
    %v2665 = vrot.slane %v2656, %v2664
    %v2666 = vlaneseq
    %v2667 = vshrl.u32 %v2666, 7
    %v2668 = vsub.s32 1, %v2667
    %v2669 = vrot.slane %v2656, %v2668
    %v2670 = vlaneseq
    %v2671 = vshrl.u32 %v2670, 7
    %v2672 = vsub.s32 2, %v2671
    %v2673 = vrot.slane %v2656, %v2672
    %v2677 = vmul.f32 %v2659, %v2665
    %v2678 = vmul.f32 %v2659, %v2669
    %v2679 = vmul.f32 %v2659, %v2673
    %2683 = vrot.lane.b32.xlu0 %v2677, 127
    %v2684 = vpop.permute.xlu0 %2683
    %2685 = vrot.lane.b32.xlu0 %v2678, 127
    %v2686 = vpop.permute.xlu0 %2685
    %2687 = vrot.lane.b32.xlu0 %v2679, 127
    %v2688 = vpop.permute.xlu0 %2687
    %v2689 = vsel %vm179, %v2684, %v2686
    %v2690 = vsel %vm179, %v2686, %v2688
    %v2693 = vadd.f32 %v2654, %v2689
    %v2694 = vadd.f32 %v2655, %v2690
    %v2695 = vmul.f32 %v2539, %v308
    %2696 = vset.pattern.permute.xlu0 8
    %2697 = vperm.xlu0 %2696, %v2454
    %v2698 = vpop.permute.xlu0 %2697
    %v2701 = vlaneseq
    %v2702 = vshrl.u32 %v2701, 7
    %v2703 = vsub.s32 0, %v2702
    %v2704 = vrot.slane %v2695, %v2703
    %v2705 = vlaneseq
    %v2706 = vshrl.u32 %v2705, 7
    %v2707 = vsub.s32 1, %v2706
    %v2708 = vrot.slane %v2695, %v2707
    %v2709 = vlaneseq
    %v2710 = vshrl.u32 %v2709, 7
    %v2711 = vsub.s32 2, %v2710
    %v2712 = vrot.slane %v2695, %v2711
    %v2716 = vmul.f32 %v2698, %v2704
    %v2717 = vmul.f32 %v2698, %v2708
    %v2718 = vmul.f32 %v2698, %v2712
    %2722 = vrot.lane.b32.xlu0 %v2716, 126
    %v2723 = vpop.permute.xlu0 %2722
    %2724 = vrot.lane.b32.xlu0 %v2717, 126
    %v2725 = vpop.permute.xlu0 %2724
    %2726 = vrot.lane.b32.xlu0 %v2718, 126
    %v2727 = vpop.permute.xlu0 %2726
    %v2728 = vsel %vm343, %v2723, %v2725
    %v2729 = vsel %vm343, %v2725, %v2727
    %v2732 = vadd.f32 %v2693, %v2728
    %v2733 = vadd.f32 %v2694, %v2729
    %v2734 = vmul.f32 %v2578, %v308
    %2735 = vset.pattern.permute.xlu0 9
    %2736 = vperm.xlu0 %2735, %v2454
    %v2737 = vpop.permute.xlu0 %2736
    %v2740 = vlaneseq
    %v2741 = vshrl.u32 %v2740, 7
    %v2742 = vsub.s32 0, %v2741
    %v2743 = vrot.slane %v2734, %v2742
    %v2744 = vlaneseq
    %v2745 = vshrl.u32 %v2744, 7
    %v2746 = vsub.s32 1, %v2745
    %v2747 = vrot.slane %v2734, %v2746
    %v2748 = vlaneseq
    %v2749 = vshrl.u32 %v2748, 7
    %v2750 = vsub.s32 2, %v2749
    %v2751 = vrot.slane %v2734, %v2750
    %v2755 = vmul.f32 %v2737, %v2743
    %v2756 = vmul.f32 %v2737, %v2747
    %v2757 = vmul.f32 %v2737, %v2751
    %2761 = vrot.lane.b32.xlu0 %v2755, 126
    %v2762 = vpop.permute.xlu0 %2761
    %2763 = vrot.lane.b32.xlu0 %v2756, 126
    %v2764 = vpop.permute.xlu0 %2763
    %2765 = vrot.lane.b32.xlu0 %v2757, 126
    %v2766 = vpop.permute.xlu0 %2765
    %v2767 = vsel %vm343, %v2762, %v2764
    %v2768 = vsel %vm343, %v2764, %v2766
    %v2771 = vadd.f32 %v2732, %v2767
    %v2772 = vadd.f32 %v2733, %v2768
    %v2773 = vmul.f32 %v2617, %v308
    %2774 = vset.pattern.permute.xlu0 10
    %2775 = vperm.xlu0 %2774, %v2454
    %v2776 = vpop.permute.xlu0 %2775
    %v2779 = vlaneseq
    %v2780 = vshrl.u32 %v2779, 7
    %v2781 = vsub.s32 0, %v2780
    %v2782 = vrot.slane %v2773, %v2781
    %v2783 = vlaneseq
    %v2784 = vshrl.u32 %v2783, 7
    %v2785 = vsub.s32 1, %v2784
    %v2786 = vrot.slane %v2773, %v2785
    %v2787 = vlaneseq
    %v2788 = vshrl.u32 %v2787, 7
    %v2789 = vsub.s32 2, %v2788
    %v2790 = vrot.slane %v2773, %v2789
    %v2794 = vmul.f32 %v2776, %v2782
    %v2795 = vmul.f32 %v2776, %v2786
    %v2796 = vmul.f32 %v2776, %v2790
    %2800 = vrot.lane.b32.xlu0 %v2794, 126
    %v2801 = vpop.permute.xlu0 %2800
    %2802 = vrot.lane.b32.xlu0 %v2795, 126
    %v2803 = vpop.permute.xlu0 %2802
    %2804 = vrot.lane.b32.xlu0 %v2796, 126
    %v2805 = vpop.permute.xlu0 %2804
    %v2806 = vsel %vm343, %v2801, %v2803
    %v2807 = vsel %vm343, %v2803, %v2805
    %v2810 = vadd.f32 %v2771, %v2806
    %v2811 = vadd.f32 %v2772, %v2807
    %v2812 = vmul.f32 %v2656, %v308
    %2813 = vset.pattern.permute.xlu0 11
    %2814 = vperm.xlu0 %2813, %v2454
    %v2815 = vpop.permute.xlu0 %2814
    %v2818 = vlaneseq
    %v2819 = vshrl.u32 %v2818, 7
    %v2820 = vsub.s32 0, %v2819
    %v2821 = vrot.slane %v2812, %v2820
    %v2822 = vlaneseq
    %v2823 = vshrl.u32 %v2822, 7
    %v2824 = vsub.s32 1, %v2823
    %v2825 = vrot.slane %v2812, %v2824
    %v2826 = vlaneseq
    %v2827 = vshrl.u32 %v2826, 7
    %v2828 = vsub.s32 2, %v2827
    %v2829 = vrot.slane %v2812, %v2828
    %v2833 = vmul.f32 %v2815, %v2821
    %v2834 = vmul.f32 %v2815, %v2825
    %v2835 = vmul.f32 %v2815, %v2829
    %2839 = vrot.lane.b32.xlu0 %v2833, 126
    %v2840 = vpop.permute.xlu0 %2839
    %2841 = vrot.lane.b32.xlu0 %v2834, 126
    %v2842 = vpop.permute.xlu0 %2841
    %2843 = vrot.lane.b32.xlu0 %v2835, 126
    %v2844 = vpop.permute.xlu0 %2843
    %v2845 = vsel %vm343, %v2840, %v2842
    %v2846 = vsel %vm343, %v2842, %v2844
    %v2849 = vadd.f32 %v2810, %v2845
    %v2850 = vadd.f32 %v2811, %v2846
    %v2851 = vmul.f32 %v2539, %v472
    %2852 = vset.pattern.permute.xlu0 12
    %2853 = vperm.xlu0 %2852, %v2454
    %v2854 = vpop.permute.xlu0 %2853
    %v2857 = vlaneseq
    %v2858 = vshrl.u32 %v2857, 7
    %v2859 = vsub.s32 0, %v2858
    %v2860 = vrot.slane %v2851, %v2859
    %v2861 = vlaneseq
    %v2862 = vshrl.u32 %v2861, 7
    %v2863 = vsub.s32 1, %v2862
    %v2864 = vrot.slane %v2851, %v2863
    %v2865 = vlaneseq
    %v2866 = vshrl.u32 %v2865, 7
    %v2867 = vsub.s32 2, %v2866
    %v2868 = vrot.slane %v2851, %v2867
    %v2872 = vmul.f32 %v2854, %v2860
    %v2873 = vmul.f32 %v2854, %v2864
    %v2874 = vmul.f32 %v2854, %v2868
    %v2875 = vmul.f32 %v2578, %v472
    %2876 = vset.pattern.permute.xlu0 13
    %2877 = vperm.xlu0 %2876, %v2454
    %v2878 = vpop.permute.xlu0 %2877
    %v2881 = vlaneseq
    %v2882 = vshrl.u32 %v2881, 7
    %v2883 = vsub.s32 0, %v2882
    %v2884 = vrot.slane %v2875, %v2883
    %v2885 = vlaneseq
    %v2886 = vshrl.u32 %v2885, 7
    %v2887 = vsub.s32 1, %v2886
    %v2888 = vrot.slane %v2875, %v2887
    %v2889 = vlaneseq
    %v2890 = vshrl.u32 %v2889, 7
    %v2891 = vsub.s32 2, %v2890
    %v2892 = vrot.slane %v2875, %v2891
    %v2896 = vmul.f32 %v2878, %v2884
    %v2897 = vmul.f32 %v2878, %v2888
    %v2898 = vmul.f32 %v2878, %v2892
    %v2899 = vadd.f32 %v2872, %v2896
    %v2900 = vadd.f32 %v2873, %v2897
    %v2901 = vadd.f32 %v2874, %v2898
    %v2902 = vmul.f32 %v2617, %v472
    %2903 = vset.pattern.permute.xlu0 14
    %2904 = vperm.xlu0 %2903, %v2454
    %v2905 = vpop.permute.xlu0 %2904
    %v2908 = vlaneseq
    %v2909 = vshrl.u32 %v2908, 7
    %v2910 = vsub.s32 0, %v2909
    %v2911 = vrot.slane %v2902, %v2910
    %v2912 = vlaneseq
    %v2913 = vshrl.u32 %v2912, 7
    %v2914 = vsub.s32 1, %v2913
    %v2915 = vrot.slane %v2902, %v2914
    %v2916 = vlaneseq
    %v2917 = vshrl.u32 %v2916, 7
    %v2918 = vsub.s32 2, %v2917
    %v2919 = vrot.slane %v2902, %v2918
    %v2923 = vmul.f32 %v2905, %v2911
    %v2924 = vmul.f32 %v2905, %v2915
    %v2925 = vmul.f32 %v2905, %v2919
    %v2926 = vadd.f32 %v2899, %v2923
    %v2927 = vadd.f32 %v2900, %v2924
    %v2928 = vadd.f32 %v2901, %v2925
    %v2929 = vmul.f32 %v2656, %v472
    %2930 = vset.pattern.permute.xlu0 15
    %2931 = vperm.xlu0 %2930, %v2454
    %v2932 = vpop.permute.xlu0 %2931
    %v2935 = vlaneseq
    %v2936 = vshrl.u32 %v2935, 7
    %v2937 = vsub.s32 0, %v2936
    %v2938 = vrot.slane %v2929, %v2937
    %v2939 = vlaneseq
    %v2940 = vshrl.u32 %v2939, 7
    %v2941 = vsub.s32 1, %v2940
    %v2942 = vrot.slane %v2929, %v2941
    %v2943 = vlaneseq
    %v2944 = vshrl.u32 %v2943, 7
    %v2945 = vsub.s32 2, %v2944
    %v2946 = vrot.slane %v2929, %v2945
    %v2950 = vmul.f32 %v2932, %v2938
    %v2951 = vmul.f32 %v2932, %v2942
    %v2952 = vmul.f32 %v2932, %v2946
    %v2953 = vadd.f32 %v2926, %v2950
    %v2954 = vadd.f32 %v2927, %v2951
    %v2955 = vadd.f32 %v2928, %v2952
    %2956 = vset.pattern.permute.xlu0 16
    %2957 = vperm.xlu0 %2956, %v2454
    %v2958 = vpop.permute.xlu0 %2957
    %v2960 = vmul.f32 %v2958, %v2548
    %v2961 = vmul.f32 %v2958, %v2552
    %v2962 = vmul.f32 %v2958, %v2556
    %2966 = vrot.lane.b32.xlu0 %v2960, 127
    %v2967 = vpop.permute.xlu0 %2966
    %2968 = vrot.lane.b32.xlu0 %v2961, 127
    %v2969 = vpop.permute.xlu0 %2968
    %2970 = vrot.lane.b32.xlu0 %v2962, 127
    %v2971 = vpop.permute.xlu0 %2970
    %v2972 = vsel %vm179, %v2967, %v2969
    %v2973 = vsel %vm179, %v2969, %v2971
    %v2977 = vadd.f32 %v2953, %v2972
    %v2978 = vadd.f32 %v2954, %v2973
    %v2979 = vadd.f32 %v2955, %v2971
    %2980 = vset.pattern.permute.xlu0 17
    %2981 = vperm.xlu0 %2980, %v2454
    %v2982 = vpop.permute.xlu0 %2981
    %v2984 = vmul.f32 %v2982, %v2587
    %v2985 = vmul.f32 %v2982, %v2591
    %v2986 = vmul.f32 %v2982, %v2595
    %2990 = vrot.lane.b32.xlu0 %v2984, 127
    %v2991 = vpop.permute.xlu0 %2990
    %2992 = vrot.lane.b32.xlu0 %v2985, 127
    %v2993 = vpop.permute.xlu0 %2992
    %2994 = vrot.lane.b32.xlu0 %v2986, 127
    %v2995 = vpop.permute.xlu0 %2994
    %v2996 = vsel %vm179, %v2991, %v2993
    %v2997 = vsel %vm179, %v2993, %v2995
    %v3001 = vadd.f32 %v2977, %v2996
    %v3002 = vadd.f32 %v2978, %v2997
    %v3003 = vadd.f32 %v2979, %v2995
    %3004 = vset.pattern.permute.xlu0 18
    %3005 = vperm.xlu0 %3004, %v2454
    %v3006 = vpop.permute.xlu0 %3005
    %v3008 = vmul.f32 %v3006, %v2626
    %v3009 = vmul.f32 %v3006, %v2630
    %v3010 = vmul.f32 %v3006, %v2634
    %3014 = vrot.lane.b32.xlu0 %v3008, 127
    %v3015 = vpop.permute.xlu0 %3014
    %3016 = vrot.lane.b32.xlu0 %v3009, 127
    %v3017 = vpop.permute.xlu0 %3016
    %3018 = vrot.lane.b32.xlu0 %v3010, 127
    %v3019 = vpop.permute.xlu0 %3018
    %v3020 = vsel %vm179, %v3015, %v3017
    %v3021 = vsel %vm179, %v3017, %v3019
    %v3025 = vadd.f32 %v3001, %v3020
    %v3026 = vadd.f32 %v3002, %v3021
    %v3027 = vadd.f32 %v3003, %v3019
    %3028 = vset.pattern.permute.xlu0 19
    %3029 = vperm.xlu0 %3028, %v2454
    %v3030 = vpop.permute.xlu0 %3029
    %v3032 = vmul.f32 %v3030, %v2665
    %v3033 = vmul.f32 %v3030, %v2669
    %v3034 = vmul.f32 %v3030, %v2673
    %3038 = vrot.lane.b32.xlu0 %v3032, 127
    %v3039 = vpop.permute.xlu0 %3038
    %3040 = vrot.lane.b32.xlu0 %v3033, 127
    %v3041 = vpop.permute.xlu0 %3040
    %3042 = vrot.lane.b32.xlu0 %v3034, 127
    %v3043 = vpop.permute.xlu0 %3042
    %v3044 = vsel %vm179, %v3039, %v3041
    %v3045 = vsel %vm179, %v3041, %v3043
    %v3049 = vadd.f32 %v3025, %v3044
    %v3050 = vadd.f32 %v3026, %v3045
    %v3051 = vadd.f32 %v3027, %v3043
    %v3052 = vmul.f32 %v2539, %v679
    %3053 = vset.pattern.permute.xlu0 20
    %3054 = vperm.xlu0 %3053, %v2454
    %v3055 = vpop.permute.xlu0 %3054
    %v3058 = vlaneseq
    %v3059 = vshrl.u32 %v3058, 7
    %v3060 = vsub.s32 0, %v3059
    %v3061 = vrot.slane %v3052, %v3060
    %v3062 = vlaneseq
    %v3063 = vshrl.u32 %v3062, 7
    %v3064 = vsub.s32 1, %v3063
    %v3065 = vrot.slane %v3052, %v3064
    %v3066 = vlaneseq
    %v3067 = vshrl.u32 %v3066, 7
    %v3068 = vsub.s32 2, %v3067
    %v3069 = vrot.slane %v3052, %v3068
    %v3073 = vmul.f32 %v3055, %v3061
    %v3074 = vmul.f32 %v3055, %v3065
    %v3075 = vmul.f32 %v3055, %v3069
    %3079 = vrot.lane.b32.xlu0 %v3073, 126
    %v3080 = vpop.permute.xlu0 %3079
    %3081 = vrot.lane.b32.xlu0 %v3074, 126
    %v3082 = vpop.permute.xlu0 %3081
    %3083 = vrot.lane.b32.xlu0 %v3075, 126
    %v3084 = vpop.permute.xlu0 %3083
    %v3085 = vsel %vm343, %v3080, %v3082
    %v3086 = vsel %vm343, %v3082, %v3084
    %v3090 = vadd.f32 %v3049, %v3085
    %v3091 = vadd.f32 %v3050, %v3086
    %v3092 = vadd.f32 %v3051, %v3084
    %v3093 = vmul.f32 %v2578, %v679
    %3094 = vset.pattern.permute.xlu0 21
    %3095 = vperm.xlu0 %3094, %v2454
    %v3096 = vpop.permute.xlu0 %3095
    %v3099 = vlaneseq
    %v3100 = vshrl.u32 %v3099, 7
    %v3101 = vsub.s32 0, %v3100
    %v3102 = vrot.slane %v3093, %v3101
    %v3103 = vlaneseq
    %v3104 = vshrl.u32 %v3103, 7
    %v3105 = vsub.s32 1, %v3104
    %v3106 = vrot.slane %v3093, %v3105
    %v3107 = vlaneseq
    %v3108 = vshrl.u32 %v3107, 7
    %v3109 = vsub.s32 2, %v3108
    %v3110 = vrot.slane %v3093, %v3109
    %v3114 = vmul.f32 %v3096, %v3102
    %v3115 = vmul.f32 %v3096, %v3106
    %v3116 = vmul.f32 %v3096, %v3110
    %3120 = vrot.lane.b32.xlu0 %v3114, 126
    %v3121 = vpop.permute.xlu0 %3120
    %3122 = vrot.lane.b32.xlu0 %v3115, 126
    %v3123 = vpop.permute.xlu0 %3122
    %3124 = vrot.lane.b32.xlu0 %v3116, 126
    %v3125 = vpop.permute.xlu0 %3124
    %v3126 = vsel %vm343, %v3121, %v3123
    %v3127 = vsel %vm343, %v3123, %v3125
    %v3131 = vadd.f32 %v3090, %v3126
    %v3132 = vadd.f32 %v3091, %v3127
    %v3133 = vadd.f32 %v3092, %v3125
    %v3134 = vmul.f32 %v2617, %v679
    %3135 = vset.pattern.permute.xlu0 22
    %3136 = vperm.xlu0 %3135, %v2454
    %v3137 = vpop.permute.xlu0 %3136
    %v3140 = vlaneseq
    %v3141 = vshrl.u32 %v3140, 7
    %v3142 = vsub.s32 0, %v3141
    %v3143 = vrot.slane %v3134, %v3142
    %v3144 = vlaneseq
    %v3145 = vshrl.u32 %v3144, 7
    %v3146 = vsub.s32 1, %v3145
    %v3147 = vrot.slane %v3134, %v3146
    %v3148 = vlaneseq
    %v3149 = vshrl.u32 %v3148, 7
    %v3150 = vsub.s32 2, %v3149
    %v3151 = vrot.slane %v3134, %v3150
    %v3155 = vmul.f32 %v3137, %v3143
    %v3156 = vmul.f32 %v3137, %v3147
    %v3157 = vmul.f32 %v3137, %v3151
    %3161 = vrot.lane.b32.xlu0 %v3155, 126
    %v3162 = vpop.permute.xlu0 %3161
    %3163 = vrot.lane.b32.xlu0 %v3156, 126
    %v3164 = vpop.permute.xlu0 %3163
    %3165 = vrot.lane.b32.xlu0 %v3157, 126
    %v3166 = vpop.permute.xlu0 %3165
    %v3167 = vsel %vm343, %v3162, %v3164
    %v3168 = vsel %vm343, %v3164, %v3166
    %v3172 = vadd.f32 %v3131, %v3167
    %v3173 = vadd.f32 %v3132, %v3168
    %v3174 = vadd.f32 %v3133, %v3166
    %v3175 = vmul.f32 %v2656, %v679
    %3176 = vset.pattern.permute.xlu0 23
    %3177 = vperm.xlu0 %3176, %v2454
    %v3178 = vpop.permute.xlu0 %3177
    %v3181 = vlaneseq
    %v3182 = vshrl.u32 %v3181, 7
    %v3183 = vsub.s32 0, %v3182
    %v3184 = vrot.slane %v3175, %v3183
    %v3185 = vlaneseq
    %v3186 = vshrl.u32 %v3185, 7
    %v3187 = vsub.s32 1, %v3186
    %v3188 = vrot.slane %v3175, %v3187
    %v3189 = vlaneseq
    %v3190 = vshrl.u32 %v3189, 7
    %v3191 = vsub.s32 2, %v3190
    %v3192 = vrot.slane %v3175, %v3191
    %v3196 = vmul.f32 %v3178, %v3184
    %v3197 = vmul.f32 %v3178, %v3188
    %v3198 = vmul.f32 %v3178, %v3192
    %3202 = vrot.lane.b32.xlu0 %v3196, 126
    %v3203 = vpop.permute.xlu0 %3202
    %3204 = vrot.lane.b32.xlu0 %v3197, 126
    %v3205 = vpop.permute.xlu0 %3204
    %3206 = vrot.lane.b32.xlu0 %v3198, 126
    %v3207 = vpop.permute.xlu0 %3206
    %v3208 = vsel %vm343, %v3203, %v3205
    %v3209 = vsel %vm343, %v3205, %v3207
    %v3213 = vadd.f32 %v3172, %v3208
    %v3214 = vadd.f32 %v3173, %v3209
    %v3215 = vadd.f32 %v3174, %v3207
    %v3216 = vmul.f32 %v2539, %v849
    %3217 = vset.pattern.permute.xlu0 24
    %3218 = vperm.xlu0 %3217, %v2454
    %v3219 = vpop.permute.xlu0 %3218
    %v3222 = vlaneseq
    %v3223 = vshrl.u32 %v3222, 7
    %v3224 = vsub.s32 0, %v3223
    %v3225 = vrot.slane %v3216, %v3224
    %v3226 = vlaneseq
    %v3227 = vshrl.u32 %v3226, 7
    %v3228 = vsub.s32 1, %v3227
    %v3229 = vrot.slane %v3216, %v3228
    %v3230 = vlaneseq
    %v3231 = vshrl.u32 %v3230, 7
    %v3232 = vsub.s32 2, %v3231
    %v3233 = vrot.slane %v3216, %v3232
    %v3237 = vmul.f32 %v3219, %v3225
    %v3238 = vmul.f32 %v3219, %v3229
    %v3239 = vmul.f32 %v3219, %v3233
    %v3240 = vmul.f32 %v2578, %v849
    %3241 = vset.pattern.permute.xlu0 25
    %3242 = vperm.xlu0 %3241, %v2454
    %v3243 = vpop.permute.xlu0 %3242
    %v3246 = vlaneseq
    %v3247 = vshrl.u32 %v3246, 7
    %v3248 = vsub.s32 0, %v3247
    %v3249 = vrot.slane %v3240, %v3248
    %v3250 = vlaneseq
    %v3251 = vshrl.u32 %v3250, 7
    %v3252 = vsub.s32 1, %v3251
    %v3253 = vrot.slane %v3240, %v3252
    %v3254 = vlaneseq
    %v3255 = vshrl.u32 %v3254, 7
    %v3256 = vsub.s32 2, %v3255
    %v3257 = vrot.slane %v3240, %v3256
    %v3261 = vmul.f32 %v3243, %v3249
    %v3262 = vmul.f32 %v3243, %v3253
    %v3263 = vmul.f32 %v3243, %v3257
    %v3264 = vadd.f32 %v3237, %v3261
    %v3265 = vadd.f32 %v3238, %v3262
    %v3266 = vadd.f32 %v3239, %v3263
    %v3267 = vmul.f32 %v2617, %v849
    %3268 = vset.pattern.permute.xlu0 26
    %3269 = vperm.xlu0 %3268, %v2454
    %v3270 = vpop.permute.xlu0 %3269
    %v3273 = vlaneseq
    %v3274 = vshrl.u32 %v3273, 7
    %v3275 = vsub.s32 0, %v3274
    %v3276 = vrot.slane %v3267, %v3275
    %v3277 = vlaneseq
    %v3278 = vshrl.u32 %v3277, 7
    %v3279 = vsub.s32 1, %v3278
    %v3280 = vrot.slane %v3267, %v3279
    %v3281 = vlaneseq
    %v3282 = vshrl.u32 %v3281, 7
    %v3283 = vsub.s32 2, %v3282
    %v3284 = vrot.slane %v3267, %v3283
    %v3288 = vmul.f32 %v3270, %v3276
    %v3289 = vmul.f32 %v3270, %v3280
    %v3290 = vmul.f32 %v3270, %v3284
    %v3291 = vadd.f32 %v3264, %v3288
    %v3292 = vadd.f32 %v3265, %v3289
    %v3293 = vadd.f32 %v3266, %v3290
    %v3294 = vmul.f32 %v2656, %v849
    %3295 = vset.pattern.permute.xlu0 27
    %3296 = vperm.xlu0 %3295, %v2454
    %v3297 = vpop.permute.xlu0 %3296
    %v3300 = vlaneseq
    %v3301 = vshrl.u32 %v3300, 7
    %v3302 = vsub.s32 0, %v3301
    %v3303 = vrot.slane %v3294, %v3302
    %v3304 = vlaneseq
    %v3305 = vshrl.u32 %v3304, 7
    %v3306 = vsub.s32 1, %v3305
    %v3307 = vrot.slane %v3294, %v3306
    %v3308 = vlaneseq
    %v3309 = vshrl.u32 %v3308, 7
    %v3310 = vsub.s32 2, %v3309
    %v3311 = vrot.slane %v3294, %v3310
    %v3315 = vmul.f32 %v3297, %v3303
    %v3316 = vmul.f32 %v3297, %v3307
    %v3317 = vmul.f32 %v3297, %v3311
    %v3318 = vadd.f32 %v3291, %v3315
    %v3319 = vadd.f32 %v3292, %v3316
    %v3320 = vadd.f32 %v3293, %v3317
    %3321 = vset.pattern.permute.xlu0 28
    %3322 = vperm.xlu0 %3321, %v2454
    %v3323 = vpop.permute.xlu0 %3322
    %v3325 = vmul.f32 %v3323, %v2548
    %v3326 = vmul.f32 %v3323, %v2552
    %v3327 = vmul.f32 %v3323, %v2556
    %3331 = vrot.lane.b32.xlu0 %v3325, 127
    %v3332 = vpop.permute.xlu0 %3331
    %3333 = vrot.lane.b32.xlu0 %v3326, 127
    %v3334 = vpop.permute.xlu0 %3333
    %3335 = vrot.lane.b32.xlu0 %v3327, 127
    %v3336 = vpop.permute.xlu0 %3335
    %v3337 = vsel %vm179, %v3332, %v3334
    %v3338 = vsel %vm179, %v3334, %v3336
    %v3342 = vadd.f32 %v3318, %v3337
    %v3343 = vadd.f32 %v3319, %v3338
    %v3344 = vadd.f32 %v3320, %v3336
    %3345 = vset.pattern.permute.xlu0 29
    %3346 = vperm.xlu0 %3345, %v2454
    %v3347 = vpop.permute.xlu0 %3346
    %v3349 = vmul.f32 %v3347, %v2587
    %v3350 = vmul.f32 %v3347, %v2591
    %v3351 = vmul.f32 %v3347, %v2595
    %3355 = vrot.lane.b32.xlu0 %v3349, 127
    %v3356 = vpop.permute.xlu0 %3355
    %3357 = vrot.lane.b32.xlu0 %v3350, 127
    %v3358 = vpop.permute.xlu0 %3357
    %3359 = vrot.lane.b32.xlu0 %v3351, 127
    %v3360 = vpop.permute.xlu0 %3359
    %v3361 = vsel %vm179, %v3356, %v3358
    %v3362 = vsel %vm179, %v3358, %v3360
    %v3366 = vadd.f32 %v3342, %v3361
    %v3367 = vadd.f32 %v3343, %v3362
    %v3368 = vadd.f32 %v3344, %v3360
    %3369 = vset.pattern.permute.xlu0 30
    %3370 = vperm.xlu0 %3369, %v2454
    %v3371 = vpop.permute.xlu0 %3370
    %v3373 = vmul.f32 %v3371, %v2626
    %v3374 = vmul.f32 %v3371, %v2630
    %v3375 = vmul.f32 %v3371, %v2634
    %3379 = vrot.lane.b32.xlu0 %v3373, 127
    %v3380 = vpop.permute.xlu0 %3379
    %3381 = vrot.lane.b32.xlu0 %v3374, 127
    %v3382 = vpop.permute.xlu0 %3381
    %3383 = vrot.lane.b32.xlu0 %v3375, 127
    %v3384 = vpop.permute.xlu0 %3383
    %v3385 = vsel %vm179, %v3380, %v3382
    %v3386 = vsel %vm179, %v3382, %v3384
    %v3390 = vadd.f32 %v3366, %v3385
    %v3391 = vadd.f32 %v3367, %v3386
    %v3392 = vadd.f32 %v3368, %v3384
    %3393 = vset.pattern.permute.xlu0 31
    %3394 = vperm.xlu0 %3393, %v2454
    %v3395 = vpop.permute.xlu0 %3394
    %v3397 = vmul.f32 %v3395, %v2665
    %v3398 = vmul.f32 %v3395, %v2669
    %v3399 = vmul.f32 %v3395, %v2673
    %3403 = vrot.lane.b32.xlu0 %v3397, 127
    %v3404 = vpop.permute.xlu0 %3403
    %3405 = vrot.lane.b32.xlu0 %v3398, 127
    %v3406 = vpop.permute.xlu0 %3405
    %3407 = vrot.lane.b32.xlu0 %v3399, 127
    %v3408 = vpop.permute.xlu0 %3407
    %v3409 = vsel %vm179, %v3404, %v3406
    %v3410 = vsel %vm179, %v3406, %v3408
    %v3414 = vadd.f32 %v3390, %v3409
    %v3415 = vadd.f32 %v3391, %v3410
    %v3416 = vadd.f32 %v3392, %v3408
    %v3417 = vmul.f32 %v2539, %v1056
    %3418 = vset.pattern.permute.xlu0 32
    %3419 = vperm.xlu0 %3418, %v2454
    %v3420 = vpop.permute.xlu0 %3419
    %v3423 = vlaneseq
    %v3424 = vshrl.u32 %v3423, 7
    %v3425 = vsub.s32 0, %v3424
    %v3426 = vrot.slane %v3417, %v3425
    %v3427 = vlaneseq
    %v3428 = vshrl.u32 %v3427, 7
    %v3429 = vsub.s32 1, %v3428
    %v3430 = vrot.slane %v3417, %v3429
    %v3431 = vlaneseq
    %v3432 = vshrl.u32 %v3431, 7
    %v3433 = vsub.s32 2, %v3432
    %v3434 = vrot.slane %v3417, %v3433
    %v3438 = vmul.f32 %v3420, %v3426
    %v3439 = vmul.f32 %v3420, %v3430
    %v3440 = vmul.f32 %v3420, %v3434
    %3444 = vrot.lane.b32.xlu0 %v3438, 126
    %v3445 = vpop.permute.xlu0 %3444
    %3446 = vrot.lane.b32.xlu0 %v3439, 126
    %v3447 = vpop.permute.xlu0 %3446
    %3448 = vrot.lane.b32.xlu0 %v3440, 126
    %v3449 = vpop.permute.xlu0 %3448
    %v3450 = vsel %vm343, %v3445, %v3447
    %v3451 = vsel %vm343, %v3447, %v3449
    %v3455 = vadd.f32 %v3414, %v3450
    %v3456 = vadd.f32 %v3415, %v3451
    %v3457 = vadd.f32 %v3416, %v3449
    %v3458 = vmul.f32 %v2578, %v1056
    %3459 = vset.pattern.permute.xlu0 33
    %3460 = vperm.xlu0 %3459, %v2454
    %v3461 = vpop.permute.xlu0 %3460
    %v3464 = vlaneseq
    %v3465 = vshrl.u32 %v3464, 7
    %v3466 = vsub.s32 0, %v3465
    %v3467 = vrot.slane %v3458, %v3466
    %v3468 = vlaneseq
    %v3469 = vshrl.u32 %v3468, 7
    %v3470 = vsub.s32 1, %v3469
    %v3471 = vrot.slane %v3458, %v3470
    %v3472 = vlaneseq
    %v3473 = vshrl.u32 %v3472, 7
    %v3474 = vsub.s32 2, %v3473
    %v3475 = vrot.slane %v3458, %v3474
    %v3479 = vmul.f32 %v3461, %v3467
    %v3480 = vmul.f32 %v3461, %v3471
    %v3481 = vmul.f32 %v3461, %v3475
    %3485 = vrot.lane.b32.xlu0 %v3479, 126
    %v3486 = vpop.permute.xlu0 %3485
    %3487 = vrot.lane.b32.xlu0 %v3480, 126
    %v3488 = vpop.permute.xlu0 %3487
    %3489 = vrot.lane.b32.xlu0 %v3481, 126
    %v3490 = vpop.permute.xlu0 %3489
    %v3491 = vsel %vm343, %v3486, %v3488
    %v3492 = vsel %vm343, %v3488, %v3490
    %v3496 = vadd.f32 %v3455, %v3491
    %v3497 = vadd.f32 %v3456, %v3492
    %v3498 = vadd.f32 %v3457, %v3490
    %v3499 = vmul.f32 %v2617, %v1056
    %3500 = vset.pattern.permute.xlu0 34
    %3501 = vperm.xlu0 %3500, %v2454
    %v3502 = vpop.permute.xlu0 %3501
    %v3505 = vlaneseq
    %v3506 = vshrl.u32 %v3505, 7
    %v3507 = vsub.s32 0, %v3506
    %v3508 = vrot.slane %v3499, %v3507
    %v3509 = vlaneseq
    %v3510 = vshrl.u32 %v3509, 7
    %v3511 = vsub.s32 1, %v3510
    %v3512 = vrot.slane %v3499, %v3511
    %v3513 = vlaneseq
    %v3514 = vshrl.u32 %v3513, 7
    %v3515 = vsub.s32 2, %v3514
    %v3516 = vrot.slane %v3499, %v3515
    %v3520 = vmul.f32 %v3502, %v3508
    %v3521 = vmul.f32 %v3502, %v3512
    %v3522 = vmul.f32 %v3502, %v3516
    %3526 = vrot.lane.b32.xlu0 %v3520, 126
    %v3527 = vpop.permute.xlu0 %3526
    %3528 = vrot.lane.b32.xlu0 %v3521, 126
    %v3529 = vpop.permute.xlu0 %3528
    %3530 = vrot.lane.b32.xlu0 %v3522, 126
    %v3531 = vpop.permute.xlu0 %3530
    %v3532 = vsel %vm343, %v3527, %v3529
    %v3533 = vsel %vm343, %v3529, %v3531
    %v3537 = vadd.f32 %v3496, %v3532
    %v3538 = vadd.f32 %v3497, %v3533
    %v3539 = vadd.f32 %v3498, %v3531
    %v3540 = vmul.f32 %v2656, %v1056
    %3541 = vset.pattern.permute.xlu0 35
    %3542 = vperm.xlu0 %3541, %v2454
    %v3543 = vpop.permute.xlu0 %3542
    %v3546 = vlaneseq
    %v3547 = vshrl.u32 %v3546, 7
    %v3548 = vsub.s32 0, %v3547
    %v3549 = vrot.slane %v3540, %v3548
    %v3550 = vlaneseq
    %v3551 = vshrl.u32 %v3550, 7
    %v3552 = vsub.s32 1, %v3551
    %v3553 = vrot.slane %v3540, %v3552
    %v3554 = vlaneseq
    %v3555 = vshrl.u32 %v3554, 7
    %v3556 = vsub.s32 2, %v3555
    %v3557 = vrot.slane %v3540, %v3556
    %v3561 = vmul.f32 %v3543, %v3549
    %v3562 = vmul.f32 %v3543, %v3553
    %v3563 = vmul.f32 %v3543, %v3557
    %3567 = vrot.lane.b32.xlu0 %v3561, 126
    %v3568 = vpop.permute.xlu0 %3567
    %3569 = vrot.lane.b32.xlu0 %v3562, 126
    %v3570 = vpop.permute.xlu0 %3569
    %3571 = vrot.lane.b32.xlu0 %v3563, 126
    %v3572 = vpop.permute.xlu0 %3571
    %v3573 = vsel %vm343, %v3568, %v3570
    %v3574 = vsel %vm343, %v3570, %v3572
    %v3578 = vadd.f32 %v3537, %v3573
    %v3579 = vadd.f32 %v3538, %v3574
    %v3580 = vadd.f32 %v3539, %v3572
    %3584 = vrot.lane.b32.xlu0 %v3213, 112
    %v3585 = vpop.permute.xlu0 %3584
    %3586 = vrot.lane.b32.xlu0 %v3214, 112
    %v3587 = vpop.permute.xlu0 %3586
    %3588 = vrot.lane.b32.xlu0 %v3215, 112
    %v3589 = vpop.permute.xlu0 %3588
    %v3590 = vsel %vm1231, %v3585, %v3587
    %v3591 = vsel %vm1231, %v3587, %v3589
    %v3594 = vadd.f32 %v2849, %v3590
    %v3595 = vadd.f32 %v2850, %v3591
    %3599 = vrot.lane.b32.xlu0 %v3578, 96
    %v3600 = vpop.permute.xlu0 %3599
    %3601 = vrot.lane.b32.xlu0 %v3579, 96
    %v3602 = vpop.permute.xlu0 %3601
    %3603 = vrot.lane.b32.xlu0 %v3580, 96
    %v3604 = vpop.permute.xlu0 %3603
    %v3605 = vsel %vm1247, %v3600, %v3602
    %v3606 = vsel %vm1247, %v3602, %v3604
    %v3609 = vadd.f32 %v3594, %v3605
    %v3610 = vadd.f32 %v3595, %v3606
    %v3611 = vld [vmem:[%s2] sm:$0xf]
    %3613 = vset.pattern.permute.xlu0 0
    %3614 = vperm.xlu0 %3613, %v3611
    %v3615 = vpop.permute.xlu0 %3614
    %v3617 = vadd.f32 %v3609, %v3615
    %v3618 = vadd.f32 %v3610, %v3615
    %v3619 = vmax.f32 %v3617, 0.0
    %v3620 = vmax.f32 %v3618, 0.0
    %v3623 = vrot.slane %v3619, 4
    %v3624 = vrot.slane %v3620, 4
    %3625 = vrot.lane.b32.xlu0 %v3623, 17
    %v3626 = vpop.permute.xlu0 %3625
    %3627 = vrot.lane.b32.xlu0 %v3624, 17
    %v3628 = vpop.permute.xlu0 %3627
    %v3629 = vsel %vm39, %v3626, %v3628
    %vm3633 = vcmask 1047692
    %3634 = vst.msk [vmem:[#allocation2] sm:$0xf0] %vm3633, %v3626
    %3635 = vst [vmem:[#allocation2 + $0x8] sm:$0xf0] %v3629
    %vm3636 = vcmask 138244
    %3637 = vst.msk [vmem:[#allocation2 + $0x10] sm:$0xf0] %vm3636, %v3628
    %v3638 = vld [vmem:[%s2451] ss:$8 sm:$0x3]
    %v3639 = vmul.f32 %v3638, %v36
    %v3640 = vld [vmem:[%s3] sm:$0xf]
    %3642 = vset.pattern.permute.xlu0 0
    %3643 = vperm.xlu0 %3642, %v3640
    %v3644 = vpop.permute.xlu0 %3643
    %v3647 = vlaneseq
    %v3648 = vshrl.u32 %v3647, 7
    %v3649 = vsub.s32 0, %v3648
    %v3650 = vrot.slane %v3639, %v3649
    %v3651 = vlaneseq
    %v3652 = vshrl.u32 %v3651, 7
    %v3653 = vsub.s32 1, %v3652
    %v3654 = vrot.slane %v3639, %v3653
    %v3657 = vmul.f32 %v3644, %v3650
    %v3658 = vmul.f32 %v3644, %v3654
    %v3659 = vld [vmem:[%s2473] ss:$8 sm:$0x3]
    %v3660 = vmul.f32 %v3659, %v36
    %3661 = vset.pattern.permute.xlu0 1
    %3662 = vperm.xlu0 %3661, %v3640
    %v3663 = vpop.permute.xlu0 %3662
    %v3666 = vlaneseq
    %v3667 = vshrl.u32 %v3666, 7
    %v3668 = vsub.s32 0, %v3667
    %v3669 = vrot.slane %v3660, %v3668
    %v3670 = vlaneseq
    %v3671 = vshrl.u32 %v3670, 7
    %v3672 = vsub.s32 1, %v3671
    %v3673 = vrot.slane %v3660, %v3672
    %v3676 = vmul.f32 %v3663, %v3669
    %v3677 = vmul.f32 %v3663, %v3673
    %v3678 = vadd.f32 %v3657, %v3676
    %v3679 = vadd.f32 %v3658, %v3677
    %v3680 = vld [vmem:[%s2495] ss:$8 sm:$0x3]
    %v3681 = vmul.f32 %v3680, %v36
    %3682 = vset.pattern.permute.xlu0 2
    %3683 = vperm.xlu0 %3682, %v3640
    %v3684 = vpop.permute.xlu0 %3683
    %v3687 = vlaneseq
    %v3688 = vshrl.u32 %v3687, 7
    %v3689 = vsub.s32 0, %v3688
    %v3690 = vrot.slane %v3681, %v3689
    %v3691 = vlaneseq
    %v3692 = vshrl.u32 %v3691, 7
    %v3693 = vsub.s32 1, %v3692
    %v3694 = vrot.slane %v3681, %v3693
    %v3697 = vmul.f32 %v3684, %v3690
    %v3698 = vmul.f32 %v3684, %v3694
    %v3699 = vadd.f32 %v3678, %v3697
    %v3700 = vadd.f32 %v3679, %v3698
    %v3701 = vld [vmem:[%s2517] ss:$8 sm:$0x3]
    %v3702 = vmul.f32 %v3701, %v36
    %3703 = vset.pattern.permute.xlu0 3
    %3704 = vperm.xlu0 %3703, %v3640
    %v3705 = vpop.permute.xlu0 %3704
    %v3708 = vlaneseq
    %v3709 = vshrl.u32 %v3708, 7
    %v3710 = vsub.s32 0, %v3709
    %v3711 = vrot.slane %v3702, %v3710
    %v3712 = vlaneseq
    %v3713 = vshrl.u32 %v3712, 7
    %v3714 = vsub.s32 1, %v3713
    %v3715 = vrot.slane %v3702, %v3714
    %v3718 = vmul.f32 %v3705, %v3711
    %v3719 = vmul.f32 %v3705, %v3715
    %v3720 = vadd.f32 %v3699, %v3718
    %v3721 = vadd.f32 %v3700, %v3719
    %v3722 = vld [vmem:[%s2451] ss:$8 sm:$0x7]
    %3723 = vset.pattern.permute.xlu0 4
    %3724 = vperm.xlu0 %3723, %v3640
    %v3725 = vpop.permute.xlu0 %3724
    %v3728 = vlaneseq
    %v3729 = vshrl.u32 %v3728, 7
    %v3730 = vsub.s32 0, %v3729
    %v3731 = vrot.slane %v3722, %v3730
    %v3732 = vlaneseq
    %v3733 = vshrl.u32 %v3732, 7
    %v3734 = vsub.s32 1, %v3733
    %v3735 = vrot.slane %v3722, %v3734
    %v3736 = vlaneseq
    %v3737 = vshrl.u32 %v3736, 7
    %v3738 = vsub.s32 2, %v3737
    %v3739 = vrot.slane %v3722, %v3738
    %v3743 = vmul.f32 %v3725, %v3731
    %v3744 = vmul.f32 %v3725, %v3735
    %v3745 = vmul.f32 %v3725, %v3739
    %3749 = vrot.lane.b32.xlu0 %v3743, 127
    %v3750 = vpop.permute.xlu0 %3749
    %3751 = vrot.lane.b32.xlu0 %v3744, 127
    %v3752 = vpop.permute.xlu0 %3751
    %3753 = vrot.lane.b32.xlu0 %v3745, 127
    %v3754 = vpop.permute.xlu0 %3753
    %v3755 = vsel %vm179, %v3750, %v3752
    %v3756 = vsel %vm179, %v3752, %v3754
    %v3759 = vadd.f32 %v3720, %v3755
    %v3760 = vadd.f32 %v3721, %v3756
    %v3761 = vld [vmem:[%s2473] ss:$8 sm:$0x7]
    %3762 = vset.pattern.permute.xlu0 5
    %3763 = vperm.xlu0 %3762, %v3640
    %v3764 = vpop.permute.xlu0 %3763
    %v3767 = vlaneseq
    %v3768 = vshrl.u32 %v3767, 7
    %v3769 = vsub.s32 0, %v3768
    %v3770 = vrot.slane %v3761, %v3769
    %v3771 = vlaneseq
    %v3772 = vshrl.u32 %v3771, 7
    %v3773 = vsub.s32 1, %v3772
    %v3774 = vrot.slane %v3761, %v3773
    %v3775 = vlaneseq
    %v3776 = vshrl.u32 %v3775, 7
    %v3777 = vsub.s32 2, %v3776
    %v3778 = vrot.slane %v3761, %v3777
    %v3782 = vmul.f32 %v3764, %v3770
    %v3783 = vmul.f32 %v3764, %v3774
    %v3784 = vmul.f32 %v3764, %v3778
    %3788 = vrot.lane.b32.xlu0 %v3782, 127
    %v3789 = vpop.permute.xlu0 %3788
    %3790 = vrot.lane.b32.xlu0 %v3783, 127
    %v3791 = vpop.permute.xlu0 %3790
    %3792 = vrot.lane.b32.xlu0 %v3784, 127
    %v3793 = vpop.permute.xlu0 %3792
    %v3794 = vsel %vm179, %v3789, %v3791
    %v3795 = vsel %vm179, %v3791, %v3793
    %v3798 = vadd.f32 %v3759, %v3794
    %v3799 = vadd.f32 %v3760, %v3795
    %v3800 = vld [vmem:[%s2495] ss:$8 sm:$0x7]
    %3801 = vset.pattern.permute.xlu0 6
    %3802 = vperm.xlu0 %3801, %v3640
    %v3803 = vpop.permute.xlu0 %3802
    %v3806 = vlaneseq
    %v3807 = vshrl.u32 %v3806, 7
    %v3808 = vsub.s32 0, %v3807
    %v3809 = vrot.slane %v3800, %v3808
    %v3810 = vlaneseq
    %v3811 = vshrl.u32 %v3810, 7
    %v3812 = vsub.s32 1, %v3811
    %v3813 = vrot.slane %v3800, %v3812
    %v3814 = vlaneseq
    %v3815 = vshrl.u32 %v3814, 7
    %v3816 = vsub.s32 2, %v3815
    %v3817 = vrot.slane %v3800, %v3816
    %v3821 = vmul.f32 %v3803, %v3809
    %v3822 = vmul.f32 %v3803, %v3813
    %v3823 = vmul.f32 %v3803, %v3817
    %3827 = vrot.lane.b32.xlu0 %v3821, 127
    %v3828 = vpop.permute.xlu0 %3827
    %3829 = vrot.lane.b32.xlu0 %v3822, 127
    %v3830 = vpop.permute.xlu0 %3829
    %3831 = vrot.lane.b32.xlu0 %v3823, 127
    %v3832 = vpop.permute.xlu0 %3831
    %v3833 = vsel %vm179, %v3828, %v3830
    %v3834 = vsel %vm179, %v3830, %v3832
    %v3837 = vadd.f32 %v3798, %v3833
    %v3838 = vadd.f32 %v3799, %v3834
    %v3839 = vld [vmem:[%s2517] ss:$8 sm:$0x7]
    %3840 = vset.pattern.permute.xlu0 7
    %3841 = vperm.xlu0 %3840, %v3640
    %v3842 = vpop.permute.xlu0 %3841
    %v3845 = vlaneseq
    %v3846 = vshrl.u32 %v3845, 7
    %v3847 = vsub.s32 0, %v3846
    %v3848 = vrot.slane %v3839, %v3847
    %v3849 = vlaneseq
    %v3850 = vshrl.u32 %v3849, 7
    %v3851 = vsub.s32 1, %v3850
    %v3852 = vrot.slane %v3839, %v3851
    %v3853 = vlaneseq
    %v3854 = vshrl.u32 %v3853, 7
    %v3855 = vsub.s32 2, %v3854
    %v3856 = vrot.slane %v3839, %v3855
    %v3860 = vmul.f32 %v3842, %v3848
    %v3861 = vmul.f32 %v3842, %v3852
    %v3862 = vmul.f32 %v3842, %v3856
    %3866 = vrot.lane.b32.xlu0 %v3860, 127
    %v3867 = vpop.permute.xlu0 %3866
    %3868 = vrot.lane.b32.xlu0 %v3861, 127
    %v3869 = vpop.permute.xlu0 %3868
    %3870 = vrot.lane.b32.xlu0 %v3862, 127
    %v3871 = vpop.permute.xlu0 %3870
    %v3872 = vsel %vm179, %v3867, %v3869
    %v3873 = vsel %vm179, %v3869, %v3871
    %v3876 = vadd.f32 %v3837, %v3872
    %v3877 = vadd.f32 %v3838, %v3873
    %v3878 = vmul.f32 %v3722, %v308
    %3879 = vset.pattern.permute.xlu0 8
    %3880 = vperm.xlu0 %3879, %v3640
    %v3881 = vpop.permute.xlu0 %3880
    %v3884 = vlaneseq
    %v3885 = vshrl.u32 %v3884, 7
    %v3886 = vsub.s32 0, %v3885
    %v3887 = vrot.slane %v3878, %v3886
    %v3888 = vlaneseq
    %v3889 = vshrl.u32 %v3888, 7
    %v3890 = vsub.s32 1, %v3889
    %v3891 = vrot.slane %v3878, %v3890
    %v3892 = vlaneseq
    %v3893 = vshrl.u32 %v3892, 7
    %v3894 = vsub.s32 2, %v3893
    %v3895 = vrot.slane %v3878, %v3894
    %v3899 = vmul.f32 %v3881, %v3887
    %v3900 = vmul.f32 %v3881, %v3891
    %v3901 = vmul.f32 %v3881, %v3895
    %3905 = vrot.lane.b32.xlu0 %v3899, 126
    %v3906 = vpop.permute.xlu0 %3905
    %3907 = vrot.lane.b32.xlu0 %v3900, 126
    %v3908 = vpop.permute.xlu0 %3907
    %3909 = vrot.lane.b32.xlu0 %v3901, 126
    %v3910 = vpop.permute.xlu0 %3909
    %v3911 = vsel %vm343, %v3906, %v3908
    %v3912 = vsel %vm343, %v3908, %v3910
    %v3915 = vadd.f32 %v3876, %v3911
    %v3916 = vadd.f32 %v3877, %v3912
    %v3917 = vmul.f32 %v3761, %v308
    %3918 = vset.pattern.permute.xlu0 9
    %3919 = vperm.xlu0 %3918, %v3640
    %v3920 = vpop.permute.xlu0 %3919
    %v3923 = vlaneseq
    %v3924 = vshrl.u32 %v3923, 7
    %v3925 = vsub.s32 0, %v3924
    %v3926 = vrot.slane %v3917, %v3925
    %v3927 = vlaneseq
    %v3928 = vshrl.u32 %v3927, 7
    %v3929 = vsub.s32 1, %v3928
    %v3930 = vrot.slane %v3917, %v3929
    %v3931 = vlaneseq
    %v3932 = vshrl.u32 %v3931, 7
    %v3933 = vsub.s32 2, %v3932
    %v3934 = vrot.slane %v3917, %v3933
    %v3938 = vmul.f32 %v3920, %v3926
    %v3939 = vmul.f32 %v3920, %v3930
    %v3940 = vmul.f32 %v3920, %v3934
    %3944 = vrot.lane.b32.xlu0 %v3938, 126
    %v3945 = vpop.permute.xlu0 %3944
    %3946 = vrot.lane.b32.xlu0 %v3939, 126
    %v3947 = vpop.permute.xlu0 %3946
    %3948 = vrot.lane.b32.xlu0 %v3940, 126
    %v3949 = vpop.permute.xlu0 %3948
    %v3950 = vsel %vm343, %v3945, %v3947
    %v3951 = vsel %vm343, %v3947, %v3949
    %v3954 = vadd.f32 %v3915, %v3950
    %v3955 = vadd.f32 %v3916, %v3951
    %v3956 = vmul.f32 %v3800, %v308
    %3957 = vset.pattern.permute.xlu0 10
    %3958 = vperm.xlu0 %3957, %v3640
    %v3959 = vpop.permute.xlu0 %3958
    %v3962 = vlaneseq
    %v3963 = vshrl.u32 %v3962, 7
    %v3964 = vsub.s32 0, %v3963
    %v3965 = vrot.slane %v3956, %v3964
    %v3966 = vlaneseq
    %v3967 = vshrl.u32 %v3966, 7
    %v3968 = vsub.s32 1, %v3967
    %v3969 = vrot.slane %v3956, %v3968
    %v3970 = vlaneseq
    %v3971 = vshrl.u32 %v3970, 7
    %v3972 = vsub.s32 2, %v3971
    %v3973 = vrot.slane %v3956, %v3972
    %v3977 = vmul.f32 %v3959, %v3965
    %v3978 = vmul.f32 %v3959, %v3969
    %v3979 = vmul.f32 %v3959, %v3973
    %3983 = vrot.lane.b32.xlu0 %v3977, 126
    %v3984 = vpop.permute.xlu0 %3983
    %3985 = vrot.lane.b32.xlu0 %v3978, 126
    %v3986 = vpop.permute.xlu0 %3985
    %3987 = vrot.lane.b32.xlu0 %v3979, 126
    %v3988 = vpop.permute.xlu0 %3987
    %v3989 = vsel %vm343, %v3984, %v3986
    %v3990 = vsel %vm343, %v3986, %v3988
    %v3993 = vadd.f32 %v3954, %v3989
    %v3994 = vadd.f32 %v3955, %v3990
    %v3995 = vmul.f32 %v3839, %v308
    %3996 = vset.pattern.permute.xlu0 11
    %3997 = vperm.xlu0 %3996, %v3640
    %v3998 = vpop.permute.xlu0 %3997
    %v4001 = vlaneseq
    %v4002 = vshrl.u32 %v4001, 7
    %v4003 = vsub.s32 0, %v4002
    %v4004 = vrot.slane %v3995, %v4003
    %v4005 = vlaneseq
    %v4006 = vshrl.u32 %v4005, 7
    %v4007 = vsub.s32 1, %v4006
    %v4008 = vrot.slane %v3995, %v4007
    %v4009 = vlaneseq
    %v4010 = vshrl.u32 %v4009, 7
    %v4011 = vsub.s32 2, %v4010
    %v4012 = vrot.slane %v3995, %v4011
    %v4016 = vmul.f32 %v3998, %v4004
    %v4017 = vmul.f32 %v3998, %v4008
    %v4018 = vmul.f32 %v3998, %v4012
    %4022 = vrot.lane.b32.xlu0 %v4016, 126
    %v4023 = vpop.permute.xlu0 %4022
    %4024 = vrot.lane.b32.xlu0 %v4017, 126
    %v4025 = vpop.permute.xlu0 %4024
    %4026 = vrot.lane.b32.xlu0 %v4018, 126
    %v4027 = vpop.permute.xlu0 %4026
    %v4028 = vsel %vm343, %v4023, %v4025
    %v4029 = vsel %vm343, %v4025, %v4027
    %v4032 = vadd.f32 %v3993, %v4028
    %v4033 = vadd.f32 %v3994, %v4029
    %v4034 = vmul.f32 %v3722, %v472
    %4035 = vset.pattern.permute.xlu0 12
    %4036 = vperm.xlu0 %4035, %v3640
    %v4037 = vpop.permute.xlu0 %4036
    %v4040 = vlaneseq
    %v4041 = vshrl.u32 %v4040, 7
    %v4042 = vsub.s32 0, %v4041
    %v4043 = vrot.slane %v4034, %v4042
    %v4044 = vlaneseq
    %v4045 = vshrl.u32 %v4044, 7
    %v4046 = vsub.s32 1, %v4045
    %v4047 = vrot.slane %v4034, %v4046
    %v4048 = vlaneseq
    %v4049 = vshrl.u32 %v4048, 7
    %v4050 = vsub.s32 2, %v4049
    %v4051 = vrot.slane %v4034, %v4050
    %v4055 = vmul.f32 %v4037, %v4043
    %v4056 = vmul.f32 %v4037, %v4047
    %v4057 = vmul.f32 %v4037, %v4051
    %v4058 = vmul.f32 %v3761, %v472
    %4059 = vset.pattern.permute.xlu0 13
    %4060 = vperm.xlu0 %4059, %v3640
    %v4061 = vpop.permute.xlu0 %4060
    %v4064 = vlaneseq
    %v4065 = vshrl.u32 %v4064, 7
    %v4066 = vsub.s32 0, %v4065
    %v4067 = vrot.slane %v4058, %v4066
    %v4068 = vlaneseq
    %v4069 = vshrl.u32 %v4068, 7
    %v4070 = vsub.s32 1, %v4069
    %v4071 = vrot.slane %v4058, %v4070
    %v4072 = vlaneseq
    %v4073 = vshrl.u32 %v4072, 7
    %v4074 = vsub.s32 2, %v4073
    %v4075 = vrot.slane %v4058, %v4074
    %v4079 = vmul.f32 %v4061, %v4067
    %v4080 = vmul.f32 %v4061, %v4071
    %v4081 = vmul.f32 %v4061, %v4075
    %v4082 = vadd.f32 %v4055, %v4079
    %v4083 = vadd.f32 %v4056, %v4080
    %v4084 = vadd.f32 %v4057, %v4081
    %v4085 = vmul.f32 %v3800, %v472
    %4086 = vset.pattern.permute.xlu0 14
    %4087 = vperm.xlu0 %4086, %v3640
    %v4088 = vpop.permute.xlu0 %4087
    %v4091 = vlaneseq
    %v4092 = vshrl.u32 %v4091, 7
    %v4093 = vsub.s32 0, %v4092
    %v4094 = vrot.slane %v4085, %v4093
    %v4095 = vlaneseq
    %v4096 = vshrl.u32 %v4095, 7
    %v4097 = vsub.s32 1, %v4096
    %v4098 = vrot.slane %v4085, %v4097
    %v4099 = vlaneseq
    %v4100 = vshrl.u32 %v4099, 7
    %v4101 = vsub.s32 2, %v4100
    %v4102 = vrot.slane %v4085, %v4101
    %v4106 = vmul.f32 %v4088, %v4094
    %v4107 = vmul.f32 %v4088, %v4098
    %v4108 = vmul.f32 %v4088, %v4102
    %v4109 = vadd.f32 %v4082, %v4106
    %v4110 = vadd.f32 %v4083, %v4107
    %v4111 = vadd.f32 %v4084, %v4108
    %v4112 = vmul.f32 %v3839, %v472
    %4113 = vset.pattern.permute.xlu0 15
    %4114 = vperm.xlu0 %4113, %v3640
    %v4115 = vpop.permute.xlu0 %4114
    %v4118 = vlaneseq
    %v4119 = vshrl.u32 %v4118, 7
    %v4120 = vsub.s32 0, %v4119
    %v4121 = vrot.slane %v4112, %v4120
    %v4122 = vlaneseq
    %v4123 = vshrl.u32 %v4122, 7
    %v4124 = vsub.s32 1, %v4123
    %v4125 = vrot.slane %v4112, %v4124
    %v4126 = vlaneseq
    %v4127 = vshrl.u32 %v4126, 7
    %v4128 = vsub.s32 2, %v4127
    %v4129 = vrot.slane %v4112, %v4128
    %v4133 = vmul.f32 %v4115, %v4121
    %v4134 = vmul.f32 %v4115, %v4125
    %v4135 = vmul.f32 %v4115, %v4129
    %v4136 = vadd.f32 %v4109, %v4133
    %v4137 = vadd.f32 %v4110, %v4134
    %v4138 = vadd.f32 %v4111, %v4135
    %4139 = vset.pattern.permute.xlu0 16
    %4140 = vperm.xlu0 %4139, %v3640
    %v4141 = vpop.permute.xlu0 %4140
    %v4143 = vmul.f32 %v4141, %v3731
    %v4144 = vmul.f32 %v4141, %v3735
    %v4145 = vmul.f32 %v4141, %v3739
    %4149 = vrot.lane.b32.xlu0 %v4143, 127
    %v4150 = vpop.permute.xlu0 %4149
    %4151 = vrot.lane.b32.xlu0 %v4144, 127
    %v4152 = vpop.permute.xlu0 %4151
    %4153 = vrot.lane.b32.xlu0 %v4145, 127
    %v4154 = vpop.permute.xlu0 %4153
    %v4155 = vsel %vm179, %v4150, %v4152
    %v4156 = vsel %vm179, %v4152, %v4154
    %v4160 = vadd.f32 %v4136, %v4155
    %v4161 = vadd.f32 %v4137, %v4156
    %v4162 = vadd.f32 %v4138, %v4154
    %4163 = vset.pattern.permute.xlu0 17
    %4164 = vperm.xlu0 %4163, %v3640
    %v4165 = vpop.permute.xlu0 %4164
    %v4167 = vmul.f32 %v4165, %v3770
    %v4168 = vmul.f32 %v4165, %v3774
    %v4169 = vmul.f32 %v4165, %v3778
    %4173 = vrot.lane.b32.xlu0 %v4167, 127
    %v4174 = vpop.permute.xlu0 %4173
    %4175 = vrot.lane.b32.xlu0 %v4168, 127
    %v4176 = vpop.permute.xlu0 %4175
    %4177 = vrot.lane.b32.xlu0 %v4169, 127
    %v4178 = vpop.permute.xlu0 %4177
    %v4179 = vsel %vm179, %v4174, %v4176
    %v4180 = vsel %vm179, %v4176, %v4178
    %v4184 = vadd.f32 %v4160, %v4179
    %v4185 = vadd.f32 %v4161, %v4180
    %v4186 = vadd.f32 %v4162, %v4178
    %4187 = vset.pattern.permute.xlu0 18
    %4188 = vperm.xlu0 %4187, %v3640
    %v4189 = vpop.permute.xlu0 %4188
    %v4191 = vmul.f32 %v4189, %v3809
    %v4192 = vmul.f32 %v4189, %v3813
    %v4193 = vmul.f32 %v4189, %v3817
    %4197 = vrot.lane.b32.xlu0 %v4191, 127
    %v4198 = vpop.permute.xlu0 %4197
    %4199 = vrot.lane.b32.xlu0 %v4192, 127
    %v4200 = vpop.permute.xlu0 %4199
    %4201 = vrot.lane.b32.xlu0 %v4193, 127
    %v4202 = vpop.permute.xlu0 %4201
    %v4203 = vsel %vm179, %v4198, %v4200
    %v4204 = vsel %vm179, %v4200, %v4202
    %v4208 = vadd.f32 %v4184, %v4203
    %v4209 = vadd.f32 %v4185, %v4204
    %v4210 = vadd.f32 %v4186, %v4202
    %4211 = vset.pattern.permute.xlu0 19
    %4212 = vperm.xlu0 %4211, %v3640
    %v4213 = vpop.permute.xlu0 %4212
    %v4215 = vmul.f32 %v4213, %v3848
    %v4216 = vmul.f32 %v4213, %v3852
    %v4217 = vmul.f32 %v4213, %v3856
    %4221 = vrot.lane.b32.xlu0 %v4215, 127
    %v4222 = vpop.permute.xlu0 %4221
    %4223 = vrot.lane.b32.xlu0 %v4216, 127
    %v4224 = vpop.permute.xlu0 %4223
    %4225 = vrot.lane.b32.xlu0 %v4217, 127
    %v4226 = vpop.permute.xlu0 %4225
    %v4227 = vsel %vm179, %v4222, %v4224
    %v4228 = vsel %vm179, %v4224, %v4226
    %v4232 = vadd.f32 %v4208, %v4227
    %v4233 = vadd.f32 %v4209, %v4228
    %v4234 = vadd.f32 %v4210, %v4226
    %v4235 = vmul.f32 %v3722, %v679
    %4236 = vset.pattern.permute.xlu0 20
    %4237 = vperm.xlu0 %4236, %v3640
    %v4238 = vpop.permute.xlu0 %4237
    %v4241 = vlaneseq
    %v4242 = vshrl.u32 %v4241, 7
    %v4243 = vsub.s32 0, %v4242
    %v4244 = vrot.slane %v4235, %v4243
    %v4245 = vlaneseq
    %v4246 = vshrl.u32 %v4245, 7
    %v4247 = vsub.s32 1, %v4246
    %v4248 = vrot.slane %v4235, %v4247
    %v4249 = vlaneseq
    %v4250 = vshrl.u32 %v4249, 7
    %v4251 = vsub.s32 2, %v4250
    %v4252 = vrot.slane %v4235, %v4251
    %v4256 = vmul.f32 %v4238, %v4244
    %v4257 = vmul.f32 %v4238, %v4248
    %v4258 = vmul.f32 %v4238, %v4252
    %4262 = vrot.lane.b32.xlu0 %v4256, 126
    %v4263 = vpop.permute.xlu0 %4262
    %4264 = vrot.lane.b32.xlu0 %v4257, 126
    %v4265 = vpop.permute.xlu0 %4264
    %4266 = vrot.lane.b32.xlu0 %v4258, 126
    %v4267 = vpop.permute.xlu0 %4266
    %v4268 = vsel %vm343, %v4263, %v4265
    %v4269 = vsel %vm343, %v4265, %v4267
    %v4273 = vadd.f32 %v4232, %v4268
    %v4274 = vadd.f32 %v4233, %v4269
    %v4275 = vadd.f32 %v4234, %v4267
    %v4276 = vmul.f32 %v3761, %v679
    %4277 = vset.pattern.permute.xlu0 21
    %4278 = vperm.xlu0 %4277, %v3640
    %v4279 = vpop.permute.xlu0 %4278
    %v4282 = vlaneseq
    %v4283 = vshrl.u32 %v4282, 7
    %v4284 = vsub.s32 0, %v4283
    %v4285 = vrot.slane %v4276, %v4284
    %v4286 = vlaneseq
    %v4287 = vshrl.u32 %v4286, 7
    %v4288 = vsub.s32 1, %v4287
    %v4289 = vrot.slane %v4276, %v4288
    %v4290 = vlaneseq
    %v4291 = vshrl.u32 %v4290, 7
    %v4292 = vsub.s32 2, %v4291
    %v4293 = vrot.slane %v4276, %v4292
    %v4297 = vmul.f32 %v4279, %v4285
    %v4298 = vmul.f32 %v4279, %v4289
    %v4299 = vmul.f32 %v4279, %v4293
    %4303 = vrot.lane.b32.xlu0 %v4297, 126
    %v4304 = vpop.permute.xlu0 %4303
    %4305 = vrot.lane.b32.xlu0 %v4298, 126
    %v4306 = vpop.permute.xlu0 %4305
    %4307 = vrot.lane.b32.xlu0 %v4299, 126
    %v4308 = vpop.permute.xlu0 %4307
    %v4309 = vsel %vm343, %v4304, %v4306
    %v4310 = vsel %vm343, %v4306, %v4308
    %v4314 = vadd.f32 %v4273, %v4309
    %v4315 = vadd.f32 %v4274, %v4310
    %v4316 = vadd.f32 %v4275, %v4308
    %v4317 = vmul.f32 %v3800, %v679
    %4318 = vset.pattern.permute.xlu0 22
    %4319 = vperm.xlu0 %4318, %v3640
    %v4320 = vpop.permute.xlu0 %4319
    %v4323 = vlaneseq
    %v4324 = vshrl.u32 %v4323, 7
    %v4325 = vsub.s32 0, %v4324
    %v4326 = vrot.slane %v4317, %v4325
    %v4327 = vlaneseq
    %v4328 = vshrl.u32 %v4327, 7
    %v4329 = vsub.s32 1, %v4328
    %v4330 = vrot.slane %v4317, %v4329
    %v4331 = vlaneseq
    %v4332 = vshrl.u32 %v4331, 7
    %v4333 = vsub.s32 2, %v4332
    %v4334 = vrot.slane %v4317, %v4333
    %v4338 = vmul.f32 %v4320, %v4326
    %v4339 = vmul.f32 %v4320, %v4330
    %v4340 = vmul.f32 %v4320, %v4334
    %4344 = vrot.lane.b32.xlu0 %v4338, 126
    %v4345 = vpop.permute.xlu0 %4344
    %4346 = vrot.lane.b32.xlu0 %v4339, 126
    %v4347 = vpop.permute.xlu0 %4346
    %4348 = vrot.lane.b32.xlu0 %v4340, 126
    %v4349 = vpop.permute.xlu0 %4348
    %v4350 = vsel %vm343, %v4345, %v4347
    %v4351 = vsel %vm343, %v4347, %v4349
    %v4355 = vadd.f32 %v4314, %v4350
    %v4356 = vadd.f32 %v4315, %v4351
    %v4357 = vadd.f32 %v4316, %v4349
    %v4358 = vmul.f32 %v3839, %v679
    %4359 = vset.pattern.permute.xlu0 23
    %4360 = vperm.xlu0 %4359, %v3640
    %v4361 = vpop.permute.xlu0 %4360
    %v4364 = vlaneseq
    %v4365 = vshrl.u32 %v4364, 7
    %v4366 = vsub.s32 0, %v4365
    %v4367 = vrot.slane %v4358, %v4366
    %v4368 = vlaneseq
    %v4369 = vshrl.u32 %v4368, 7
    %v4370 = vsub.s32 1, %v4369
    %v4371 = vrot.slane %v4358, %v4370
    %v4372 = vlaneseq
    %v4373 = vshrl.u32 %v4372, 7
    %v4374 = vsub.s32 2, %v4373
    %v4375 = vrot.slane %v4358, %v4374
    %v4379 = vmul.f32 %v4361, %v4367
    %v4380 = vmul.f32 %v4361, %v4371
    %v4381 = vmul.f32 %v4361, %v4375
    %4385 = vrot.lane.b32.xlu0 %v4379, 126
    %v4386 = vpop.permute.xlu0 %4385
    %4387 = vrot.lane.b32.xlu0 %v4380, 126
    %v4388 = vpop.permute.xlu0 %4387
    %4389 = vrot.lane.b32.xlu0 %v4381, 126
    %v4390 = vpop.permute.xlu0 %4389
    %v4391 = vsel %vm343, %v4386, %v4388
    %v4392 = vsel %vm343, %v4388, %v4390
    %v4396 = vadd.f32 %v4355, %v4391
    %v4397 = vadd.f32 %v4356, %v4392
    %v4398 = vadd.f32 %v4357, %v4390
    %v4399 = vmul.f32 %v3722, %v849
    %4400 = vset.pattern.permute.xlu0 24
    %4401 = vperm.xlu0 %4400, %v3640
    %v4402 = vpop.permute.xlu0 %4401
    %v4405 = vlaneseq
    %v4406 = vshrl.u32 %v4405, 7
    %v4407 = vsub.s32 0, %v4406
    %v4408 = vrot.slane %v4399, %v4407
    %v4409 = vlaneseq
    %v4410 = vshrl.u32 %v4409, 7
    %v4411 = vsub.s32 1, %v4410
    %v4412 = vrot.slane %v4399, %v4411
    %v4413 = vlaneseq
    %v4414 = vshrl.u32 %v4413, 7
    %v4415 = vsub.s32 2, %v4414
    %v4416 = vrot.slane %v4399, %v4415
    %v4420 = vmul.f32 %v4402, %v4408
    %v4421 = vmul.f32 %v4402, %v4412
    %v4422 = vmul.f32 %v4402, %v4416
    %v4423 = vmul.f32 %v3761, %v849
    %4424 = vset.pattern.permute.xlu0 25
    %4425 = vperm.xlu0 %4424, %v3640
    %v4426 = vpop.permute.xlu0 %4425
    %v4429 = vlaneseq
    %v4430 = vshrl.u32 %v4429, 7
    %v4431 = vsub.s32 0, %v4430
    %v4432 = vrot.slane %v4423, %v4431
    %v4433 = vlaneseq
    %v4434 = vshrl.u32 %v4433, 7
    %v4435 = vsub.s32 1, %v4434
    %v4436 = vrot.slane %v4423, %v4435
    %v4437 = vlaneseq
    %v4438 = vshrl.u32 %v4437, 7
    %v4439 = vsub.s32 2, %v4438
    %v4440 = vrot.slane %v4423, %v4439
    %v4444 = vmul.f32 %v4426, %v4432
    %v4445 = vmul.f32 %v4426, %v4436
    %v4446 = vmul.f32 %v4426, %v4440
    %v4447 = vadd.f32 %v4420, %v4444
    %v4448 = vadd.f32 %v4421, %v4445
    %v4449 = vadd.f32 %v4422, %v4446
    %v4450 = vmul.f32 %v3800, %v849
    %4451 = vset.pattern.permute.xlu0 26
    %4452 = vperm.xlu0 %4451, %v3640
    %v4453 = vpop.permute.xlu0 %4452
    %v4456 = vlaneseq
    %v4457 = vshrl.u32 %v4456, 7
    %v4458 = vsub.s32 0, %v4457
    %v4459 = vrot.slane %v4450, %v4458
    %v4460 = vlaneseq
    %v4461 = vshrl.u32 %v4460, 7
    %v4462 = vsub.s32 1, %v4461
    %v4463 = vrot.slane %v4450, %v4462
    %v4464 = vlaneseq
    %v4465 = vshrl.u32 %v4464, 7
    %v4466 = vsub.s32 2, %v4465
    %v4467 = vrot.slane %v4450, %v4466
    %v4471 = vmul.f32 %v4453, %v4459
    %v4472 = vmul.f32 %v4453, %v4463
    %v4473 = vmul.f32 %v4453, %v4467
    %v4474 = vadd.f32 %v4447, %v4471
    %v4475 = vadd.f32 %v4448, %v4472
    %v4476 = vadd.f32 %v4449, %v4473
    %v4477 = vmul.f32 %v3839, %v849
    %4478 = vset.pattern.permute.xlu0 27
    %4479 = vperm.xlu0 %4478, %v3640
    %v4480 = vpop.permute.xlu0 %4479
    %v4483 = vlaneseq
    %v4484 = vshrl.u32 %v4483, 7
    %v4485 = vsub.s32 0, %v4484
    %v4486 = vrot.slane %v4477, %v4485
    %v4487 = vlaneseq
    %v4488 = vshrl.u32 %v4487, 7
    %v4489 = vsub.s32 1, %v4488
    %v4490 = vrot.slane %v4477, %v4489
    %v4491 = vlaneseq
    %v4492 = vshrl.u32 %v4491, 7
    %v4493 = vsub.s32 2, %v4492
    %v4494 = vrot.slane %v4477, %v4493
    %v4498 = vmul.f32 %v4480, %v4486
    %v4499 = vmul.f32 %v4480, %v4490
    %v4500 = vmul.f32 %v4480, %v4494
    %v4501 = vadd.f32 %v4474, %v4498
    %v4502 = vadd.f32 %v4475, %v4499
    %v4503 = vadd.f32 %v4476, %v4500
    %4504 = vset.pattern.permute.xlu0 28
    %4505 = vperm.xlu0 %4504, %v3640
    %v4506 = vpop.permute.xlu0 %4505
    %v4508 = vmul.f32 %v4506, %v3731
    %v4509 = vmul.f32 %v4506, %v3735
    %v4510 = vmul.f32 %v4506, %v3739
    %4514 = vrot.lane.b32.xlu0 %v4508, 127
    %v4515 = vpop.permute.xlu0 %4514
    %4516 = vrot.lane.b32.xlu0 %v4509, 127
    %v4517 = vpop.permute.xlu0 %4516
    %4518 = vrot.lane.b32.xlu0 %v4510, 127
    %v4519 = vpop.permute.xlu0 %4518
    %v4520 = vsel %vm179, %v4515, %v4517
    %v4521 = vsel %vm179, %v4517, %v4519
    %v4525 = vadd.f32 %v4501, %v4520
    %v4526 = vadd.f32 %v4502, %v4521
    %v4527 = vadd.f32 %v4503, %v4519
    %4528 = vset.pattern.permute.xlu0 29
    %4529 = vperm.xlu0 %4528, %v3640
    %v4530 = vpop.permute.xlu0 %4529
    %v4532 = vmul.f32 %v4530, %v3770
    %v4533 = vmul.f32 %v4530, %v3774
    %v4534 = vmul.f32 %v4530, %v3778
    %4538 = vrot.lane.b32.xlu0 %v4532, 127
    %v4539 = vpop.permute.xlu0 %4538
    %4540 = vrot.lane.b32.xlu0 %v4533, 127
    %v4541 = vpop.permute.xlu0 %4540
    %4542 = vrot.lane.b32.xlu0 %v4534, 127
    %v4543 = vpop.permute.xlu0 %4542
    %v4544 = vsel %vm179, %v4539, %v4541
    %v4545 = vsel %vm179, %v4541, %v4543
    %v4549 = vadd.f32 %v4525, %v4544
    %v4550 = vadd.f32 %v4526, %v4545
    %v4551 = vadd.f32 %v4527, %v4543
    %4552 = vset.pattern.permute.xlu0 30
    %4553 = vperm.xlu0 %4552, %v3640
    %v4554 = vpop.permute.xlu0 %4553
    %v4556 = vmul.f32 %v4554, %v3809
    %v4557 = vmul.f32 %v4554, %v3813
    %v4558 = vmul.f32 %v4554, %v3817
    %4562 = vrot.lane.b32.xlu0 %v4556, 127
    %v4563 = vpop.permute.xlu0 %4562
    %4564 = vrot.lane.b32.xlu0 %v4557, 127
    %v4565 = vpop.permute.xlu0 %4564
    %4566 = vrot.lane.b32.xlu0 %v4558, 127
    %v4567 = vpop.permute.xlu0 %4566
    %v4568 = vsel %vm179, %v4563, %v4565
    %v4569 = vsel %vm179, %v4565, %v4567
    %v4573 = vadd.f32 %v4549, %v4568
    %v4574 = vadd.f32 %v4550, %v4569
    %v4575 = vadd.f32 %v4551, %v4567
    %4576 = vset.pattern.permute.xlu0 31
    %4577 = vperm.xlu0 %4576, %v3640
    %v4578 = vpop.permute.xlu0 %4577
    %v4580 = vmul.f32 %v4578, %v3848
    %v4581 = vmul.f32 %v4578, %v3852
    %v4582 = vmul.f32 %v4578, %v3856
    %4586 = vrot.lane.b32.xlu0 %v4580, 127
    %v4587 = vpop.permute.xlu0 %4586
    %4588 = vrot.lane.b32.xlu0 %v4581, 127
    %v4589 = vpop.permute.xlu0 %4588
    %4590 = vrot.lane.b32.xlu0 %v4582, 127
    %v4591 = vpop.permute.xlu0 %4590
    %v4592 = vsel %vm179, %v4587, %v4589
    %v4593 = vsel %vm179, %v4589, %v4591
    %v4597 = vadd.f32 %v4573, %v4592
    %v4598 = vadd.f32 %v4574, %v4593
    %v4599 = vadd.f32 %v4575, %v4591
    %v4600 = vmul.f32 %v3722, %v1056
    %4601 = vset.pattern.permute.xlu0 32
    %4602 = vperm.xlu0 %4601, %v3640
    %v4603 = vpop.permute.xlu0 %4602
    %v4606 = vlaneseq
    %v4607 = vshrl.u32 %v4606, 7
    %v4608 = vsub.s32 0, %v4607
    %v4609 = vrot.slane %v4600, %v4608
    %v4610 = vlaneseq
    %v4611 = vshrl.u32 %v4610, 7
    %v4612 = vsub.s32 1, %v4611
    %v4613 = vrot.slane %v4600, %v4612
    %v4614 = vlaneseq
    %v4615 = vshrl.u32 %v4614, 7
    %v4616 = vsub.s32 2, %v4615
    %v4617 = vrot.slane %v4600, %v4616
    %v4621 = vmul.f32 %v4603, %v4609
    %v4622 = vmul.f32 %v4603, %v4613
    %v4623 = vmul.f32 %v4603, %v4617
    %4627 = vrot.lane.b32.xlu0 %v4621, 126
    %v4628 = vpop.permute.xlu0 %4627
    %4629 = vrot.lane.b32.xlu0 %v4622, 126
    %v4630 = vpop.permute.xlu0 %4629
    %4631 = vrot.lane.b32.xlu0 %v4623, 126
    %v4632 = vpop.permute.xlu0 %4631
    %v4633 = vsel %vm343, %v4628, %v4630
    %v4634 = vsel %vm343, %v4630, %v4632
    %v4638 = vadd.f32 %v4597, %v4633
    %v4639 = vadd.f32 %v4598, %v4634
    %v4640 = vadd.f32 %v4599, %v4632
    %v4641 = vmul.f32 %v3761, %v1056
    %4642 = vset.pattern.permute.xlu0 33
    %4643 = vperm.xlu0 %4642, %v3640
    %v4644 = vpop.permute.xlu0 %4643
    %v4647 = vlaneseq
    %v4648 = vshrl.u32 %v4647, 7
    %v4649 = vsub.s32 0, %v4648
    %v4650 = vrot.slane %v4641, %v4649
    %v4651 = vlaneseq
    %v4652 = vshrl.u32 %v4651, 7
    %v4653 = vsub.s32 1, %v4652
    %v4654 = vrot.slane %v4641, %v4653
    %v4655 = vlaneseq
    %v4656 = vshrl.u32 %v4655, 7
    %v4657 = vsub.s32 2, %v4656
    %v4658 = vrot.slane %v4641, %v4657
    %v4662 = vmul.f32 %v4644, %v4650
    %v4663 = vmul.f32 %v4644, %v4654
    %v4664 = vmul.f32 %v4644, %v4658
    %4668 = vrot.lane.b32.xlu0 %v4662, 126
    %v4669 = vpop.permute.xlu0 %4668
    %4670 = vrot.lane.b32.xlu0 %v4663, 126
    %v4671 = vpop.permute.xlu0 %4670
    %4672 = vrot.lane.b32.xlu0 %v4664, 126
    %v4673 = vpop.permute.xlu0 %4672
    %v4674 = vsel %vm343, %v4669, %v4671
    %v4675 = vsel %vm343, %v4671, %v4673
    %v4679 = vadd.f32 %v4638, %v4674
    %v4680 = vadd.f32 %v4639, %v4675
    %v4681 = vadd.f32 %v4640, %v4673
    %v4682 = vmul.f32 %v3800, %v1056
    %4683 = vset.pattern.permute.xlu0 34
    %4684 = vperm.xlu0 %4683, %v3640
    %v4685 = vpop.permute.xlu0 %4684
    %v4688 = vlaneseq
    %v4689 = vshrl.u32 %v4688, 7
    %v4690 = vsub.s32 0, %v4689
    %v4691 = vrot.slane %v4682, %v4690
    %v4692 = vlaneseq
    %v4693 = vshrl.u32 %v4692, 7
    %v4694 = vsub.s32 1, %v4693
    %v4695 = vrot.slane %v4682, %v4694
    %v4696 = vlaneseq
    %v4697 = vshrl.u32 %v4696, 7
    %v4698 = vsub.s32 2, %v4697
    %v4699 = vrot.slane %v4682, %v4698
    %v4703 = vmul.f32 %v4685, %v4691
    %v4704 = vmul.f32 %v4685, %v4695
    %v4705 = vmul.f32 %v4685, %v4699
    %4709 = vrot.lane.b32.xlu0 %v4703, 126
    %v4710 = vpop.permute.xlu0 %4709
    %4711 = vrot.lane.b32.xlu0 %v4704, 126
    %v4712 = vpop.permute.xlu0 %4711
    %4713 = vrot.lane.b32.xlu0 %v4705, 126
    %v4714 = vpop.permute.xlu0 %4713
    %v4715 = vsel %vm343, %v4710, %v4712
    %v4716 = vsel %vm343, %v4712, %v4714
    %v4720 = vadd.f32 %v4679, %v4715
    %v4721 = vadd.f32 %v4680, %v4716
    %v4722 = vadd.f32 %v4681, %v4714
    %v4723 = vmul.f32 %v3839, %v1056
    %4724 = vset.pattern.permute.xlu0 35
    %4725 = vperm.xlu0 %4724, %v3640
    %v4726 = vpop.permute.xlu0 %4725
    %v4729 = vlaneseq
    %v4730 = vshrl.u32 %v4729, 7
    %v4731 = vsub.s32 0, %v4730
    %v4732 = vrot.slane %v4723, %v4731
    %v4733 = vlaneseq
    %v4734 = vshrl.u32 %v4733, 7
    %v4735 = vsub.s32 1, %v4734
    %v4736 = vrot.slane %v4723, %v4735
    %v4737 = vlaneseq
    %v4738 = vshrl.u32 %v4737, 7
    %v4739 = vsub.s32 2, %v4738
    %v4740 = vrot.slane %v4723, %v4739
    %v4744 = vmul.f32 %v4726, %v4732
    %v4745 = vmul.f32 %v4726, %v4736
    %v4746 = vmul.f32 %v4726, %v4740
    %4750 = vrot.lane.b32.xlu0 %v4744, 126
    %v4751 = vpop.permute.xlu0 %4750
    %4752 = vrot.lane.b32.xlu0 %v4745, 126
    %v4753 = vpop.permute.xlu0 %4752
    %4754 = vrot.lane.b32.xlu0 %v4746, 126
    %v4755 = vpop.permute.xlu0 %4754
    %v4756 = vsel %vm343, %v4751, %v4753
    %v4757 = vsel %vm343, %v4753, %v4755
    %v4761 = vadd.f32 %v4720, %v4756
    %v4762 = vadd.f32 %v4721, %v4757
    %v4763 = vadd.f32 %v4722, %v4755
    %4767 = vrot.lane.b32.xlu0 %v4396, 112
    %v4768 = vpop.permute.xlu0 %4767
    %4769 = vrot.lane.b32.xlu0 %v4397, 112
    %v4770 = vpop.permute.xlu0 %4769
    %4771 = vrot.lane.b32.xlu0 %v4398, 112
    %v4772 = vpop.permute.xlu0 %4771
    %v4773 = vsel %vm1231, %v4768, %v4770
    %v4774 = vsel %vm1231, %v4770, %v4772
    %v4777 = vadd.f32 %v4032, %v4773
    %v4778 = vadd.f32 %v4033, %v4774
    %4782 = vrot.lane.b32.xlu0 %v4761, 96
    %v4783 = vpop.permute.xlu0 %4782
    %4784 = vrot.lane.b32.xlu0 %v4762, 96
    %v4785 = vpop.permute.xlu0 %4784
    %4786 = vrot.lane.b32.xlu0 %v4763, 96
    %v4787 = vpop.permute.xlu0 %4786
    %v4788 = vsel %vm1247, %v4783, %v4785
    %v4789 = vsel %vm1247, %v4785, %v4787
    %v4792 = vadd.f32 %v4777, %v4788
    %v4793 = vadd.f32 %v4778, %v4789
    %v4794 = vld [vmem:[%s4] sm:$0xf]
    %4796 = vset.pattern.permute.xlu0 0
    %4797 = vperm.xlu0 %4796, %v4794
    %v4798 = vpop.permute.xlu0 %4797
    %v4800 = vadd.f32 %v4792, %v4798
    %v4801 = vadd.f32 %v4793, %v4798
    %v4802 = vld [vmem:[#allocation3] sm:$0xf0]
    %v4803 = vld [vmem:[#allocation3 + $0x8] sm:$0xf0]
    %v4806 = vrot.slane %v4802, 4
    %v4807 = vrot.slane %v4803, 4
    %v4810 = vadd.f32 %v4800, %v4806
    %v4811 = vadd.f32 %v4801, %v4807
    %v4812 = vmax.f32 %v4810, 0.0
    %v4813 = vmax.f32 %v4811, 0.0
    %v4816 = vrot.slane %v4812, 4
    %v4817 = vrot.slane %v4813, 4
    %4820 = vst [vmem:[#allocation6] sm:$0xf0] %v4816
    %4821 = vst [vmem:[#allocation6 + $0x8] sm:$0xf0] %v4817
    // Predicated region
    $region30: #{tpu_custom_call.1} parent=1 // pred_check
      _
    $region31: #{tpu_custom_call.1} parent=1 // pred_check_branch
      %4823 = sbr.rel (0) target = $region33
    $region32: #{tpu_custom_call.1} parent=1 // pred_region
      %s4825 = ssub.s32 256, 256
      %4826 = vsyncadd [#allocation5], %s4825
      %s4828 = sshll.u32 [#allocation6], 4
      %s4829 = int_to_ptr.vmem [resolvable:$true] %s4828
      %4831 = dma.vmem_to_hbm [thread:$0]  %s4829, 256, %s6, [#allocation5]
    $region33: #{tpu_custom_call.1} parent=1 // pred_fallthru
      _
    // Predicated region
    $region34: #{tpu_custom_call.1} parent=1 // pred_check
      _
    $region35: #{tpu_custom_call.1} parent=1 // pred_check_branch
      %4833 = sbr.rel (0) target = $region37
    $region36: #{tpu_custom_call.1} parent=1 // pred_region
      %4834 = dma.done [#allocation5], 256
    $region37: #{tpu_custom_call.1} parent=1 // pred_fallthru
      _
    %4835 = vsyncpa [#allocation4], 1
    %4836 = vsyncpa [#allocation5], 1

</llo_original>
